<compile_context>
chip_gen: v7x
topology: tpu7x:2x2x1
jax: 0.10.0
libtpu: 0.0.40
codegen_flags: <defaults>
</compile_context>

<pallas_src>
import jax
import jax.numpy as jnp
from jax.experimental import pallas as pl
from jax.experimental.pallas import tpu as pltpu


def _bilstm_fc_kernel(gin_ref, lens_ref, wblk_ref, wfc_ref, bfc_ref, out_ref):
    T, BP, _ = gin_ref.shape          # gin: (T, BP, 8H), columns [i_f,i_r,f_f,f_r,o_f,o_r,g_f,g_r]
    H2 = wblk_ref.shape[0]            # 2H  (block-diagonal recurrent weight is (2H, 8H))
    H = H2 // 2
    H6 = 3 * H2                       # 6H: sigmoid region [i | f | o], both directions

    lens = lens_ref[...]                                        # (BP, 1) int32
    # Hoisted constant: lane index over the 2H state columns (forward cols < H, reverse >= H).
    col = jax.lax.broadcasted_iota(jnp.int32, (1, H2), 1)

    h0 = jnp.zeros((BP, H2), jnp.float32)                       # [hf | hr]
    c0 = jnp.zeros((BP, H2), jnp.float32)                       # [cf | cr]

    def body(t, carry):
        h, c = carry
        # One fused MXU pass per step: 256-deep contraction, loop-invariant weights.
        pre = gin_ref[t] + jnp.dot(h, wblk_ref[...],
                                   preferred_element_type=jnp.float32)      # (BP, 8H)

        sg = jax.nn.sigmoid(pre[:, :H6])          # [i_f,i_r, f_f,f_r, o_f,o_r]
        gg = jnp.tanh(pre[:, H6:])                # [g_f, g_r]
        i_cat = sg[:, 0:H2]
        f_cat = sg[:, H2:2 * H2]
        o_cat = sg[:, 2 * H2:3 * H2]

        c_new = f_cat * c + i_cat * gg
        h_new = o_cat * jnp.tanh(c_new)

        # pack_padded_sequence semantics: hold state on padded steps.
        # Forward columns are valid while t < len[b]; reverse columns while (T-1-t) < len[b].
        t_eff = jnp.where(col < H, t, T - 1 - t)  # (1, 2H)
        m = t_eff < lens                          # (BP, 2H) bool
        h = jnp.where(m, h_new, h)
        c = jnp.where(m, c_new, c)
        return h, c

    h, _ = jax.lax.fori_loop(0, T, body, (h0, c0), unroll=True)

    # h == [hf_final | hr_final] == concat(out_forward, out_reverse); FC head, lane-dense store.
    out_ref[...] = (jnp.dot(h, wfc_ref[...], preferred_element_type=jnp.float32)
                    + bfc_ref[...])                               # (BP, 128)


def lstm_classifier_forward(text, text_len, params):
    """Full forward pass; embedding + hoisted input projection in XLA, recurrence+FC in Pallas."""
    H = params["whh_f_t"].shape[0]
    B, T = text.shape
    BP = max(8, ((B + 7) // 8) * 8)                               # pad batch to sublane count

    text_p = jnp.zeros((BP, T), text.dtype).at[:B].set(text)
    len_p = jnp.zeros((BP,), jnp.int32).at[:B].set(text_len.astype(jnp.int32))

    emb = jnp.take(params["embedding"], text_p, axis=0)           # (BP, T, E)
    E = emb.shape[-1]

    def reorder(w):  # gate columns [i,f,g,o] -> [i,f,o,g]
        return jnp.concatenate([w[..., :2 * H], w[..., 3 * H:4 * H], w[..., 2 * H:3 * H]],
                               axis=-1)

    wih_f, wih_r = reorder(params["wih_f_t"]), reorder(params["wih_r_t"])
    whh_f, whh_r = reorder(params["whh_f_t"]), reorder(params["whh_r_t"])
    b_f, b_r = reorder(params["b_f"]), reorder(params["b_r"])

    # Hoisted input projection for both directions: one (BP*T, E) x (E, 8H) matmul.
    wih_both = jnp.concatenate([wih_f, wih_r], axis=1)            # (E, 8H)
    b_both = jnp.concatenate([b_f, b_r], axis=1)                  # (1, 8H)
    gin = (jnp.dot(emb.reshape(BP * T, E).astype(jnp.float32), wih_both,
                   preferred_element_type=jnp.float32) + b_both)  # (BP*T, 8H)
    gin = gin.reshape(BP, T, 2, 4, H)                             # [dir, gate(i,f,o,g), H]
    gin_fwd = gin[:, :, 0]                                        # (BP, T, 4, H)
    gin_rev = jnp.flip(gin[:, :, 1], axis=1)                      # reverse walks ascending t
    # Interleave per gate -> columns [i_f,i_r, f_f,f_r, o_f,o_r, g_f,g_r]
    gin_comb = jnp.stack([gin_fwd, gin_rev], axis=3)              # (BP, T, 4, 2, H)
    gin_comb = gin_comb.transpose(1, 0, 2, 3, 4).reshape(T, BP, 8 * H)   # (T, BP, 8H)

    # Block-diagonal recurrent weight: concat([hf, hr]) @ W_blk gives both directions at once.
    Zh = jnp.zeros((H, H), jnp.float32)
    top = jnp.concatenate([whh_f[:, 0:H], Zh, whh_f[:, H:2 * H], Zh,
                           whh_f[:, 2 * H:3 * H], Zh, whh_f[:, 3 * H:], Zh], axis=1)
    bot = jnp.concatenate([Zh, whh_r[:, 0:H], Zh, whh_r[:, H:2 * H],
                           Zh, whh_r[:, 2 * H:3 * H], Zh, whh_r[:, 3 * H:]], axis=1)
    w_blk = jnp.concatenate([top, bot], axis=0)                   # (2H, 8H)

    lens_v = len_p.reshape(BP, 1)                                 # tiny (BP, 1) int32 in VMEM

    # Lane-dense FC head: pad the 5 output classes up to 128 lanes (wrapper slices back).
    NPAD = 128
    wfc_p = jnp.zeros((2 * H, NPAD), jnp.float32).at[:, :5].set(params["wfc_t"])
    bfc_p = jnp.zeros((1, NPAD), jnp.float32).at[:, :5].set(params["bfc"])

    vmem = pl.BlockSpec(memory_space=pltpu.MemorySpace.VMEM)
    inputs = (gin_comb, lens_v, w_blk, wfc_p, bfc_p)

    # VMEM budget from actual buffer sizes, capped v7x-safe (<= 56 MiB of 64 MiB physical).
    nbytes = sum(int(a.size) * a.dtype.itemsize for a in inputs) + BP * NPAD * 4
    vmem_limit = int(min(56 * 2**20, max(32 * 2**20, 2 * nbytes + (4 << 20))))

    out = pl.pallas_call(
        _bilstm_fc_kernel,
        out_shape=jax.ShapeDtypeStruct((BP, NPAD), jnp.float32),
        in_specs=[vmem] * len(inputs),
        out_specs=vmem,
        compiler_params=pltpu.CompilerParams(vmem_limit_bytes=vmem_limit),
    )(*inputs)
    return out[:B, :5]


def _reference_forward(text, text_len, params):
    """Pure-JAX reference with identical semantics (sanity check)."""
    emb = jnp.take(params["embedding"], text, axis=0)
    B, T, E = emb.shape
    H = params["whh_f_t"].shape[0]
    mask = (jnp.arange(T)[:, None] < text_len[None, :]).astype(jnp.float32)  # (T, B)

    def run_dir(wih_t, whh_t, b, reverse):
        h = jnp.zeros((B, H), jnp.float32)
        c = jnp.zeros((B, H), jnp.float32)
        order = range(T - 1, -1, -1) if reverse else range(T)
        for t in order:
            x_t = emb[:, t, :]
            m = mask[t][:, None]
            g = x_t @ wih_t + h @ whh_t + b
            i_g = jax.nn.sigmoid(g[:, 0:H])
            f_g = jax.nn.sigmoid(g[:, H:2 * H])
            g_g = jnp.tanh(g[:, 2 * H:3 * H])
            o_g = jax.nn.sigmoid(g[:, 3 * H:4 * H])
            c_new = f_g * c + i_g * g_g
            h_new = o_g * jnp.tanh(c_new)
            h = m * h_new + (1.0 - m) * h
            c = m * c_new + (1.0 - m) * c
        return h

    h_fwd = run_dir(params["wih_f_t"], params["whh_f_t"], params["b_f"], reverse=False)
    h_rev = run_dir(params["wih_r_t"], params["whh_r_t"], params["b_r"], reverse=True)
    feat = jnp.concatenate([h_fwd, h_rev], axis=1)
    return feat @ params["wfc_t"] + params["bfc"]


def make_params(key, vocab=50, emb_dim=320, hidden=128):
    ks = jax.random.split(key, 11)
    s = 0.05
    H4 = 4 * hidden
    return {
        "embedding": s * jax.random.normal(ks[0], (vocab, emb_dim), jnp.float32),
        # weights stored pre-transposed: W_ih^T (E, 4H), W_hh^T (H, 4H)
        "wih_f_t": s * jax.random.normal(ks[1], (emb_dim, H4), jnp.float32),
        "whh_f_t": s * jax.random.normal(ks[2], (hidden, H4), jnp.float32),
        "b_f": (s * jax.random.normal(ks[3], (H4,), jnp.float32)
                + s * jax.random.normal(ks[4], (H4,), jnp.float32)).reshape(1, H4),
        "wih_r_t": s * jax.random.normal(ks[5], (emb_dim, H4), jnp.float32),
        "whh_r_t": s * jax.random.normal(ks[6], (hidden, H4), jnp.float32),
        "b_r": (s * jax.random.normal(ks[7], (H4,), jnp.float32)
                + s * jax.random.normal(ks[8], (H4,), jnp.float32)).reshape(1, H4),
        # fc: PyTorch weight (5, 2H) -> transposed (2H, 5)
        "wfc_t": s * jax.random.normal(ks[9], (2 * hidden, 5), jnp.float32),
        "bfc": s * jax.random.normal(ks[10], (5,), jnp.float32).reshape(1, 5),
    }


if __name__ == "__main__":
    key = jax.random.PRNGKey(0)
    k_param, k_text = jax.random.split(key)

    B, T = 2, 8
    vocab, emb_dim, hidden = 50, 320, 128

    params = make_params(k_param, vocab=vocab, emb_dim=emb_dim, hidden=hidden)
    text = jax.random.randint(k_text, (B, T), 0, vocab, dtype=jnp.int32)
    text_len = jnp.array([8, 5], dtype=jnp.int32)

    fwd = jax.jit(lstm_classifier_forward)
    logits = jax.block_until_ready(fwd(text, text_len, params))

    ref = _reference_forward(text, text_len, params)
    assert logits.shape == (B, 5)
    assert jnp.allclose(logits, ref, atol=1e-4, rtol=1e-4), "mismatch vs reference"

    print("KERNEL_OK")
</pallas_src>

<mosaic_0001>
module attributes {stable_mosaic.version = 11 : i64} {
  func.func @_bilstm_fc_kernel(%arg0: memref<8x8x1024xf32, #tpu.memory_space<vmem>>, %arg1: memref<8x1xi32, #tpu.memory_space<vmem>>, %arg2: memref<256x1024xf32, #tpu.memory_space<vmem>>, %arg3: memref<256x128xf32, #tpu.memory_space<vmem>>, %arg4: memref<1x128xf32, #tpu.memory_space<vmem>>, %arg5: memref<8x128xf32, #tpu.memory_space<vmem>>) attributes {dimension_semantics = [], scalar_prefetch = 0 : i64, scratch_operands = 0 : i64, tpu.core_type = #tpu.core_type<tc>} {
    %c0 = arith.constant 0 : index
    %c0_0 = arith.constant 0 : index
    %0 = vector.load %arg1[%c0, %c0_0] : memref<8x1xi32, #tpu.memory_space<vmem>>, vector<8x1xi32>
    %1 = tpu.iota {dimensions = array<i32: 1>} : vector<1x256xi32>
    %cst = arith.constant 0.000000e+00 : f32
    %2 = vector.broadcast %cst : f32 to vector<8x256xf32>
    %cst_1 = arith.constant 0.000000e+00 : f32
    %3 = vector.broadcast %cst_1 : f32 to vector<8x256xf32>
    %c0_i32 = arith.constant 0 : i32
    %4 = arith.index_cast %c0_i32 : i32 to index
    %c0_2 = arith.constant 0 : index
    %c0_3 = arith.constant 0 : index
    %5 = vector.load %arg0[%4, %c0_2, %c0_3] : memref<8x8x1024xf32, #tpu.memory_space<vmem>>, vector<1x8x1024xf32>
    %6 = vector.shape_cast %5 : vector<1x8x1024xf32> to vector<8x1024xf32>
    %c0_4 = arith.constant 0 : index
    %c0_5 = arith.constant 0 : index
    %7 = vector.load %arg2[%c0_4, %c0_5] : memref<256x1024xf32, #tpu.memory_space<vmem>>, vector<256x1024xf32>
    %cst_6 = arith.constant dense<0.000000e+00> : vector<8x1024xf32>
    %8 = tpu.matmul %2, %7, %cst_6 {dimension_numbers = #tpu.dot_dimension_numbers<[1], [0], [0], [1], [0, 0, 1, 1], [], []>} : vector<8x256xf32>, vector<256x1024xf32>, vector<8x1024xf32> -> vector<8x1024xf32>
    %9 = arith.addf %6, %8 : vector<8x1024xf32>
    %10 = vector.extract_strided_slice %9 {offsets = [0, 0], sizes = [8, 768], strides = [1, 1]} : vector<8x1024xf32> to vector<8x768xf32>
    %11 = arith.negf %10 : vector<8x768xf32>
    %12 = math.exp %11 : vector<8x768xf32>
    %cst_7 = arith.constant 1.000000e+00 : f32
    %13 = vector.broadcast %cst_7 : f32 to vector<8x768xf32>
    %14 = arith.addf %13, %12 : vector<8x768xf32>
    %15 = arith.divf %13, %14 : vector<8x768xf32>
    %16 = vector.extract_strided_slice %9 {offsets = [0, 768], sizes = [8, 256], strides = [1, 1]} : vector<8x1024xf32> to vector<8x256xf32>
    %17 = math.tanh %16 : vector<8x256xf32>
    %18 = vector.extract_strided_slice %15 {offsets = [0, 0], sizes = [8, 256], strides = [1, 1]} : vector<8x768xf32> to vector<8x256xf32>
    %19 = vector.extract_strided_slice %15 {offsets = [0, 256], sizes = [8, 256], strides = [1, 1]} : vector<8x768xf32> to vector<8x256xf32>
    %20 = vector.extract_strided_slice %15 {offsets = [0, 512], sizes = [8, 256], strides = [1, 1]} : vector<8x768xf32> to vector<8x256xf32>
    %21 = arith.mulf %19, %3 : vector<8x256xf32>
    %22 = arith.mulf %18, %17 : vector<8x256xf32>
    %23 = arith.addf %21, %22 : vector<8x256xf32>
    %24 = math.tanh %23 : vector<8x256xf32>
    %25 = arith.mulf %20, %24 : vector<8x256xf32>
    %c128_i32 = arith.constant 128 : i32
    %26 = vector.broadcast %c128_i32 : i32 to vector<1x256xi32>
    %27 = arith.cmpi slt, %1, %26 : vector<1x256xi32>
    %c7_i32 = arith.constant 7 : i32
    %28 = arith.subi %c7_i32, %c0_i32 : i32
    %29 = vector.broadcast %c0_i32 : i32 to vector<1x256xi32>
    %30 = vector.broadcast %28 : i32 to vector<1x256xi32>
    %31 = arith.select %27, %29, %30 : vector<1x256xi1>, vector<1x256xi32>
    %32 = vector.broadcast %31 : vector<1x256xi32> to vector<8x256xi32>
    %33 = vector.broadcast %0 : vector<8x1xi32> to vector<8x256xi32>
    %34 = arith.cmpi slt, %32, %33 : vector<8x256xi32>
    %35 = arith.select %34, %25, %2 : vector<8x256xi1>, vector<8x256xf32>
    %36 = arith.select %34, %23, %3 : vector<8x256xi1>, vector<8x256xf32>
    %c1_i32 = arith.constant 1 : i32
    %37 = arith.index_cast %c1_i32 : i32 to index
    %c0_8 = arith.constant 0 : index
    %c0_9 = arith.constant 0 : index
    %38 = vector.load %arg0[%37, %c0_8, %c0_9] : memref<8x8x1024xf32, #tpu.memory_space<vmem>>, vector<1x8x1024xf32>
    %39 = vector.shape_cast %38 : vector<1x8x1024xf32> to vector<8x1024xf32>
    %c0_10 = arith.constant 0 : index
    %c0_11 = arith.constant 0 : index
    %40 = vector.load %arg2[%c0_10, %c0_11] : memref<256x1024xf32, #tpu.memory_space<vmem>>, vector<256x1024xf32>
    %cst_12 = arith.constant dense<0.000000e+00> : vector<8x1024xf32>
    %41 = tpu.matmul %35, %40, %cst_12 {dimension_numbers = #tpu.dot_dimension_numbers<[1], [0], [0], [1], [0, 0, 1, 1], [], []>} : vector<8x256xf32>, vector<256x1024xf32>, vector<8x1024xf32> -> vector<8x1024xf32>
    %42 = arith.addf %39, %41 : vector<8x1024xf32>
    %43 = vector.extract_strided_slice %42 {offsets = [0, 0], sizes = [8, 768], strides = [1, 1]} : vector<8x1024xf32> to vector<8x768xf32>
    %44 = arith.negf %43 : vector<8x768xf32>
    %45 = math.exp %44 : vector<8x768xf32>
    %cst_13 = arith.constant 1.000000e+00 : f32
    %46 = vector.broadcast %cst_13 : f32 to vector<8x768xf32>
    %47 = arith.addf %46, %45 : vector<8x768xf32>
    %48 = arith.divf %46, %47 : vector<8x768xf32>
    %49 = vector.extract_strided_slice %42 {offsets = [0, 768], sizes = [8, 256], strides = [1, 1]} : vector<8x1024xf32> to vector<8x256xf32>
    %50 = math.tanh %49 : vector<8x256xf32>
    %51 = vector.extract_strided_slice %48 {offsets = [0, 0], sizes = [8, 256], strides = [1, 1]} : vector<8x768xf32> to vector<8x256xf32>
    %52 = vector.extract_strided_slice %48 {offsets = [0, 256], sizes = [8, 256], strides = [1, 1]} : vector<8x768xf32> to vector<8x256xf32>
    %53 = vector.extract_strided_slice %48 {offsets = [0, 512], sizes = [8, 256], strides = [1, 1]} : vector<8x768xf32> to vector<8x256xf32>
    %54 = arith.mulf %52, %36 : vector<8x256xf32>
    %55 = arith.mulf %51, %50 : vector<8x256xf32>
    %56 = arith.addf %54, %55 : vector<8x256xf32>
    %57 = math.tanh %56 : vector<8x256xf32>
    %58 = arith.mulf %53, %57 : vector<8x256xf32>
    %c128_i32_14 = arith.constant 128 : i32
    %59 = vector.broadcast %c128_i32_14 : i32 to vector<1x256xi32>
    %60 = arith.cmpi slt, %1, %59 : vector<1x256xi32>
    %c7_i32_15 = arith.constant 7 : i32
    %61 = arith.subi %c7_i32_15, %c1_i32 : i32
    %62 = vector.broadcast %c1_i32 : i32 to vector<1x256xi32>
    %63 = vector.broadcast %61 : i32 to vector<1x256xi32>
    %64 = arith.select %60, %62, %63 : vector<1x256xi1>, vector<1x256xi32>
    %65 = vector.broadcast %64 : vector<1x256xi32> to vector<8x256xi32>
    %66 = vector.broadcast %0 : vector<8x1xi32> to vector<8x256xi32>
    %67 = arith.cmpi slt, %65, %66 : vector<8x256xi32>
    %68 = arith.select %67, %58, %35 : vector<8x256xi1>, vector<8x256xf32>
    %69 = arith.select %67, %56, %36 : vector<8x256xi1>, vector<8x256xf32>
    %c2_i32 = arith.constant 2 : i32
    %70 = arith.index_cast %c2_i32 : i32 to index
    %c0_16 = arith.constant 0 : index
    %c0_17 = arith.constant 0 : index
    %71 = vector.load %arg0[%70, %c0_16, %c0_17] : memref<8x8x1024xf32, #tpu.memory_space<vmem>>, vector<1x8x1024xf32>
    %72 = vector.shape_cast %71 : vector<1x8x1024xf32> to vector<8x1024xf32>
    %c0_18 = arith.constant 0 : index
    %c0_19 = arith.constant 0 : index
    %73 = vector.load %arg2[%c0_18, %c0_19] : memref<256x1024xf32, #tpu.memory_space<vmem>>, vector<256x1024xf32>
    %cst_20 = arith.constant dense<0.000000e+00> : vector<8x1024xf32>
    %74 = tpu.matmul %68, %73, %cst_20 {dimension_numbers = #tpu.dot_dimension_numbers<[1], [0], [0], [1], [0, 0, 1, 1], [], []>} : vector<8x256xf32>, vector<256x1024xf32>, vector<8x1024xf32> -> vector<8x1024xf32>
    %75 = arith.addf %72, %74 : vector<8x1024xf32>
    %76 = vector.extract_strided_slice %75 {offsets = [0, 0], sizes = [8, 768], strides = [1, 1]} : vector<8x1024xf32> to vector<8x768xf32>
    %77 = arith.negf %76 : vector<8x768xf32>
    %78 = math.exp %77 : vector<8x768xf32>
    %cst_21 = arith.constant 1.000000e+00 : f32
    %79 = vector.broadcast %cst_21 : f32 to vector<8x768xf32>
    %80 = arith.addf %79, %78 : vector<8x768xf32>
    %81 = arith.divf %79, %80 : vector<8x768xf32>
    %82 = vector.extract_strided_slice %75 {offsets = [0, 768], sizes = [8, 256], strides = [1, 1]} : vector<8x1024xf32> to vector<8x256xf32>
    %83 = math.tanh %82 : vector<8x256xf32>
    %84 = vector.extract_strided_slice %81 {offsets = [0, 0], sizes = [8, 256], strides = [1, 1]} : vector<8x768xf32> to vector<8x256xf32>
    %85 = vector.extract_strided_slice %81 {offsets = [0, 256], sizes = [8, 256], strides = [1, 1]} : vector<8x768xf32> to vector<8x256xf32>
    %86 = vector.extract_strided_slice %81 {offsets = [0, 512], sizes = [8, 256], strides = [1, 1]} : vector<8x768xf32> to vector<8x256xf32>
    %87 = arith.mulf %85, %69 : vector<8x256xf32>
    %88 = arith.mulf %84, %83 : vector<8x256xf32>
    %89 = arith.addf %87, %88 : vector<8x256xf32>
    %90 = math.tanh %89 : vector<8x256xf32>
    %91 = arith.mulf %86, %90 : vector<8x256xf32>
    %c128_i32_22 = arith.constant 128 : i32
    %92 = vector.broadcast %c128_i32_22 : i32 to vector<1x256xi32>
    %93 = arith.cmpi slt, %1, %92 : vector<1x256xi32>
    %c7_i32_23 = arith.constant 7 : i32
    %94 = arith.subi %c7_i32_23, %c2_i32 : i32
    %95 = vector.broadcast %c2_i32 : i32 to vector<1x256xi32>
    %96 = vector.broadcast %94 : i32 to vector<1x256xi32>
    %97 = arith.select %93, %95, %96 : vector<1x256xi1>, vector<1x256xi32>
    %98 = vector.broadcast %97 : vector<1x256xi32> to vector<8x256xi32>
    %99 = vector.broadcast %0 : vector<8x1xi32> to vector<8x256xi32>
    %100 = arith.cmpi slt, %98, %99 : vector<8x256xi32>
    %101 = arith.select %100, %91, %68 : vector<8x256xi1>, vector<8x256xf32>
    %102 = arith.select %100, %89, %69 : vector<8x256xi1>, vector<8x256xf32>
    %c3_i32 = arith.constant 3 : i32
    %103 = arith.index_cast %c3_i32 : i32 to index
    %c0_24 = arith.constant 0 : index
    %c0_25 = arith.constant 0 : index
    %104 = vector.load %arg0[%103, %c0_24, %c0_25] : memref<8x8x1024xf32, #tpu.memory_space<vmem>>, vector<1x8x1024xf32>
    %105 = vector.shape_cast %104 : vector<1x8x1024xf32> to vector<8x1024xf32>
    %c0_26 = arith.constant 0 : index
    %c0_27 = arith.constant 0 : index
    %106 = vector.load %arg2[%c0_26, %c0_27] : memref<256x1024xf32, #tpu.memory_space<vmem>>, vector<256x1024xf32>
    %cst_28 = arith.constant dense<0.000000e+00> : vector<8x1024xf32>
    %107 = tpu.matmul %101, %106, %cst_28 {dimension_numbers = #tpu.dot_dimension_numbers<[1], [0], [0], [1], [0, 0, 1, 1], [], []>} : vector<8x256xf32>, vector<256x1024xf32>, vector<8x1024xf32> -> vector<8x1024xf32>
    %108 = arith.addf %105, %107 : vector<8x1024xf32>
    %109 = vector.extract_strided_slice %108 {offsets = [0, 0], sizes = [8, 768], strides = [1, 1]} : vector<8x1024xf32> to vector<8x768xf32>
    %110 = arith.negf %109 : vector<8x768xf32>
    %111 = math.exp %110 : vector<8x768xf32>
    %cst_29 = arith.constant 1.000000e+00 : f32
    %112 = vector.broadcast %cst_29 : f32 to vector<8x768xf32>
    %113 = arith.addf %112, %111 : vector<8x768xf32>
    %114 = arith.divf %112, %113 : vector<8x768xf32>
    %115 = vector.extract_strided_slice %108 {offsets = [0, 768], sizes = [8, 256], strides = [1, 1]} : vector<8x1024xf32> to vector<8x256xf32>
    %116 = math.tanh %115 : vector<8x256xf32>
    %117 = vector.extract_strided_slice %114 {offsets = [0, 0], sizes = [8, 256], strides = [1, 1]} : vector<8x768xf32> to vector<8x256xf32>
    %118 = vector.extract_strided_slice %114 {offsets = [0, 256], sizes = [8, 256], strides = [1, 1]} : vector<8x768xf32> to vector<8x256xf32>
    %119 = vector.extract_strided_slice %114 {offsets = [0, 512], sizes = [8, 256], strides = [1, 1]} : vector<8x768xf32> to vector<8x256xf32>
    %120 = arith.mulf %118, %102 : vector<8x256xf32>
    %121 = arith.mulf %117, %116 : vector<8x256xf32>
    %122 = arith.addf %120, %121 : vector<8x256xf32>
    %123 = math.tanh %122 : vector<8x256xf32>
    %124 = arith.mulf %119, %123 : vector<8x256xf32>
    %c128_i32_30 = arith.constant 128 : i32
    %125 = vector.broadcast %c128_i32_30 : i32 to vector<1x256xi32>
    %126 = arith.cmpi slt, %1, %125 : vector<1x256xi32>
    %c7_i32_31 = arith.constant 7 : i32
    %127 = arith.subi %c7_i32_31, %c3_i32 : i32
    %128 = vector.broadcast %c3_i32 : i32 to vector<1x256xi32>
    %129 = vector.broadcast %127 : i32 to vector<1x256xi32>
    %130 = arith.select %126, %128, %129 : vector<1x256xi1>, vector<1x256xi32>
    %131 = vector.broadcast %130 : vector<1x256xi32> to vector<8x256xi32>
    %132 = vector.broadcast %0 : vector<8x1xi32> to vector<8x256xi32>
    %133 = arith.cmpi slt, %131, %132 : vector<8x256xi32>
    %134 = arith.select %133, %124, %101 : vector<8x256xi1>, vector<8x256xf32>
    %135 = arith.select %133, %122, %102 : vector<8x256xi1>, vector<8x256xf32>
    %c4_i32 = arith.constant 4 : i32
    %136 = arith.index_cast %c4_i32 : i32 to index
    %c0_32 = arith.constant 0 : index
    %c0_33 = arith.constant 0 : index
    %137 = vector.load %arg0[%136, %c0_32, %c0_33] : memref<8x8x1024xf32, #tpu.memory_space<vmem>>, vector<1x8x1024xf32>
    %138 = vector.shape_cast %137 : vector<1x8x1024xf32> to vector<8x1024xf32>
    %c0_34 = arith.constant 0 : index
    %c0_35 = arith.constant 0 : index
    %139 = vector.load %arg2[%c0_34, %c0_35] : memref<256x1024xf32, #tpu.memory_space<vmem>>, vector<256x1024xf32>
    %cst_36 = arith.constant dense<0.000000e+00> : vector<8x1024xf32>
    %140 = tpu.matmul %134, %139, %cst_36 {dimension_numbers = #tpu.dot_dimension_numbers<[1], [0], [0], [1], [0, 0, 1, 1], [], []>} : vector<8x256xf32>, vector<256x1024xf32>, vector<8x1024xf32> -> vector<8x1024xf32>
    %141 = arith.addf %138, %140 : vector<8x1024xf32>
    %142 = vector.extract_strided_slice %141 {offsets = [0, 0], sizes = [8, 768], strides = [1, 1]} : vector<8x1024xf32> to vector<8x768xf32>
    %143 = arith.negf %142 : vector<8x768xf32>
    %144 = math.exp %143 : vector<8x768xf32>
    %cst_37 = arith.constant 1.000000e+00 : f32
    %145 = vector.broadcast %cst_37 : f32 to vector<8x768xf32>
    %146 = arith.addf %145, %144 : vector<8x768xf32>
    %147 = arith.divf %145, %146 : vector<8x768xf32>
    %148 = vector.extract_strided_slice %141 {offsets = [0, 768], sizes = [8, 256], strides = [1, 1]} : vector<8x1024xf32> to vector<8x256xf32>
    %149 = math.tanh %148 : vector<8x256xf32>
    %150 = vector.extract_strided_slice %147 {offsets = [0, 0], sizes = [8, 256], strides = [1, 1]} : vector<8x768xf32> to vector<8x256xf32>
    %151 = vector.extract_strided_slice %147 {offsets = [0, 256], sizes = [8, 256], strides = [1, 1]} : vector<8x768xf32> to vector<8x256xf32>
    %152 = vector.extract_strided_slice %147 {offsets = [0, 512], sizes = [8, 256], strides = [1, 1]} : vector<8x768xf32> to vector<8x256xf32>
    %153 = arith.mulf %151, %135 : vector<8x256xf32>
    %154 = arith.mulf %150, %149 : vector<8x256xf32>
    %155 = arith.addf %153, %154 : vector<8x256xf32>
    %156 = math.tanh %155 : vector<8x256xf32>
    %157 = arith.mulf %152, %156 : vector<8x256xf32>
    %c128_i32_38 = arith.constant 128 : i32
    %158 = vector.broadcast %c128_i32_38 : i32 to vector<1x256xi32>
    %159 = arith.cmpi slt, %1, %158 : vector<1x256xi32>
    %c7_i32_39 = arith.constant 7 : i32
    %160 = arith.subi %c7_i32_39, %c4_i32 : i32
    %161 = vector.broadcast %c4_i32 : i32 to vector<1x256xi32>
    %162 = vector.broadcast %160 : i32 to vector<1x256xi32>
    %163 = arith.select %159, %161, %162 : vector<1x256xi1>, vector<1x256xi32>
    %164 = vector.broadcast %163 : vector<1x256xi32> to vector<8x256xi32>
    %165 = vector.broadcast %0 : vector<8x1xi32> to vector<8x256xi32>
    %166 = arith.cmpi slt, %164, %165 : vector<8x256xi32>
    %167 = arith.select %166, %157, %134 : vector<8x256xi1>, vector<8x256xf32>
    %168 = arith.select %166, %155, %135 : vector<8x256xi1>, vector<8x256xf32>
    %c5_i32 = arith.constant 5 : i32
    %169 = arith.index_cast %c5_i32 : i32 to index
    %c0_40 = arith.constant 0 : index
    %c0_41 = arith.constant 0 : index
    %170 = vector.load %arg0[%169, %c0_40, %c0_41] : memref<8x8x1024xf32, #tpu.memory_space<vmem>>, vector<1x8x1024xf32>
    %171 = vector.shape_cast %170 : vector<1x8x1024xf32> to vector<8x1024xf32>
    %c0_42 = arith.constant 0 : index
    %c0_43 = arith.constant 0 : index
    %172 = vector.load %arg2[%c0_42, %c0_43] : memref<256x1024xf32, #tpu.memory_space<vmem>>, vector<256x1024xf32>
    %cst_44 = arith.constant dense<0.000000e+00> : vector<8x1024xf32>
    %173 = tpu.matmul %167, %172, %cst_44 {dimension_numbers = #tpu.dot_dimension_numbers<[1], [0], [0], [1], [0, 0, 1, 1], [], []>} : vector<8x256xf32>, vector<256x1024xf32>, vector<8x1024xf32> -> vector<8x1024xf32>
    %174 = arith.addf %171, %173 : vector<8x1024xf32>
    %175 = vector.extract_strided_slice %174 {offsets = [0, 0], sizes = [8, 768], strides = [1, 1]} : vector<8x1024xf32> to vector<8x768xf32>
    %176 = arith.negf %175 : vector<8x768xf32>
    %177 = math.exp %176 : vector<8x768xf32>
    %cst_45 = arith.constant 1.000000e+00 : f32
    %178 = vector.broadcast %cst_45 : f32 to vector<8x768xf32>
    %179 = arith.addf %178, %177 : vector<8x768xf32>
    %180 = arith.divf %178, %179 : vector<8x768xf32>
    %181 = vector.extract_strided_slice %174 {offsets = [0, 768], sizes = [8, 256], strides = [1, 1]} : vector<8x1024xf32> to vector<8x256xf32>
    %182 = math.tanh %181 : vector<8x256xf32>
    %183 = vector.extract_strided_slice %180 {offsets = [0, 0], sizes = [8, 256], strides = [1, 1]} : vector<8x768xf32> to vector<8x256xf32>
    %184 = vector.extract_strided_slice %180 {offsets = [0, 256], sizes = [8, 256], strides = [1, 1]} : vector<8x768xf32> to vector<8x256xf32>
    %185 = vector.extract_strided_slice %180 {offsets = [0, 512], sizes = [8, 256], strides = [1, 1]} : vector<8x768xf32> to vector<8x256xf32>
    %186 = arith.mulf %184, %168 : vector<8x256xf32>
    %187 = arith.mulf %183, %182 : vector<8x256xf32>
    %188 = arith.addf %186, %187 : vector<8x256xf32>
    %189 = math.tanh %188 : vector<8x256xf32>
    %190 = arith.mulf %185, %189 : vector<8x256xf32>
    %c128_i32_46 = arith.constant 128 : i32
    %191 = vector.broadcast %c128_i32_46 : i32 to vector<1x256xi32>
    %192 = arith.cmpi slt, %1, %191 : vector<1x256xi32>
    %c7_i32_47 = arith.constant 7 : i32
    %193 = arith.subi %c7_i32_47, %c5_i32 : i32
    %194 = vector.broadcast %c5_i32 : i32 to vector<1x256xi32>
    %195 = vector.broadcast %193 : i32 to vector<1x256xi32>
    %196 = arith.select %192, %194, %195 : vector<1x256xi1>, vector<1x256xi32>
    %197 = vector.broadcast %196 : vector<1x256xi32> to vector<8x256xi32>
    %198 = vector.broadcast %0 : vector<8x1xi32> to vector<8x256xi32>
    %199 = arith.cmpi slt, %197, %198 : vector<8x256xi32>
    %200 = arith.select %199, %190, %167 : vector<8x256xi1>, vector<8x256xf32>
    %201 = arith.select %199, %188, %168 : vector<8x256xi1>, vector<8x256xf32>
    %c6_i32 = arith.constant 6 : i32
    %202 = arith.index_cast %c6_i32 : i32 to index
    %c0_48 = arith.constant 0 : index
    %c0_49 = arith.constant 0 : index
    %203 = vector.load %arg0[%202, %c0_48, %c0_49] : memref<8x8x1024xf32, #tpu.memory_space<vmem>>, vector<1x8x1024xf32>
    %204 = vector.shape_cast %203 : vector<1x8x1024xf32> to vector<8x1024xf32>
    %c0_50 = arith.constant 0 : index
    %c0_51 = arith.constant 0 : index
    %205 = vector.load %arg2[%c0_50, %c0_51] : memref<256x1024xf32, #tpu.memory_space<vmem>>, vector<256x1024xf32>
    %cst_52 = arith.constant dense<0.000000e+00> : vector<8x1024xf32>
    %206 = tpu.matmul %200, %205, %cst_52 {dimension_numbers = #tpu.dot_dimension_numbers<[1], [0], [0], [1], [0, 0, 1, 1], [], []>} : vector<8x256xf32>, vector<256x1024xf32>, vector<8x1024xf32> -> vector<8x1024xf32>
    %207 = arith.addf %204, %206 : vector<8x1024xf32>
    %208 = vector.extract_strided_slice %207 {offsets = [0, 0], sizes = [8, 768], strides = [1, 1]} : vector<8x1024xf32> to vector<8x768xf32>
    %209 = arith.negf %208 : vector<8x768xf32>
    %210 = math.exp %209 : vector<8x768xf32>
    %cst_53 = arith.constant 1.000000e+00 : f32
    %211 = vector.broadcast %cst_53 : f32 to vector<8x768xf32>
    %212 = arith.addf %211, %210 : vector<8x768xf32>
    %213 = arith.divf %211, %212 : vector<8x768xf32>
    %214 = vector.extract_strided_slice %207 {offsets = [0, 768], sizes = [8, 256], strides = [1, 1]} : vector<8x1024xf32> to vector<8x256xf32>
    %215 = math.tanh %214 : vector<8x256xf32>
    %216 = vector.extract_strided_slice %213 {offsets = [0, 0], sizes = [8, 256], strides = [1, 1]} : vector<8x768xf32> to vector<8x256xf32>
    %217 = vector.extract_strided_slice %213 {offsets = [0, 256], sizes = [8, 256], strides = [1, 1]} : vector<8x768xf32> to vector<8x256xf32>
    %218 = vector.extract_strided_slice %213 {offsets = [0, 512], sizes = [8, 256], strides = [1, 1]} : vector<8x768xf32> to vector<8x256xf32>
    %219 = arith.mulf %217, %201 : vector<8x256xf32>
    %220 = arith.mulf %216, %215 : vector<8x256xf32>
    %221 = arith.addf %219, %220 : vector<8x256xf32>
    %222 = math.tanh %221 : vector<8x256xf32>
    %223 = arith.mulf %218, %222 : vector<8x256xf32>
    %c128_i32_54 = arith.constant 128 : i32
    %224 = vector.broadcast %c128_i32_54 : i32 to vector<1x256xi32>
    %225 = arith.cmpi slt, %1, %224 : vector<1x256xi32>
    %c7_i32_55 = arith.constant 7 : i32
    %226 = arith.subi %c7_i32_55, %c6_i32 : i32
    %227 = vector.broadcast %c6_i32 : i32 to vector<1x256xi32>
    %228 = vector.broadcast %226 : i32 to vector<1x256xi32>
    %229 = arith.select %225, %227, %228 : vector<1x256xi1>, vector<1x256xi32>
    %230 = vector.broadcast %229 : vector<1x256xi32> to vector<8x256xi32>
    %231 = vector.broadcast %0 : vector<8x1xi32> to vector<8x256xi32>
    %232 = arith.cmpi slt, %230, %231 : vector<8x256xi32>
    %233 = arith.select %232, %223, %200 : vector<8x256xi1>, vector<8x256xf32>
    %234 = arith.select %232, %221, %201 : vector<8x256xi1>, vector<8x256xf32>
    %c7_i32_56 = arith.constant 7 : i32
    %235 = arith.index_cast %c7_i32_56 : i32 to index
    %c0_57 = arith.constant 0 : index
    %c0_58 = arith.constant 0 : index
    %236 = vector.load %arg0[%235, %c0_57, %c0_58] : memref<8x8x1024xf32, #tpu.memory_space<vmem>>, vector<1x8x1024xf32>
    %237 = vector.shape_cast %236 : vector<1x8x1024xf32> to vector<8x1024xf32>
    %c0_59 = arith.constant 0 : index
    %c0_60 = arith.constant 0 : index
    %238 = vector.load %arg2[%c0_59, %c0_60] : memref<256x1024xf32, #tpu.memory_space<vmem>>, vector<256x1024xf32>
    %cst_61 = arith.constant dense<0.000000e+00> : vector<8x1024xf32>
    %239 = tpu.matmul %233, %238, %cst_61 {dimension_numbers = #tpu.dot_dimension_numbers<[1], [0], [0], [1], [0, 0, 1, 1], [], []>} : vector<8x256xf32>, vector<256x1024xf32>, vector<8x1024xf32> -> vector<8x1024xf32>
    %240 = arith.addf %237, %239 : vector<8x1024xf32>
    %241 = vector.extract_strided_slice %240 {offsets = [0, 0], sizes = [8, 768], strides = [1, 1]} : vector<8x1024xf32> to vector<8x768xf32>
    %242 = arith.negf %241 : vector<8x768xf32>
    %243 = math.exp %242 : vector<8x768xf32>
    %cst_62 = arith.constant 1.000000e+00 : f32
    %244 = vector.broadcast %cst_62 : f32 to vector<8x768xf32>
    %245 = arith.addf %244, %243 : vector<8x768xf32>
    %246 = arith.divf %244, %245 : vector<8x768xf32>
    %247 = vector.extract_strided_slice %240 {offsets = [0, 768], sizes = [8, 256], strides = [1, 1]} : vector<8x1024xf32> to vector<8x256xf32>
    %248 = math.tanh %247 : vector<8x256xf32>
    %249 = vector.extract_strided_slice %246 {offsets = [0, 0], sizes = [8, 256], strides = [1, 1]} : vector<8x768xf32> to vector<8x256xf32>
    %250 = vector.extract_strided_slice %246 {offsets = [0, 256], sizes = [8, 256], strides = [1, 1]} : vector<8x768xf32> to vector<8x256xf32>
    %251 = vector.extract_strided_slice %246 {offsets = [0, 512], sizes = [8, 256], strides = [1, 1]} : vector<8x768xf32> to vector<8x256xf32>
    %252 = arith.mulf %250, %234 : vector<8x256xf32>
    %253 = arith.mulf %249, %248 : vector<8x256xf32>
    %254 = arith.addf %252, %253 : vector<8x256xf32>
    %255 = math.tanh %254 : vector<8x256xf32>
    %256 = arith.mulf %251, %255 : vector<8x256xf32>
    %c128_i32_63 = arith.constant 128 : i32
    %257 = vector.broadcast %c128_i32_63 : i32 to vector<1x256xi32>
    %258 = arith.cmpi slt, %1, %257 : vector<1x256xi32>
    %c7_i32_64 = arith.constant 7 : i32
    %259 = arith.subi %c7_i32_64, %c7_i32_56 : i32
    %260 = vector.broadcast %c7_i32_56 : i32 to vector<1x256xi32>
    %261 = vector.broadcast %259 : i32 to vector<1x256xi32>
    %262 = arith.select %258, %260, %261 : vector<1x256xi1>, vector<1x256xi32>
    %263 = vector.broadcast %262 : vector<1x256xi32> to vector<8x256xi32>
    %264 = vector.broadcast %0 : vector<8x1xi32> to vector<8x256xi32>
    %265 = arith.cmpi slt, %263, %264 : vector<8x256xi32>
    %266 = arith.select %265, %256, %233 : vector<8x256xi1>, vector<8x256xf32>
    %267 = arith.select %265, %254, %234 : vector<8x256xi1>, vector<8x256xf32>
    %c8_i32 = arith.constant 8 : i32
    %c0_65 = arith.constant 0 : index
    %c0_66 = arith.constant 0 : index
    %268 = vector.load %arg3[%c0_65, %c0_66] : memref<256x128xf32, #tpu.memory_space<vmem>>, vector<256x128xf32>
    %cst_67 = arith.constant dense<0.000000e+00> : vector<8x128xf32>
    %269 = tpu.matmul %266, %268, %cst_67 {dimension_numbers = #tpu.dot_dimension_numbers<[1], [0], [0], [1], [0, 0, 1, 1], [], []>} : vector<8x256xf32>, vector<256x128xf32>, vector<8x128xf32> -> vector<8x128xf32>
    %c0_68 = arith.constant 0 : index
    %c0_69 = arith.constant 0 : index
    %270 = vector.load %arg4[%c0_68, %c0_69] : memref<1x128xf32, #tpu.memory_space<vmem>>, vector<1x128xf32>
    %271 = vector.broadcast %270 : vector<1x128xf32> to vector<8x128xf32>
    %272 = arith.addf %269, %271 : vector<8x128xf32>
    %c0_70 = arith.constant 0 : index
    %c0_71 = arith.constant 0 : index
    %273 = vector.load %arg5[%c0_70, %c0_71] : memref<8x128xf32, #tpu.memory_space<vmem>>, vector<8x128xf32>
    tpu.vector_store %arg5[%c0_70, %c0_71], %272 {strides = array<i32>} : memref<8x128xf32, #tpu.memory_space<vmem>>, vector<8x128xf32>,
    return
  }
}

</mosaic_0001>

<llo_original>
// kernel: lstm_classifier_forward.1
$region0: #{lstm_classifier_forward.1}
  #allocation0 [shape = 'u32[]', space=smem, size = 0x4, offset = 0x4, fixed_abs, tag = 'smem constant byte address 0x4 - core index']
  #allocation1 [shape = 'u32[144,128]{1,0:T(1,128)}', space=vmem, size = 0x12000, scoped, tag = 'internal scratch']
  %s0 = inlined_call_operand.vmem [shape: f32[8,8,1024], index: 0, kind: input, shape index: {}]
  %s1 = inlined_call_operand.vmem [shape: s32[8,1], index: 1, kind: input, shape index: {}]
  %s2 = inlined_call_operand.vmem [shape: f32[256,1024], index: 2, kind: input, shape index: {}]
  %s3 = inlined_call_operand.vmem [shape: f32[256,128], index: 3, kind: input, shape index: {}]
  %s4 = inlined_call_operand.vmem [shape: f32[1,128], index: 4, kind: input, shape index: {}]
  %s5 = inlined_call_operand.vmem [shape: f32[8,128], index: 5, kind: output, shape index: {}]
  %s6 = sld [smem:[#allocation0]]
  $region30: #{lstm_classifier_forward.1} parent=0
    _
  %s8 = ssub.s32 1, %s6
  %s9 = scalar_select 0, %s8, %s6
  // Predicated region
  $region2: #{lstm_classifier_forward.1} parent=0 // pred_check
    _
  $region3: #{lstm_classifier_forward.1} parent=0 // pred_check_branch
    %11 = sbr.rel (0) target = $region5
  $region4: #{lstm_classifier_forward.1} parent=0 // pred_region
    _
  $region5: #{lstm_classifier_forward.1} parent=0 // pred_fallthru
    _
  // Predicated region
  $region6: #{lstm_classifier_forward.1} parent=0 // pred_check
    _
  $region7: #{lstm_classifier_forward.1} parent=0 // pred_check_branch
    %13 = sbr.rel (0) target = $region9
  $region8: #{lstm_classifier_forward.1} parent=0 // pred_region
    _
  $region9: #{lstm_classifier_forward.1} parent=0 // pred_fallthru
    _
  // Predicated region
  $region10: #{lstm_classifier_forward.1} parent=0 // pred_check
    _
  $region11: #{lstm_classifier_forward.1} parent=0 // pred_check_branch
    %15 = sbr.rel (0) target = $region13
  $region12: #{lstm_classifier_forward.1} parent=0 // pred_region
    _
  $region13: #{lstm_classifier_forward.1} parent=0 // pred_fallthru
    _
  // Predicated region
  $region14: #{lstm_classifier_forward.1} parent=0 // pred_check
    _
  $region15: #{lstm_classifier_forward.1} parent=0 // pred_check_branch
    %17 = sbr.rel (0) target = $region17
  $region16: #{lstm_classifier_forward.1} parent=0 // pred_region
    _
  $region17: #{lstm_classifier_forward.1} parent=0 // pred_fallthru
    _
  // Predicated region
  $region18: #{lstm_classifier_forward.1} parent=0 // pred_check
    _
  $region19: #{lstm_classifier_forward.1} parent=0 // pred_check_branch
    %19 = sbr.rel (0) target = $region21
  $region20: #{lstm_classifier_forward.1} parent=0 // pred_region
    _
  $region21: #{lstm_classifier_forward.1} parent=0 // pred_fallthru
    _
  %v20 = vld [vmem:[%s1] sm:$0xff]
  %v21 = vlaneseq
  %v22 = vand.u32 %v21, 127
  %v23 = vadd.s32 %v22, 128
  %v24 = vld [vmem:[%s0] sm:$0xff]
  %v25 = vld [vmem:[%s0 + $0x8] sm:$0xff]
  %v26 = vld [vmem:[%s0 + $0x10] sm:$0xff]
  %v27 = vld [vmem:[%s0 + $0x18] sm:$0xff]
  %v28 = vld [vmem:[%s0 + $0x20] sm:$0xff]
  %v29 = vld [vmem:[%s0 + $0x28] sm:$0xff]
  %v30 = vld [vmem:[%s0 + $0x30] sm:$0xff]
  %v31 = vld [vmem:[%s0 + $0x38] sm:$0xff]
  %v32 = vld [vmem:[%s2] sm:$0xff]
  %v33 = vld [vmem:[%s2 + $0x8] sm:$0xff]
  %v34 = vld [vmem:[%s2 + $0x10] sm:$0xff]
  %v35 = vld [vmem:[%s2 + $0x18] sm:$0xff]
  %v36 = vld [vmem:[%s2 + $0x20] sm:$0xff]
  %v37 = vld [vmem:[%s2 + $0x28] sm:$0xff]
  %v38 = vld [vmem:[%s2 + $0x30] sm:$0xff]
  %v39 = vld [vmem:[%s2 + $0x38] sm:$0xff]
  %v40 = vld [vmem:[%s2 + $0x40] sm:$0xff]
  %v41 = vld [vmem:[%s2 + $0x48] sm:$0xff]
  %v42 = vld [vmem:[%s2 + $0x50] sm:$0xff]
  %v43 = vld [vmem:[%s2 + $0x58] sm:$0xff]
  %v44 = vld [vmem:[%s2 + $0x60] sm:$0xff]
  %v45 = vld [vmem:[%s2 + $0x68] sm:$0xff]
  %v46 = vld [vmem:[%s2 + $0x70] sm:$0xff]
  %v47 = vld [vmem:[%s2 + $0x78] sm:$0xff]
  %v48 = vld [vmem:[%s2 + $0x80] sm:$0xff]
  %v49 = vld [vmem:[%s2 + $0x88] sm:$0xff]
  %v50 = vld [vmem:[%s2 + $0x90] sm:$0xff]
  %v51 = vld [vmem:[%s2 + $0x98] sm:$0xff]
  %v52 = vld [vmem:[%s2 + $0xa0] sm:$0xff]
  %v53 = vld [vmem:[%s2 + $0xa8] sm:$0xff]
  %v54 = vld [vmem:[%s2 + $0xb0] sm:$0xff]
  %v55 = vld [vmem:[%s2 + $0xb8] sm:$0xff]
  %v56 = vld [vmem:[%s2 + $0xc0] sm:$0xff]
  %v57 = vld [vmem:[%s2 + $0xc8] sm:$0xff]
  %v58 = vld [vmem:[%s2 + $0xd0] sm:$0xff]
  %v59 = vld [vmem:[%s2 + $0xd8] sm:$0xff]
  %v60 = vld [vmem:[%s2 + $0xe0] sm:$0xff]
  %v61 = vld [vmem:[%s2 + $0xe8] sm:$0xff]
  %v62 = vld [vmem:[%s2 + $0xf0] sm:$0xff]
  %v63 = vld [vmem:[%s2 + $0xf8] sm:$0xff]
  %v64 = vld [vmem:[%s2 + $0x100] sm:$0xff]
  %v65 = vld [vmem:[%s2 + $0x108] sm:$0xff]
  %v66 = vld [vmem:[%s2 + $0x110] sm:$0xff]
  %v67 = vld [vmem:[%s2 + $0x118] sm:$0xff]
  %v68 = vld [vmem:[%s2 + $0x120] sm:$0xff]
  %v69 = vld [vmem:[%s2 + $0x128] sm:$0xff]
  %v70 = vld [vmem:[%s2 + $0x130] sm:$0xff]
  %v71 = vld [vmem:[%s2 + $0x138] sm:$0xff]
  %v72 = vld [vmem:[%s2 + $0x140] sm:$0xff]
  %v73 = vld [vmem:[%s2 + $0x148] sm:$0xff]
  %v74 = vld [vmem:[%s2 + $0x150] sm:$0xff]
  %v75 = vld [vmem:[%s2 + $0x158] sm:$0xff]
  %v76 = vld [vmem:[%s2 + $0x160] sm:$0xff]
  %v77 = vld [vmem:[%s2 + $0x168] sm:$0xff]
  %v78 = vld [vmem:[%s2 + $0x170] sm:$0xff]
  %v79 = vld [vmem:[%s2 + $0x178] sm:$0xff]
  %v80 = vld [vmem:[%s2 + $0x180] sm:$0xff]
  %v81 = vld [vmem:[%s2 + $0x188] sm:$0xff]
  %v82 = vld [vmem:[%s2 + $0x190] sm:$0xff]
  %v83 = vld [vmem:[%s2 + $0x198] sm:$0xff]
  %v84 = vld [vmem:[%s2 + $0x1a0] sm:$0xff]
  %v85 = vld [vmem:[%s2 + $0x1a8] sm:$0xff]
  %v86 = vld [vmem:[%s2 + $0x1b0] sm:$0xff]
  %v87 = vld [vmem:[%s2 + $0x1b8] sm:$0xff]
  %v88 = vld [vmem:[%s2 + $0x1c0] sm:$0xff]
  %v89 = vld [vmem:[%s2 + $0x1c8] sm:$0xff]
  %v90 = vld [vmem:[%s2 + $0x1d0] sm:$0xff]
  %v91 = vld [vmem:[%s2 + $0x1d8] sm:$0xff]
  %v92 = vld [vmem:[%s2 + $0x1e0] sm:$0xff]
  %v93 = vld [vmem:[%s2 + $0x1e8] sm:$0xff]
  %v94 = vld [vmem:[%s2 + $0x1f0] sm:$0xff]
  %v95 = vld [vmem:[%s2 + $0x1f8] sm:$0xff]
  %v96 = vld [vmem:[%s2 + $0x200] sm:$0xff]
  %v97 = vld [vmem:[%s2 + $0x208] sm:$0xff]
  %v98 = vld [vmem:[%s2 + $0x210] sm:$0xff]
  %v99 = vld [vmem:[%s2 + $0x218] sm:$0xff]
  %v100 = vld [vmem:[%s2 + $0x220] sm:$0xff]
  %v101 = vld [vmem:[%s2 + $0x228] sm:$0xff]
  %v102 = vld [vmem:[%s2 + $0x230] sm:$0xff]
  %v103 = vld [vmem:[%s2 + $0x238] sm:$0xff]
  %v104 = vld [vmem:[%s2 + $0x240] sm:$0xff]
  %v105 = vld [vmem:[%s2 + $0x248] sm:$0xff]
  %v106 = vld [vmem:[%s2 + $0x250] sm:$0xff]
  %v107 = vld [vmem:[%s2 + $0x258] sm:$0xff]
  %v108 = vld [vmem:[%s2 + $0x260] sm:$0xff]
  %v109 = vld [vmem:[%s2 + $0x268] sm:$0xff]
  %v110 = vld [vmem:[%s2 + $0x270] sm:$0xff]
  %v111 = vld [vmem:[%s2 + $0x278] sm:$0xff]
  %v112 = vld [vmem:[%s2 + $0x280] sm:$0xff]
  %v113 = vld [vmem:[%s2 + $0x288] sm:$0xff]
  %v114 = vld [vmem:[%s2 + $0x290] sm:$0xff]
  %v115 = vld [vmem:[%s2 + $0x298] sm:$0xff]
  %v116 = vld [vmem:[%s2 + $0x2a0] sm:$0xff]
  %v117 = vld [vmem:[%s2 + $0x2a8] sm:$0xff]
  %v118 = vld [vmem:[%s2 + $0x2b0] sm:$0xff]
  %v119 = vld [vmem:[%s2 + $0x2b8] sm:$0xff]
  %v120 = vld [vmem:[%s2 + $0x2c0] sm:$0xff]
  %v121 = vld [vmem:[%s2 + $0x2c8] sm:$0xff]
  %v122 = vld [vmem:[%s2 + $0x2d0] sm:$0xff]
  %v123 = vld [vmem:[%s2 + $0x2d8] sm:$0xff]
  %v124 = vld [vmem:[%s2 + $0x2e0] sm:$0xff]
  %v125 = vld [vmem:[%s2 + $0x2e8] sm:$0xff]
  %v126 = vld [vmem:[%s2 + $0x2f0] sm:$0xff]
  %v127 = vld [vmem:[%s2 + $0x2f8] sm:$0xff]
  %v128 = vld [vmem:[%s2 + $0x300] sm:$0xff]
  %v129 = vld [vmem:[%s2 + $0x308] sm:$0xff]
  %v130 = vld [vmem:[%s2 + $0x310] sm:$0xff]
  %v131 = vld [vmem:[%s2 + $0x318] sm:$0xff]
  %v132 = vld [vmem:[%s2 + $0x320] sm:$0xff]
  %v133 = vld [vmem:[%s2 + $0x328] sm:$0xff]
  %v134 = vld [vmem:[%s2 + $0x330] sm:$0xff]
  %v135 = vld [vmem:[%s2 + $0x338] sm:$0xff]
  %v136 = vld [vmem:[%s2 + $0x340] sm:$0xff]
  %v137 = vld [vmem:[%s2 + $0x348] sm:$0xff]
  %v138 = vld [vmem:[%s2 + $0x350] sm:$0xff]
  %v139 = vld [vmem:[%s2 + $0x358] sm:$0xff]
  %v140 = vld [vmem:[%s2 + $0x360] sm:$0xff]
  %v141 = vld [vmem:[%s2 + $0x368] sm:$0xff]
  %v142 = vld [vmem:[%s2 + $0x370] sm:$0xff]
  %v143 = vld [vmem:[%s2 + $0x378] sm:$0xff]
  %v144 = vld [vmem:[%s2 + $0x380] sm:$0xff]
  %v145 = vld [vmem:[%s2 + $0x388] sm:$0xff]
  %v146 = vld [vmem:[%s2 + $0x390] sm:$0xff]
  %v147 = vld [vmem:[%s2 + $0x398] sm:$0xff]
  %v148 = vld [vmem:[%s2 + $0x3a0] sm:$0xff]
  %v149 = vld [vmem:[%s2 + $0x3a8] sm:$0xff]
  %v150 = vld [vmem:[%s2 + $0x3b0] sm:$0xff]
  %v151 = vld [vmem:[%s2 + $0x3b8] sm:$0xff]
  %v152 = vld [vmem:[%s2 + $0x3c0] sm:$0xff]
  %v153 = vld [vmem:[%s2 + $0x3c8] sm:$0xff]
  %v154 = vld [vmem:[%s2 + $0x3d0] sm:$0xff]
  %v155 = vld [vmem:[%s2 + $0x3d8] sm:$0xff]
  %v156 = vld [vmem:[%s2 + $0x3e0] sm:$0xff]
  %v157 = vld [vmem:[%s2 + $0x3e8] sm:$0xff]
  %v158 = vld [vmem:[%s2 + $0x3f0] sm:$0xff]
  %v159 = vld [vmem:[%s2 + $0x3f8] sm:$0xff]
  %v160 = vld [vmem:[%s2 + $0x400] sm:$0xff]
  %v161 = vld [vmem:[%s2 + $0x408] sm:$0xff]
  %v162 = vld [vmem:[%s2 + $0x410] sm:$0xff]
  %v163 = vld [vmem:[%s2 + $0x418] sm:$0xff]
  %v164 = vld [vmem:[%s2 + $0x420] sm:$0xff]
  %v165 = vld [vmem:[%s2 + $0x428] sm:$0xff]
  %v166 = vld [vmem:[%s2 + $0x430] sm:$0xff]
  %v167 = vld [vmem:[%s2 + $0x438] sm:$0xff]
  %v168 = vld [vmem:[%s2 + $0x440] sm:$0xff]
  %v169 = vld [vmem:[%s2 + $0x448] sm:$0xff]
  %v170 = vld [vmem:[%s2 + $0x450] sm:$0xff]
  %v171 = vld [vmem:[%s2 + $0x458] sm:$0xff]
  %v172 = vld [vmem:[%s2 + $0x460] sm:$0xff]
  %v173 = vld [vmem:[%s2 + $0x468] sm:$0xff]
  %v174 = vld [vmem:[%s2 + $0x470] sm:$0xff]
  %v175 = vld [vmem:[%s2 + $0x478] sm:$0xff]
  %v176 = vld [vmem:[%s2 + $0x480] sm:$0xff]
  %v177 = vld [vmem:[%s2 + $0x488] sm:$0xff]
  %v178 = vld [vmem:[%s2 + $0x490] sm:$0xff]
  %v179 = vld [vmem:[%s2 + $0x498] sm:$0xff]
  %v180 = vld [vmem:[%s2 + $0x4a0] sm:$0xff]
  %v181 = vld [vmem:[%s2 + $0x4a8] sm:$0xff]
  %v182 = vld [vmem:[%s2 + $0x4b0] sm:$0xff]
  %v183 = vld [vmem:[%s2 + $0x4b8] sm:$0xff]
  %v184 = vld [vmem:[%s2 + $0x4c0] sm:$0xff]
  %v185 = vld [vmem:[%s2 + $0x4c8] sm:$0xff]
  %v186 = vld [vmem:[%s2 + $0x4d0] sm:$0xff]
  %v187 = vld [vmem:[%s2 + $0x4d8] sm:$0xff]
  %v188 = vld [vmem:[%s2 + $0x4e0] sm:$0xff]
  %v189 = vld [vmem:[%s2 + $0x4e8] sm:$0xff]
  %v190 = vld [vmem:[%s2 + $0x4f0] sm:$0xff]
  %v191 = vld [vmem:[%s2 + $0x4f8] sm:$0xff]
  %v192 = vld [vmem:[%s2 + $0x500] sm:$0xff]
  %v193 = vld [vmem:[%s2 + $0x508] sm:$0xff]
  %v194 = vld [vmem:[%s2 + $0x510] sm:$0xff]
  %v195 = vld [vmem:[%s2 + $0x518] sm:$0xff]
  %v196 = vld [vmem:[%s2 + $0x520] sm:$0xff]
  %v197 = vld [vmem:[%s2 + $0x528] sm:$0xff]
  %v198 = vld [vmem:[%s2 + $0x530] sm:$0xff]
  %v199 = vld [vmem:[%s2 + $0x538] sm:$0xff]
  %v200 = vld [vmem:[%s2 + $0x540] sm:$0xff]
  %v201 = vld [vmem:[%s2 + $0x548] sm:$0xff]
  %v202 = vld [vmem:[%s2 + $0x550] sm:$0xff]
  %v203 = vld [vmem:[%s2 + $0x558] sm:$0xff]
  %v204 = vld [vmem:[%s2 + $0x560] sm:$0xff]
  %v205 = vld [vmem:[%s2 + $0x568] sm:$0xff]
  %v206 = vld [vmem:[%s2 + $0x570] sm:$0xff]
  %v207 = vld [vmem:[%s2 + $0x578] sm:$0xff]
  %v208 = vld [vmem:[%s2 + $0x580] sm:$0xff]
  %v209 = vld [vmem:[%s2 + $0x588] sm:$0xff]
  %v210 = vld [vmem:[%s2 + $0x590] sm:$0xff]
  %v211 = vld [vmem:[%s2 + $0x598] sm:$0xff]
  %v212 = vld [vmem:[%s2 + $0x5a0] sm:$0xff]
  %v213 = vld [vmem:[%s2 + $0x5a8] sm:$0xff]
  %v214 = vld [vmem:[%s2 + $0x5b0] sm:$0xff]
  %v215 = vld [vmem:[%s2 + $0x5b8] sm:$0xff]
  %v216 = vld [vmem:[%s2 + $0x5c0] sm:$0xff]
  %v217 = vld [vmem:[%s2 + $0x5c8] sm:$0xff]
  %v218 = vld [vmem:[%s2 + $0x5d0] sm:$0xff]
  %v219 = vld [vmem:[%s2 + $0x5d8] sm:$0xff]
  %v220 = vld [vmem:[%s2 + $0x5e0] sm:$0xff]
  %v221 = vld [vmem:[%s2 + $0x5e8] sm:$0xff]
  %v222 = vld [vmem:[%s2 + $0x5f0] sm:$0xff]
  %v223 = vld [vmem:[%s2 + $0x5f8] sm:$0xff]
  %v224 = vld [vmem:[%s2 + $0x600] sm:$0xff]
  %v225 = vld [vmem:[%s2 + $0x608] sm:$0xff]
  %v226 = vld [vmem:[%s2 + $0x610] sm:$0xff]
  %v227 = vld [vmem:[%s2 + $0x618] sm:$0xff]
  %v228 = vld [vmem:[%s2 + $0x620] sm:$0xff]
  %v229 = vld [vmem:[%s2 + $0x628] sm:$0xff]
  %v230 = vld [vmem:[%s2 + $0x630] sm:$0xff]
  %v231 = vld [vmem:[%s2 + $0x638] sm:$0xff]
  %v232 = vld [vmem:[%s2 + $0x640] sm:$0xff]
  %v233 = vld [vmem:[%s2 + $0x648] sm:$0xff]
  %v234 = vld [vmem:[%s2 + $0x650] sm:$0xff]
  %v235 = vld [vmem:[%s2 + $0x658] sm:$0xff]
  %v236 = vld [vmem:[%s2 + $0x660] sm:$0xff]
  %v237 = vld [vmem:[%s2 + $0x668] sm:$0xff]
  %v238 = vld [vmem:[%s2 + $0x670] sm:$0xff]
  %v239 = vld [vmem:[%s2 + $0x678] sm:$0xff]
  %v240 = vld [vmem:[%s2 + $0x680] sm:$0xff]
  %v241 = vld [vmem:[%s2 + $0x688] sm:$0xff]
  %v242 = vld [vmem:[%s2 + $0x690] sm:$0xff]
  %v243 = vld [vmem:[%s2 + $0x698] sm:$0xff]
  %v244 = vld [vmem:[%s2 + $0x6a0] sm:$0xff]
  %v245 = vld [vmem:[%s2 + $0x6a8] sm:$0xff]
  %v246 = vld [vmem:[%s2 + $0x6b0] sm:$0xff]
  %v247 = vld [vmem:[%s2 + $0x6b8] sm:$0xff]
  %v248 = vld [vmem:[%s2 + $0x6c0] sm:$0xff]
  %v249 = vld [vmem:[%s2 + $0x6c8] sm:$0xff]
  %v250 = vld [vmem:[%s2 + $0x6d0] sm:$0xff]
  %v251 = vld [vmem:[%s2 + $0x6d8] sm:$0xff]
  %v252 = vld [vmem:[%s2 + $0x6e0] sm:$0xff]
  %v253 = vld [vmem:[%s2 + $0x6e8] sm:$0xff]
  %v254 = vld [vmem:[%s2 + $0x6f0] sm:$0xff]
  %v255 = vld [vmem:[%s2 + $0x6f8] sm:$0xff]
  %v256 = vld [vmem:[%s2 + $0x700] sm:$0xff]
  %v257 = vld [vmem:[%s2 + $0x708] sm:$0xff]
  %v258 = vld [vmem:[%s2 + $0x710] sm:$0xff]
  %v259 = vld [vmem:[%s2 + $0x718] sm:$0xff]
  %v260 = vld [vmem:[%s2 + $0x720] sm:$0xff]
  %v261 = vld [vmem:[%s2 + $0x728] sm:$0xff]
  %v262 = vld [vmem:[%s2 + $0x730] sm:$0xff]
  %v263 = vld [vmem:[%s2 + $0x738] sm:$0xff]
  %v264 = vld [vmem:[%s2 + $0x740] sm:$0xff]
  %v265 = vld [vmem:[%s2 + $0x748] sm:$0xff]
  %v266 = vld [vmem:[%s2 + $0x750] sm:$0xff]
  %v267 = vld [vmem:[%s2 + $0x758] sm:$0xff]
  %v268 = vld [vmem:[%s2 + $0x760] sm:$0xff]
  %v269 = vld [vmem:[%s2 + $0x768] sm:$0xff]
  %v270 = vld [vmem:[%s2 + $0x770] sm:$0xff]
  %v271 = vld [vmem:[%s2 + $0x778] sm:$0xff]
  %v272 = vld [vmem:[%s2 + $0x780] sm:$0xff]
  %v273 = vld [vmem:[%s2 + $0x788] sm:$0xff]
  %v274 = vld [vmem:[%s2 + $0x790] sm:$0xff]
  %v275 = vld [vmem:[%s2 + $0x798] sm:$0xff]
  %v276 = vld [vmem:[%s2 + $0x7a0] sm:$0xff]
  %v277 = vld [vmem:[%s2 + $0x7a8] sm:$0xff]
  %v278 = vld [vmem:[%s2 + $0x7b0] sm:$0xff]
  %v279 = vld [vmem:[%s2 + $0x7b8] sm:$0xff]
  %v280 = vld [vmem:[%s2 + $0x7c0] sm:$0xff]
  %v281 = vld [vmem:[%s2 + $0x7c8] sm:$0xff]
  %v282 = vld [vmem:[%s2 + $0x7d0] sm:$0xff]
  %v283 = vld [vmem:[%s2 + $0x7d8] sm:$0xff]
  %v284 = vld [vmem:[%s2 + $0x7e0] sm:$0xff]
  %v285 = vld [vmem:[%s2 + $0x7e8] sm:$0xff]
  %v286 = vld [vmem:[%s2 + $0x7f0] sm:$0xff]
  %v287 = vld [vmem:[%s2 + $0x7f8] sm:$0xff]
  %288 = vmatprep.subr.mxu0 %v33
  %289 = vmatpush1.msra.mxu0 %v32
  %290 = vmatprep.subr.mxu0 %v41
  %291 = vmatpush1.msra.mxu0 %v40
  %292 = vmatprep.subr.mxu0 %v49
  %293 = vmatpush1.msra.mxu0 %v48
  %294 = vmatprep.subr.mxu0 %v57
  %295 = vmatpush1.msra.mxu0 %v56
  %296 = vmatprep.subr.mxu0 %v65
  %297 = vmatpush1.msra.mxu0 %v64
  %298 = vmatprep.subr.mxu0 %v73
  %299 = vmatpush1.msra.mxu0 %v72
  %300 = vmatprep.subr.mxu0 %v81
  %301 = vmatpush1.msra.mxu0 %v80
  %302 = vmatprep.subr.mxu0 %v89
  %303 = vmatpush1.msra.mxu0 %v88
  %304 = vmatprep.subr.mxu0 %v97
  %305 = vmatpush1.msra.mxu0 %v96
  %306 = vmatprep.subr.mxu0 %v105
  %307 = vmatpush1.msra.mxu0 %v104
  %308 = vmatprep.subr.mxu0 %v113
  %309 = vmatpush1.msra.mxu0 %v112
  %310 = vmatprep.subr.mxu0 %v121
  %311 = vmatpush1.msra.mxu0 %v120
  %312 = vmatprep.subr.mxu0 %v129
  %313 = vmatpush1.msra.mxu0 %v128
  %314 = vmatprep.subr.mxu0 %v137
  %315 = vmatpush1.msra.mxu0 %v136
  %316 = vmatprep.subr.mxu0 %v145
  %317 = vmatpush1.msra.mxu0 %v144
  %318 = vmatprep.subr.mxu0 %v153
  %319 = vmatpush1.msra.mxu0 %v152
  %320 = vmatprep.subr.mxu0 %v161
  %321 = vmatpush1.msra.mxu0 %v160
  %322 = vmatprep.subr.mxu0 %v169
  %323 = vmatpush1.msra.mxu0 %v168
  %324 = vmatprep.subr.mxu0 %v177
  %325 = vmatpush1.msra.mxu0 %v176
  %326 = vmatprep.subr.mxu0 %v185
  %327 = vmatpush1.msra.mxu0 %v184
  %328 = vmatprep.subr.mxu0 %v193
  %329 = vmatpush1.msra.mxu0 %v192
  %330 = vmatprep.subr.mxu0 %v201
  %331 = vmatpush1.msra.mxu0 %v200
  %332 = vmatprep.subr.mxu0 %v209
  %333 = vmatpush1.msra.mxu0 %v208
  %334 = vmatprep.subr.mxu0 %v217
  %335 = vmatpush1.msra.mxu0 %v216
  %336 = vmatprep.subr.mxu0 %v225
  %337 = vmatpush1.msra.mxu0 %v224
  %338 = vmatprep.subr.mxu0 %v233
  %339 = vmatpush1.msra.mxu0 %v232
  %340 = vmatprep.subr.mxu0 %v241
  %341 = vmatpush1.msra.mxu0 %v240
  %342 = vmatprep.subr.mxu0 %v249
  %343 = vmatpush1.msra.mxu0 %v248
  %344 = vmatprep.subr.mxu0 %v257
  %345 = vmatpush1.msra.mxu0 %v256
  %346 = vmatprep.subr.mxu0 %v265
  %347 = vmatpush1.msra.mxu0 %v264
  %348 = vmatprep.subr.mxu0 %v273
  %349 = vmatpush1.msra.mxu0 %v272
  %350 = vmatprep.subr.mxu0 %v281
  %351 = vmatpush1.msra.mxu0 %v280
  %352 = vmatprep.mubr.f32.mxu0 0.0
  %353 = vmatmul.mubr.f32.gmra.mrb[0].mxu0 0.0
  %v354 = vpop.f32.mrb[0].mxu0
  %v355 = vadd.f32 0.0, %v354
  %v356 = vpop.f32.mrb[0].mxu0
  %v357 = vadd.f32 0.0, %v356
  %358 = vdwg.mxu0
  %359 = vmatprep.subr.mxu0 %v35
  %360 = vmatpush1.msra.mxu0 %v34
  %361 = vmatprep.subr.mxu0 %v43
  %362 = vmatpush1.msra.mxu0 %v42
  %363 = vmatprep.subr.mxu0 %v51
  %364 = vmatpush1.msra.mxu0 %v50
  %365 = vmatprep.subr.mxu0 %v59
  %366 = vmatpush1.msra.mxu0 %v58
  %367 = vmatprep.subr.mxu0 %v67
  %368 = vmatpush1.msra.mxu0 %v66
  %369 = vmatprep.subr.mxu0 %v75
  %370 = vmatpush1.msra.mxu0 %v74
  %371 = vmatprep.subr.mxu0 %v83
  %372 = vmatpush1.msra.mxu0 %v82
  %373 = vmatprep.subr.mxu0 %v91
  %374 = vmatpush1.msra.mxu0 %v90
  %375 = vmatprep.subr.mxu0 %v99
  %376 = vmatpush1.msra.mxu0 %v98
  %377 = vmatprep.subr.mxu0 %v107
  %378 = vmatpush1.msra.mxu0 %v106
  %379 = vmatprep.subr.mxu0 %v115
  %380 = vmatpush1.msra.mxu0 %v114
  %381 = vmatprep.subr.mxu0 %v123
  %382 = vmatpush1.msra.mxu0 %v122
  %383 = vmatprep.subr.mxu0 %v131
  %384 = vmatpush1.msra.mxu0 %v130
  %385 = vmatprep.subr.mxu0 %v139
  %386 = vmatpush1.msra.mxu0 %v138
  %387 = vmatprep.subr.mxu0 %v147
  %388 = vmatpush1.msra.mxu0 %v146
  %389 = vmatprep.subr.mxu0 %v155
  %390 = vmatpush1.msra.mxu0 %v154
  %391 = vmatprep.subr.mxu0 %v163
  %392 = vmatpush1.msra.mxu0 %v162
  %393 = vmatprep.subr.mxu0 %v171
  %394 = vmatpush1.msra.mxu0 %v170
  %395 = vmatprep.subr.mxu0 %v179
  %396 = vmatpush1.msra.mxu0 %v178
  %397 = vmatprep.subr.mxu0 %v187
  %398 = vmatpush1.msra.mxu0 %v186
  %399 = vmatprep.subr.mxu0 %v195
  %400 = vmatpush1.msra.mxu0 %v194
  %401 = vmatprep.subr.mxu0 %v203
  %402 = vmatpush1.msra.mxu0 %v202
  %403 = vmatprep.subr.mxu0 %v211
  %404 = vmatpush1.msra.mxu0 %v210
  %405 = vmatprep.subr.mxu0 %v219
  %406 = vmatpush1.msra.mxu0 %v218
  %407 = vmatprep.subr.mxu0 %v227
  %408 = vmatpush1.msra.mxu0 %v226
  %409 = vmatprep.subr.mxu0 %v235
  %410 = vmatpush1.msra.mxu0 %v234
  %411 = vmatprep.subr.mxu0 %v243
  %412 = vmatpush1.msra.mxu0 %v242
  %413 = vmatprep.subr.mxu0 %v251
  %414 = vmatpush1.msra.mxu0 %v250
  %415 = vmatprep.subr.mxu0 %v259
  %416 = vmatpush1.msra.mxu0 %v258
  %417 = vmatprep.subr.mxu0 %v267
  %418 = vmatpush1.msra.mxu0 %v266
  %419 = vmatprep.subr.mxu0 %v275
  %420 = vmatpush1.msra.mxu0 %v274
  %421 = vmatprep.subr.mxu0 %v283
  %422 = vmatpush1.msra.mxu0 %v282
  %423 = vmatprep.mubr.f32.mxu0 0.0
  %424 = vmatmul.mubr.f32.gmra.mrb[0].mxu0 0.0
  %v425 = vpop.f32.mrb[0].mxu0
  %v426 = vadd.f32 0.0, %v425
  %v427 = vpop.f32.mrb[0].mxu0
  %v428 = vadd.f32 0.0, %v427
  %429 = vdwg.mxu0
  %430 = vmatprep.subr.mxu0 %v37
  %431 = vmatpush1.msra.mxu0 %v36
  %432 = vmatprep.subr.mxu0 %v45
  %433 = vmatpush1.msra.mxu0 %v44
  %434 = vmatprep.subr.mxu0 %v53
  %435 = vmatpush1.msra.mxu0 %v52
  %436 = vmatprep.subr.mxu0 %v61
  %437 = vmatpush1.msra.mxu0 %v60
  %438 = vmatprep.subr.mxu0 %v69
  %439 = vmatpush1.msra.mxu0 %v68
  %440 = vmatprep.subr.mxu0 %v77
  %441 = vmatpush1.msra.mxu0 %v76
  %442 = vmatprep.subr.mxu0 %v85
  %443 = vmatpush1.msra.mxu0 %v84
  %444 = vmatprep.subr.mxu0 %v93
  %445 = vmatpush1.msra.mxu0 %v92
  %446 = vmatprep.subr.mxu0 %v101
  %447 = vmatpush1.msra.mxu0 %v100
  %448 = vmatprep.subr.mxu0 %v109
  %449 = vmatpush1.msra.mxu0 %v108
  %450 = vmatprep.subr.mxu0 %v117
  %451 = vmatpush1.msra.mxu0 %v116
  %452 = vmatprep.subr.mxu0 %v125
  %453 = vmatpush1.msra.mxu0 %v124
  %454 = vmatprep.subr.mxu0 %v133
  %455 = vmatpush1.msra.mxu0 %v132
  %456 = vmatprep.subr.mxu0 %v141
  %457 = vmatpush1.msra.mxu0 %v140
  %458 = vmatprep.subr.mxu0 %v149
  %459 = vmatpush1.msra.mxu0 %v148
  %460 = vmatprep.subr.mxu0 %v157
  %461 = vmatpush1.msra.mxu0 %v156
  %462 = vmatprep.subr.mxu0 %v165
  %463 = vmatpush1.msra.mxu0 %v164
  %464 = vmatprep.subr.mxu0 %v173
  %465 = vmatpush1.msra.mxu0 %v172
  %466 = vmatprep.subr.mxu0 %v181
  %467 = vmatpush1.msra.mxu0 %v180
  %468 = vmatprep.subr.mxu0 %v189
  %469 = vmatpush1.msra.mxu0 %v188
  %470 = vmatprep.subr.mxu0 %v197
  %471 = vmatpush1.msra.mxu0 %v196
  %472 = vmatprep.subr.mxu0 %v205
  %473 = vmatpush1.msra.mxu0 %v204
  %474 = vmatprep.subr.mxu0 %v213
  %475 = vmatpush1.msra.mxu0 %v212
  %476 = vmatprep.subr.mxu0 %v221
  %477 = vmatpush1.msra.mxu0 %v220
  %478 = vmatprep.subr.mxu0 %v229
  %479 = vmatpush1.msra.mxu0 %v228
  %480 = vmatprep.subr.mxu0 %v237
  %481 = vmatpush1.msra.mxu0 %v236
  %482 = vmatprep.subr.mxu0 %v245
  %483 = vmatpush1.msra.mxu0 %v244
  %484 = vmatprep.subr.mxu0 %v253
  %485 = vmatpush1.msra.mxu0 %v252
  %486 = vmatprep.subr.mxu0 %v261
  %487 = vmatpush1.msra.mxu0 %v260
  %488 = vmatprep.subr.mxu0 %v269
  %489 = vmatpush1.msra.mxu0 %v268
  %490 = vmatprep.subr.mxu0 %v277
  %491 = vmatpush1.msra.mxu0 %v276
  %492 = vmatprep.subr.mxu0 %v285
  %493 = vmatpush1.msra.mxu0 %v284
  %494 = vmatprep.mubr.f32.mxu0 0.0
  %495 = vmatmul.mubr.f32.gmra.mrb[0].mxu0 0.0
  %v496 = vpop.f32.mrb[0].mxu0
  %v497 = vadd.f32 0.0, %v496
  %v498 = vpop.f32.mrb[0].mxu0
  %v499 = vadd.f32 0.0, %v498
  %500 = vdwg.mxu0
  %501 = vmatprep.subr.mxu0 %v39
  %502 = vmatpush1.msra.mxu0 %v38
  %503 = vmatprep.subr.mxu0 %v47
  %504 = vmatpush1.msra.mxu0 %v46
  %505 = vmatprep.subr.mxu0 %v55
  %506 = vmatpush1.msra.mxu0 %v54
  %507 = vmatprep.subr.mxu0 %v63
  %508 = vmatpush1.msra.mxu0 %v62
  %509 = vmatprep.subr.mxu0 %v71
  %510 = vmatpush1.msra.mxu0 %v70
  %511 = vmatprep.subr.mxu0 %v79
  %512 = vmatpush1.msra.mxu0 %v78
  %513 = vmatprep.subr.mxu0 %v87
  %514 = vmatpush1.msra.mxu0 %v86
  %515 = vmatprep.subr.mxu0 %v95
  %516 = vmatpush1.msra.mxu0 %v94
  %517 = vmatprep.subr.mxu0 %v103
  %518 = vmatpush1.msra.mxu0 %v102
  %519 = vmatprep.subr.mxu0 %v111
  %520 = vmatpush1.msra.mxu0 %v110
  %521 = vmatprep.subr.mxu0 %v119
  %522 = vmatpush1.msra.mxu0 %v118
  %523 = vmatprep.subr.mxu0 %v127
  %524 = vmatpush1.msra.mxu0 %v126
  %525 = vmatprep.subr.mxu0 %v135
  %526 = vmatpush1.msra.mxu0 %v134
  %527 = vmatprep.subr.mxu0 %v143
  %528 = vmatpush1.msra.mxu0 %v142
  %529 = vmatprep.subr.mxu0 %v151
  %530 = vmatpush1.msra.mxu0 %v150
  %531 = vmatprep.subr.mxu0 %v159
  %532 = vmatpush1.msra.mxu0 %v158
  %533 = vmatprep.subr.mxu0 %v167
  %534 = vmatpush1.msra.mxu0 %v166
  %535 = vmatprep.subr.mxu0 %v175
  %536 = vmatpush1.msra.mxu0 %v174
  %537 = vmatprep.subr.mxu0 %v183
  %538 = vmatpush1.msra.mxu0 %v182
  %539 = vmatprep.subr.mxu0 %v191
  %540 = vmatpush1.msra.mxu0 %v190
  %541 = vmatprep.subr.mxu0 %v199
  %542 = vmatpush1.msra.mxu0 %v198
  %543 = vmatprep.subr.mxu0 %v207
  %544 = vmatpush1.msra.mxu0 %v206
  %545 = vmatprep.subr.mxu0 %v215
  %546 = vmatpush1.msra.mxu0 %v214
  %547 = vmatprep.subr.mxu0 %v223
  %548 = vmatpush1.msra.mxu0 %v222
  %549 = vmatprep.subr.mxu0 %v231
  %550 = vmatpush1.msra.mxu0 %v230
  %551 = vmatprep.subr.mxu0 %v239
  %552 = vmatpush1.msra.mxu0 %v238
  %553 = vmatprep.subr.mxu0 %v247
  %554 = vmatpush1.msra.mxu0 %v246
  %555 = vmatprep.subr.mxu0 %v255
  %556 = vmatpush1.msra.mxu0 %v254
  %557 = vmatprep.subr.mxu0 %v263
  %558 = vmatpush1.msra.mxu0 %v262
  %559 = vmatprep.subr.mxu0 %v271
  %560 = vmatpush1.msra.mxu0 %v270
  %561 = vmatprep.subr.mxu0 %v279
  %562 = vmatpush1.msra.mxu0 %v278
  %563 = vmatprep.subr.mxu0 %v287
  %564 = vmatpush1.msra.mxu0 %v286
  %565 = vmatprep.mubr.f32.mxu0 0.0
  %566 = vmatmul.mubr.f32.gmra.mrb[0].mxu0 0.0
  %v567 = vpop.f32.mrb[0].mxu0
  %v568 = vadd.f32 0.0, %v567
  %v569 = vpop.f32.mrb[0].mxu0
  %v570 = vadd.f32 0.0, %v569
  %571 = vdwg.mxu0
  %v572 = vadd.f32 %v24, %v355
  %v573 = vadd.f32 %v25, %v357
  %v574 = vadd.f32 %v26, %v426
  %v575 = vadd.f32 %v27, %v428
  %v576 = vadd.f32 %v28, %v497
  %v577 = vadd.f32 %v29, %v499
  %v578 = vadd.f32 %v30, %v568
  %v579 = vadd.f32 %v31, %v570
  %v580 = vxor.u32 %v572, 2147483648
  %v581 = vxor.u32 %v573, 2147483648
  %v582 = vxor.u32 %v574, 2147483648
  %v583 = vxor.u32 %v575, 2147483648
  %v584 = vxor.u32 %v576, 2147483648
  %v585 = vxor.u32 %v577, 2147483648
  %v586 = vmul.f32 %v580, 1.442695
  %v587 = vpow.pop %v586
  %v588 = vmul.f32 %v581, 1.442695
  %v589 = vpow.pop %v588
  %v590 = vmul.f32 %v582, 1.442695
  %v591 = vpow.pop %v590
  %v592 = vmul.f32 %v583, 1.442695
  %v593 = vpow.pop %v592
  %v594 = vmul.f32 %v584, 1.442695
  %v595 = vpow.pop %v594
  %v596 = vmul.f32 %v585, 1.442695
  %v597 = vpow.pop %v596
  %v598 = vadd.f32 %v587, 1.0
  %v599 = vadd.f32 %v589, 1.0
  %v600 = vadd.f32 %v591, 1.0
  %v601 = vadd.f32 %v593, 1.0
  %v602 = vadd.f32 %v595, 1.0
  %v603 = vadd.f32 %v597, 1.0
  %v604 = vrcp.pop %v598
  %v605 = vmul.f32 1.0, %v604
  %v606 = vrcp.pop %v599
  %v607 = vmul.f32 1.0, %v606
  %v608 = vrcp.pop %v600
  %v609 = vmul.f32 1.0, %v608
  %v610 = vrcp.pop %v601
  %v611 = vmul.f32 1.0, %v610
  %v612 = vrcp.pop %v602
  %v613 = vmul.f32 1.0, %v612
  %v614 = vrcp.pop %v603
  %v615 = vmul.f32 1.0, %v614
  %v616 = vtanh.pop %v578
  %v617 = vtanh.pop %v579
  %v618 = vmul.f32 %v609, 0.0
  %v619 = vmul.f32 %v611, 0.0
  %v620 = vmul.f32 %v605, %v616
  %v621 = vmul.f32 %v607, %v617
  %v622 = vadd.f32 %v618, %v620
  %v623 = vadd.f32 %v619, %v621
  %v624 = vtanh.pop %v622
  %v625 = vtanh.pop %v623
  %v626 = vmul.f32 %v613, %v624
  %v627 = vmul.f32 %v615, %v625
  %vm628 = vcmp.lt.s32.totalorder %v22, 128
  %vm629 = vcmp.lt.s32.totalorder %v23, 128
  %v630 = vsel %vm628, 0, 7
  %v631 = vsel %vm629, 0, 7
  %632 = vset.pattern.permute.xlu0 0
  %633 = vperm.xlu0 %632, %v20
  %v634 = vpop.permute.xlu0 %633
  %vm635 = vcmp.lt.s32.totalorder %v630, %v634
  %vm636 = vcmp.lt.s32.totalorder %v631, %v634
  %v637 = vsel %vm635, %v626, 0.0
  %v638 = vsel %vm636, %v627, 0.0
  %v639 = vsel %vm635, %v622, 0.0
  %v640 = vsel %vm636, %v623, 0.0
  %s641 = scalar_lea.vmem %s0, 64
  %v642 = vld [vmem:[%s641] sm:$0xff]
  %v643 = vld [vmem:[%s641 + $0x8] sm:$0xff]
  %v644 = vld [vmem:[%s641 + $0x10] sm:$0xff]
  %v645 = vld [vmem:[%s641 + $0x18] sm:$0xff]
  %v646 = vld [vmem:[%s641 + $0x20] sm:$0xff]
  %v647 = vld [vmem:[%s641 + $0x28] sm:$0xff]
  %v648 = vld [vmem:[%s641 + $0x30] sm:$0xff]
  %v649 = vld [vmem:[%s641 + $0x38] sm:$0xff]
  %650 = vmatprep.subr.mxu0 %v33
  %651 = vmatpush1.msra.mxu0 %v32
  %652 = vmatprep.subr.mxu0 %v41
  %653 = vmatpush1.msra.mxu0 %v40
  %654 = vmatprep.subr.mxu0 %v49
  %655 = vmatpush1.msra.mxu0 %v48
  %656 = vmatprep.subr.mxu0 %v57
  %657 = vmatpush1.msra.mxu0 %v56
  %658 = vmatprep.subr.mxu0 %v65
  %659 = vmatpush1.msra.mxu0 %v64
  %660 = vmatprep.subr.mxu0 %v73
  %661 = vmatpush1.msra.mxu0 %v72
  %662 = vmatprep.subr.mxu0 %v81
  %663 = vmatpush1.msra.mxu0 %v80
  %664 = vmatprep.subr.mxu0 %v89
  %665 = vmatpush1.msra.mxu0 %v88
  %666 = vmatprep.subr.mxu0 %v97
  %667 = vmatpush1.msra.mxu0 %v96
  %668 = vmatprep.subr.mxu0 %v105
  %669 = vmatpush1.msra.mxu0 %v104
  %670 = vmatprep.subr.mxu0 %v113
  %671 = vmatpush1.msra.mxu0 %v112
  %672 = vmatprep.subr.mxu0 %v121
  %673 = vmatpush1.msra.mxu0 %v120
  %674 = vmatprep.subr.mxu0 %v129
  %675 = vmatpush1.msra.mxu0 %v128
  %676 = vmatprep.subr.mxu0 %v137
  %677 = vmatpush1.msra.mxu0 %v136
  %678 = vmatprep.subr.mxu0 %v145
  %679 = vmatpush1.msra.mxu0 %v144
  %680 = vmatprep.subr.mxu0 %v153
  %681 = vmatpush1.msra.mxu0 %v152
  %682 = vmatprep.subr.mxu0 %v161
  %683 = vmatpush1.msra.mxu0 %v160
  %684 = vmatprep.subr.mxu0 %v169
  %685 = vmatpush1.msra.mxu0 %v168
  %686 = vmatprep.subr.mxu0 %v177
  %687 = vmatpush1.msra.mxu0 %v176
  %688 = vmatprep.subr.mxu0 %v185
  %689 = vmatpush1.msra.mxu0 %v184
  %690 = vmatprep.subr.mxu0 %v193
  %691 = vmatpush1.msra.mxu0 %v192
  %692 = vmatprep.subr.mxu0 %v201
  %693 = vmatpush1.msra.mxu0 %v200
  %694 = vmatprep.subr.mxu0 %v209
  %695 = vmatpush1.msra.mxu0 %v208
  %696 = vmatprep.subr.mxu0 %v217
  %697 = vmatpush1.msra.mxu0 %v216
  %698 = vmatprep.subr.mxu0 %v225
  %699 = vmatpush1.msra.mxu0 %v224
  %700 = vmatprep.subr.mxu0 %v233
  %701 = vmatpush1.msra.mxu0 %v232
  %702 = vmatprep.subr.mxu0 %v241
  %703 = vmatpush1.msra.mxu0 %v240
  %704 = vmatprep.subr.mxu0 %v249
  %705 = vmatpush1.msra.mxu0 %v248
  %706 = vmatprep.subr.mxu0 %v257
  %707 = vmatpush1.msra.mxu0 %v256
  %708 = vmatprep.subr.mxu0 %v265
  %709 = vmatpush1.msra.mxu0 %v264
  %710 = vmatprep.subr.mxu0 %v273
  %711 = vmatpush1.msra.mxu0 %v272
  %712 = vmatprep.subr.mxu0 %v281
  %713 = vmatpush1.msra.mxu0 %v280
  %714 = vmatprep.mubr.f32.mxu0 %v638
  %715 = vmatmul.mubr.f32.gmra.mrb[0].mxu0 %v637
  %v716 = vpop.f32.mrb[0].mxu0
  %v717 = vadd.f32 0.0, %v716
  %v718 = vpop.f32.mrb[0].mxu0
  %v719 = vadd.f32 0.0, %v718
  %720 = vdwg.mxu0
  %721 = vmatprep.subr.mxu0 %v35
  %722 = vmatpush1.msra.mxu0 %v34
  %723 = vmatprep.subr.mxu0 %v43
  %724 = vmatpush1.msra.mxu0 %v42
  %725 = vmatprep.subr.mxu0 %v51
  %726 = vmatpush1.msra.mxu0 %v50
  %727 = vmatprep.subr.mxu0 %v59
  %728 = vmatpush1.msra.mxu0 %v58
  %729 = vmatprep.subr.mxu0 %v67
  %730 = vmatpush1.msra.mxu0 %v66
  %731 = vmatprep.subr.mxu0 %v75
  %732 = vmatpush1.msra.mxu0 %v74
  %733 = vmatprep.subr.mxu0 %v83
  %734 = vmatpush1.msra.mxu0 %v82
  %735 = vmatprep.subr.mxu0 %v91
  %736 = vmatpush1.msra.mxu0 %v90
  %737 = vmatprep.subr.mxu0 %v99
  %738 = vmatpush1.msra.mxu0 %v98
  %739 = vmatprep.subr.mxu0 %v107
  %740 = vmatpush1.msra.mxu0 %v106
  %741 = vmatprep.subr.mxu0 %v115
  %742 = vmatpush1.msra.mxu0 %v114
  %743 = vmatprep.subr.mxu0 %v123
  %744 = vmatpush1.msra.mxu0 %v122
  %745 = vmatprep.subr.mxu0 %v131
  %746 = vmatpush1.msra.mxu0 %v130
  %747 = vmatprep.subr.mxu0 %v139
  %748 = vmatpush1.msra.mxu0 %v138
  %749 = vmatprep.subr.mxu0 %v147
  %750 = vmatpush1.msra.mxu0 %v146
  %751 = vmatprep.subr.mxu0 %v155
  %752 = vmatpush1.msra.mxu0 %v154
  %753 = vmatprep.subr.mxu0 %v163
  %754 = vmatpush1.msra.mxu0 %v162
  %755 = vmatprep.subr.mxu0 %v171
  %756 = vmatpush1.msra.mxu0 %v170
  %757 = vmatprep.subr.mxu0 %v179
  %758 = vmatpush1.msra.mxu0 %v178
  %759 = vmatprep.subr.mxu0 %v187
  %760 = vmatpush1.msra.mxu0 %v186
  %761 = vmatprep.subr.mxu0 %v195
  %762 = vmatpush1.msra.mxu0 %v194
  %763 = vmatprep.subr.mxu0 %v203
  %764 = vmatpush1.msra.mxu0 %v202
  %765 = vmatprep.subr.mxu0 %v211
  %766 = vmatpush1.msra.mxu0 %v210
  %767 = vmatprep.subr.mxu0 %v219
  %768 = vmatpush1.msra.mxu0 %v218
  %769 = vmatprep.subr.mxu0 %v227
  %770 = vmatpush1.msra.mxu0 %v226
  %771 = vmatprep.subr.mxu0 %v235
  %772 = vmatpush1.msra.mxu0 %v234
  %773 = vmatprep.subr.mxu0 %v243
  %774 = vmatpush1.msra.mxu0 %v242
  %775 = vmatprep.subr.mxu0 %v251
  %776 = vmatpush1.msra.mxu0 %v250
  %777 = vmatprep.subr.mxu0 %v259
  %778 = vmatpush1.msra.mxu0 %v258
  %779 = vmatprep.subr.mxu0 %v267
  %780 = vmatpush1.msra.mxu0 %v266
  %781 = vmatprep.subr.mxu0 %v275
  %782 = vmatpush1.msra.mxu0 %v274
  %783 = vmatprep.subr.mxu0 %v283
  %784 = vmatpush1.msra.mxu0 %v282
  %785 = vmatprep.mubr.f32.mxu0 %v638
  %786 = vmatmul.mubr.f32.gmra.mrb[0].mxu0 %v637
  %v787 = vpop.f32.mrb[0].mxu0
  %v788 = vadd.f32 0.0, %v787
  %v789 = vpop.f32.mrb[0].mxu0
  %v790 = vadd.f32 0.0, %v789
  %791 = vdwg.mxu0
  %792 = vmatprep.subr.mxu0 %v37
  %793 = vmatpush1.msra.mxu0 %v36
  %794 = vmatprep.subr.mxu0 %v45
  %795 = vmatpush1.msra.mxu0 %v44
  %796 = vmatprep.subr.mxu0 %v53
  %797 = vmatpush1.msra.mxu0 %v52
  %798 = vmatprep.subr.mxu0 %v61
  %799 = vmatpush1.msra.mxu0 %v60
  %800 = vmatprep.subr.mxu0 %v69
  %801 = vmatpush1.msra.mxu0 %v68
  %802 = vmatprep.subr.mxu0 %v77
  %803 = vmatpush1.msra.mxu0 %v76
  %804 = vmatprep.subr.mxu0 %v85
  %805 = vmatpush1.msra.mxu0 %v84
  %806 = vmatprep.subr.mxu0 %v93
  %807 = vmatpush1.msra.mxu0 %v92
  %808 = vmatprep.subr.mxu0 %v101
  %809 = vmatpush1.msra.mxu0 %v100
  %810 = vmatprep.subr.mxu0 %v109
  %811 = vmatpush1.msra.mxu0 %v108
  %812 = vmatprep.subr.mxu0 %v117
  %813 = vmatpush1.msra.mxu0 %v116
  %814 = vmatprep.subr.mxu0 %v125
  %815 = vmatpush1.msra.mxu0 %v124
  %816 = vmatprep.subr.mxu0 %v133
  %817 = vmatpush1.msra.mxu0 %v132
  %818 = vmatprep.subr.mxu0 %v141
  %819 = vmatpush1.msra.mxu0 %v140
  %820 = vmatprep.subr.mxu0 %v149
  %821 = vmatpush1.msra.mxu0 %v148
  %822 = vmatprep.subr.mxu0 %v157
  %823 = vmatpush1.msra.mxu0 %v156
  %824 = vmatprep.subr.mxu0 %v165
  %825 = vmatpush1.msra.mxu0 %v164
  %826 = vmatprep.subr.mxu0 %v173
  %827 = vmatpush1.msra.mxu0 %v172
  %828 = vmatprep.subr.mxu0 %v181
  %829 = vmatpush1.msra.mxu0 %v180
  %830 = vmatprep.subr.mxu0 %v189
  %831 = vmatpush1.msra.mxu0 %v188
  %832 = vmatprep.subr.mxu0 %v197
  %833 = vmatpush1.msra.mxu0 %v196
  %834 = vmatprep.subr.mxu0 %v205
  %835 = vmatpush1.msra.mxu0 %v204
  %836 = vmatprep.subr.mxu0 %v213
  %837 = vmatpush1.msra.mxu0 %v212
  %838 = vmatprep.subr.mxu0 %v221
  %839 = vmatpush1.msra.mxu0 %v220
  %840 = vmatprep.subr.mxu0 %v229
  %841 = vmatpush1.msra.mxu0 %v228
  %842 = vmatprep.subr.mxu0 %v237
  %843 = vmatpush1.msra.mxu0 %v236
  %844 = vmatprep.subr.mxu0 %v245
  %845 = vmatpush1.msra.mxu0 %v244
  %846 = vmatprep.subr.mxu0 %v253
  %847 = vmatpush1.msra.mxu0 %v252
  %848 = vmatprep.subr.mxu0 %v261
  %849 = vmatpush1.msra.mxu0 %v260
  %850 = vmatprep.subr.mxu0 %v269
  %851 = vmatpush1.msra.mxu0 %v268
  %852 = vmatprep.subr.mxu0 %v277
  %853 = vmatpush1.msra.mxu0 %v276
  %854 = vmatprep.subr.mxu0 %v285
  %855 = vmatpush1.msra.mxu0 %v284
  %856 = vmatprep.mubr.f32.mxu0 %v638
  %857 = vmatmul.mubr.f32.gmra.mrb[0].mxu0 %v637
  %v858 = vpop.f32.mrb[0].mxu0
  %v859 = vadd.f32 0.0, %v858
  %v860 = vpop.f32.mrb[0].mxu0
  %v861 = vadd.f32 0.0, %v860
  %862 = vdwg.mxu0
  %863 = vmatprep.subr.mxu0 %v39
  %864 = vmatpush1.msra.mxu0 %v38
  %865 = vmatprep.subr.mxu0 %v47
  %866 = vmatpush1.msra.mxu0 %v46
  %867 = vmatprep.subr.mxu0 %v55
  %868 = vmatpush1.msra.mxu0 %v54
  %869 = vmatprep.subr.mxu0 %v63
  %870 = vmatpush1.msra.mxu0 %v62
  %871 = vmatprep.subr.mxu0 %v71
  %872 = vmatpush1.msra.mxu0 %v70
  %873 = vmatprep.subr.mxu0 %v79
  %874 = vmatpush1.msra.mxu0 %v78
  %875 = vmatprep.subr.mxu0 %v87
  %876 = vmatpush1.msra.mxu0 %v86
  %877 = vmatprep.subr.mxu0 %v95
  %878 = vmatpush1.msra.mxu0 %v94
  %879 = vmatprep.subr.mxu0 %v103
  %880 = vmatpush1.msra.mxu0 %v102
  %881 = vmatprep.subr.mxu0 %v111
  %882 = vmatpush1.msra.mxu0 %v110
  %883 = vmatprep.subr.mxu0 %v119
  %884 = vmatpush1.msra.mxu0 %v118
  %885 = vmatprep.subr.mxu0 %v127
  %886 = vmatpush1.msra.mxu0 %v126
  %887 = vmatprep.subr.mxu0 %v135
  %888 = vmatpush1.msra.mxu0 %v134
  %889 = vmatprep.subr.mxu0 %v143
  %890 = vmatpush1.msra.mxu0 %v142
  %891 = vmatprep.subr.mxu0 %v151
  %892 = vmatpush1.msra.mxu0 %v150
  %893 = vmatprep.subr.mxu0 %v159
  %894 = vmatpush1.msra.mxu0 %v158
  %895 = vmatprep.subr.mxu0 %v167
  %896 = vmatpush1.msra.mxu0 %v166
  %897 = vmatprep.subr.mxu0 %v175
  %898 = vmatpush1.msra.mxu0 %v174
  %899 = vmatprep.subr.mxu0 %v183
  %900 = vmatpush1.msra.mxu0 %v182
  %901 = vmatprep.subr.mxu0 %v191
  %902 = vmatpush1.msra.mxu0 %v190
  %903 = vmatprep.subr.mxu0 %v199
  %904 = vmatpush1.msra.mxu0 %v198
  %905 = vmatprep.subr.mxu0 %v207
  %906 = vmatpush1.msra.mxu0 %v206
  %907 = vmatprep.subr.mxu0 %v215
  %908 = vmatpush1.msra.mxu0 %v214
  %909 = vmatprep.subr.mxu0 %v223
  %910 = vmatpush1.msra.mxu0 %v222
  %911 = vmatprep.subr.mxu0 %v231
  %912 = vmatpush1.msra.mxu0 %v230
  %913 = vmatprep.subr.mxu0 %v239
  %914 = vmatpush1.msra.mxu0 %v238
  %915 = vmatprep.subr.mxu0 %v247
  %916 = vmatpush1.msra.mxu0 %v246
  %917 = vmatprep.subr.mxu0 %v255
  %918 = vmatpush1.msra.mxu0 %v254
  %919 = vmatprep.subr.mxu0 %v263
  %920 = vmatpush1.msra.mxu0 %v262
  %921 = vmatprep.subr.mxu0 %v271
  %922 = vmatpush1.msra.mxu0 %v270
  %923 = vmatprep.subr.mxu0 %v279
  %924 = vmatpush1.msra.mxu0 %v278
  %925 = vmatprep.subr.mxu0 %v287
  %926 = vmatpush1.msra.mxu0 %v286
  %927 = vmatprep.mubr.f32.mxu0 %v638
  %928 = vmatmul.mubr.f32.gmra.mrb[0].mxu0 %v637
  %v929 = vpop.f32.mrb[0].mxu0
  %v930 = vadd.f32 0.0, %v929
  %v931 = vpop.f32.mrb[0].mxu0
  %v932 = vadd.f32 0.0, %v931
  %933 = vdwg.mxu0
  %v934 = vadd.f32 %v642, %v717
  %v935 = vadd.f32 %v643, %v719
  %v936 = vadd.f32 %v644, %v788
  %v937 = vadd.f32 %v645, %v790
  %v938 = vadd.f32 %v646, %v859
  %v939 = vadd.f32 %v647, %v861
  %v940 = vadd.f32 %v648, %v930
  %v941 = vadd.f32 %v649, %v932
  %v942 = vxor.u32 %v934, 2147483648
  %v943 = vxor.u32 %v935, 2147483648
  %v944 = vxor.u32 %v936, 2147483648
  %v945 = vxor.u32 %v937, 2147483648
  %v946 = vxor.u32 %v938, 2147483648
  %v947 = vxor.u32 %v939, 2147483648
  %v948 = vmul.f32 %v942, 1.442695
  %v949 = vpow.pop %v948
  %v950 = vmul.f32 %v943, 1.442695
  %v951 = vpow.pop %v950
  %v952 = vmul.f32 %v944, 1.442695
  %v953 = vpow.pop %v952
  %v954 = vmul.f32 %v945, 1.442695
  %v955 = vpow.pop %v954
  %v956 = vmul.f32 %v946, 1.442695
  %v957 = vpow.pop %v956
  %v958 = vmul.f32 %v947, 1.442695
  %v959 = vpow.pop %v958
  %v960 = vadd.f32 %v949, 1.0
  %v961 = vadd.f32 %v951, 1.0
  %v962 = vadd.f32 %v953, 1.0
  %v963 = vadd.f32 %v955, 1.0
  %v964 = vadd.f32 %v957, 1.0
  %v965 = vadd.f32 %v959, 1.0
  %v966 = vrcp.pop %v960
  %v967 = vmul.f32 1.0, %v966
  %v968 = vrcp.pop %v961
  %v969 = vmul.f32 1.0, %v968
  %v970 = vrcp.pop %v962
  %v971 = vmul.f32 1.0, %v970
  %v972 = vrcp.pop %v963
  %v973 = vmul.f32 1.0, %v972
  %v974 = vrcp.pop %v964
  %v975 = vmul.f32 1.0, %v974
  %v976 = vrcp.pop %v965
  %v977 = vmul.f32 1.0, %v976
  %v978 = vtanh.pop %v940
  %v979 = vtanh.pop %v941
  %v980 = vmul.f32 %v971, %v639
  %v981 = vmul.f32 %v973, %v640
  %v982 = vmul.f32 %v967, %v978
  %v983 = vmul.f32 %v969, %v979
  %v984 = vadd.f32 %v980, %v982
  %v985 = vadd.f32 %v981, %v983
  %v986 = vtanh.pop %v984
  %v987 = vtanh.pop %v985
  %v988 = vmul.f32 %v975, %v986
  %v989 = vmul.f32 %v977, %v987
  %v990 = vsel %vm628, 1, 6
  %v991 = vsel %vm629, 1, 6
  %vm992 = vcmp.lt.s32.totalorder %v990, %v634
  %vm993 = vcmp.lt.s32.totalorder %v991, %v634
  %v994 = vsel %vm992, %v988, %v637
  %v995 = vsel %vm993, %v989, %v638
  %v996 = vsel %vm992, %v984, %v639
  %v997 = vsel %vm993, %v985, %v640
  %s998 = scalar_lea.vmem %s0, 128
  %v999 = vld [vmem:[%s998] sm:$0xff]
  %v1000 = vld [vmem:[%s998 + $0x8] sm:$0xff]
  %v1001 = vld [vmem:[%s998 + $0x10] sm:$0xff]
  %v1002 = vld [vmem:[%s998 + $0x18] sm:$0xff]
  %v1003 = vld [vmem:[%s998 + $0x20] sm:$0xff]
  %v1004 = vld [vmem:[%s998 + $0x28] sm:$0xff]
  %v1005 = vld [vmem:[%s998 + $0x30] sm:$0xff]
  %v1006 = vld [vmem:[%s998 + $0x38] sm:$0xff]
  %1007 = vmatprep.subr.mxu0 %v33
  %1008 = vmatpush1.msra.mxu0 %v32
  %1009 = vmatprep.subr.mxu0 %v41
  %1010 = vmatpush1.msra.mxu0 %v40
  %1011 = vmatprep.subr.mxu0 %v49
  %1012 = vmatpush1.msra.mxu0 %v48
  %1013 = vmatprep.subr.mxu0 %v57
  %1014 = vmatpush1.msra.mxu0 %v56
  %1015 = vmatprep.subr.mxu0 %v65
  %1016 = vmatpush1.msra.mxu0 %v64
  %1017 = vmatprep.subr.mxu0 %v73
  %1018 = vmatpush1.msra.mxu0 %v72
  %1019 = vmatprep.subr.mxu0 %v81
  %1020 = vmatpush1.msra.mxu0 %v80
  %1021 = vmatprep.subr.mxu0 %v89
  %1022 = vmatpush1.msra.mxu0 %v88
  %1023 = vmatprep.subr.mxu0 %v97
  %1024 = vmatpush1.msra.mxu0 %v96
  %1025 = vmatprep.subr.mxu0 %v105
  %1026 = vmatpush1.msra.mxu0 %v104
  %1027 = vmatprep.subr.mxu0 %v113
  %1028 = vmatpush1.msra.mxu0 %v112
  %1029 = vmatprep.subr.mxu0 %v121
  %1030 = vmatpush1.msra.mxu0 %v120
  %1031 = vmatprep.subr.mxu0 %v129
  %1032 = vmatpush1.msra.mxu0 %v128
  %1033 = vmatprep.subr.mxu0 %v137
  %1034 = vmatpush1.msra.mxu0 %v136
  %1035 = vmatprep.subr.mxu0 %v145
  %1036 = vmatpush1.msra.mxu0 %v144
  %1037 = vmatprep.subr.mxu0 %v153
  %1038 = vmatpush1.msra.mxu0 %v152
  %1039 = vmatprep.subr.mxu0 %v161
  %1040 = vmatpush1.msra.mxu0 %v160
  %1041 = vmatprep.subr.mxu0 %v169
  %1042 = vmatpush1.msra.mxu0 %v168
  %1043 = vmatprep.subr.mxu0 %v177
  %1044 = vmatpush1.msra.mxu0 %v176
  %1045 = vmatprep.subr.mxu0 %v185
  %1046 = vmatpush1.msra.mxu0 %v184
  %1047 = vmatprep.subr.mxu0 %v193
  %1048 = vmatpush1.msra.mxu0 %v192
  %1049 = vmatprep.subr.mxu0 %v201
  %1050 = vmatpush1.msra.mxu0 %v200
  %1051 = vmatprep.subr.mxu0 %v209
  %1052 = vmatpush1.msra.mxu0 %v208
  %1053 = vmatprep.subr.mxu0 %v217
  %1054 = vmatpush1.msra.mxu0 %v216
  %1055 = vmatprep.subr.mxu0 %v225
  %1056 = vmatpush1.msra.mxu0 %v224
  %1057 = vmatprep.subr.mxu0 %v233
  %1058 = vmatpush1.msra.mxu0 %v232
  %1059 = vmatprep.subr.mxu0 %v241
  %1060 = vmatpush1.msra.mxu0 %v240
  %1061 = vmatprep.subr.mxu0 %v249
  %1062 = vmatpush1.msra.mxu0 %v248
  %1063 = vmatprep.subr.mxu0 %v257
  %1064 = vmatpush1.msra.mxu0 %v256
  %1065 = vmatprep.subr.mxu0 %v265
  %1066 = vmatpush1.msra.mxu0 %v264
  %1067 = vmatprep.subr.mxu0 %v273
  %1068 = vmatpush1.msra.mxu0 %v272
  %1069 = vmatprep.subr.mxu0 %v281
  %1070 = vmatpush1.msra.mxu0 %v280
  %1071 = vmatprep.mubr.f32.mxu0 %v995
  %1072 = vmatmul.mubr.f32.gmra.mrb[0].mxu0 %v994
  %v1073 = vpop.f32.mrb[0].mxu0
  %v1074 = vadd.f32 0.0, %v1073
  %v1075 = vpop.f32.mrb[0].mxu0
  %v1076 = vadd.f32 0.0, %v1075
  %1077 = vdwg.mxu0
  %1078 = vmatprep.subr.mxu0 %v35
  %1079 = vmatpush1.msra.mxu0 %v34
  %1080 = vmatprep.subr.mxu0 %v43
  %1081 = vmatpush1.msra.mxu0 %v42
  %1082 = vmatprep.subr.mxu0 %v51
  %1083 = vmatpush1.msra.mxu0 %v50
  %1084 = vmatprep.subr.mxu0 %v59
  %1085 = vmatpush1.msra.mxu0 %v58
  %1086 = vmatprep.subr.mxu0 %v67
  %1087 = vmatpush1.msra.mxu0 %v66
  %1088 = vmatprep.subr.mxu0 %v75
  %1089 = vmatpush1.msra.mxu0 %v74
  %1090 = vmatprep.subr.mxu0 %v83
  %1091 = vmatpush1.msra.mxu0 %v82
  %1092 = vmatprep.subr.mxu0 %v91
  %1093 = vmatpush1.msra.mxu0 %v90
  %1094 = vmatprep.subr.mxu0 %v99
  %1095 = vmatpush1.msra.mxu0 %v98
  %1096 = vmatprep.subr.mxu0 %v107
  %1097 = vmatpush1.msra.mxu0 %v106
  %1098 = vmatprep.subr.mxu0 %v115
  %1099 = vmatpush1.msra.mxu0 %v114
  %1100 = vmatprep.subr.mxu0 %v123
  %1101 = vmatpush1.msra.mxu0 %v122
  %1102 = vmatprep.subr.mxu0 %v131
  %1103 = vmatpush1.msra.mxu0 %v130
  %1104 = vmatprep.subr.mxu0 %v139
  %1105 = vmatpush1.msra.mxu0 %v138
  %1106 = vmatprep.subr.mxu0 %v147
  %1107 = vmatpush1.msra.mxu0 %v146
  %1108 = vmatprep.subr.mxu0 %v155
  %1109 = vmatpush1.msra.mxu0 %v154
  %1110 = vmatprep.subr.mxu0 %v163
  %1111 = vmatpush1.msra.mxu0 %v162
  %1112 = vmatprep.subr.mxu0 %v171
  %1113 = vmatpush1.msra.mxu0 %v170
  %1114 = vmatprep.subr.mxu0 %v179
  %1115 = vmatpush1.msra.mxu0 %v178
  %1116 = vmatprep.subr.mxu0 %v187
  %1117 = vmatpush1.msra.mxu0 %v186
  %1118 = vmatprep.subr.mxu0 %v195
  %1119 = vmatpush1.msra.mxu0 %v194
  %1120 = vmatprep.subr.mxu0 %v203
  %1121 = vmatpush1.msra.mxu0 %v202
  %1122 = vmatprep.subr.mxu0 %v211
  %1123 = vmatpush1.msra.mxu0 %v210
  %1124 = vmatprep.subr.mxu0 %v219
  %1125 = vmatpush1.msra.mxu0 %v218
  %1126 = vmatprep.subr.mxu0 %v227
  %1127 = vmatpush1.msra.mxu0 %v226
  %1128 = vmatprep.subr.mxu0 %v235
  %1129 = vmatpush1.msra.mxu0 %v234
  %1130 = vmatprep.subr.mxu0 %v243
  %1131 = vmatpush1.msra.mxu0 %v242
  %1132 = vmatprep.subr.mxu0 %v251
  %1133 = vmatpush1.msra.mxu0 %v250
  %1134 = vmatprep.subr.mxu0 %v259
  %1135 = vmatpush1.msra.mxu0 %v258
  %1136 = vmatprep.subr.mxu0 %v267
  %1137 = vmatpush1.msra.mxu0 %v266
  %1138 = vmatprep.subr.mxu0 %v275
  %1139 = vmatpush1.msra.mxu0 %v274
  %1140 = vmatprep.subr.mxu0 %v283
  %1141 = vmatpush1.msra.mxu0 %v282
  %1142 = vmatprep.mubr.f32.mxu0 %v995
  %1143 = vmatmul.mubr.f32.gmra.mrb[0].mxu0 %v994
  %v1144 = vpop.f32.mrb[0].mxu0
  %v1145 = vadd.f32 0.0, %v1144
  %v1146 = vpop.f32.mrb[0].mxu0
  %v1147 = vadd.f32 0.0, %v1146
  %1148 = vdwg.mxu0
  %1149 = vmatprep.subr.mxu0 %v37
  %1150 = vmatpush1.msra.mxu0 %v36
  %1151 = vmatprep.subr.mxu0 %v45
  %1152 = vmatpush1.msra.mxu0 %v44
  %1153 = vmatprep.subr.mxu0 %v53
  %1154 = vmatpush1.msra.mxu0 %v52
  %1155 = vmatprep.subr.mxu0 %v61
  %1156 = vmatpush1.msra.mxu0 %v60
  %1157 = vmatprep.subr.mxu0 %v69
  %1158 = vmatpush1.msra.mxu0 %v68
  %1159 = vmatprep.subr.mxu0 %v77
  %1160 = vmatpush1.msra.mxu0 %v76
  %1161 = vmatprep.subr.mxu0 %v85
  %1162 = vmatpush1.msra.mxu0 %v84
  %1163 = vmatprep.subr.mxu0 %v93
  %1164 = vmatpush1.msra.mxu0 %v92
  %1165 = vmatprep.subr.mxu0 %v101
  %1166 = vmatpush1.msra.mxu0 %v100
  %1167 = vmatprep.subr.mxu0 %v109
  %1168 = vmatpush1.msra.mxu0 %v108
  %1169 = vmatprep.subr.mxu0 %v117
  %1170 = vmatpush1.msra.mxu0 %v116
  %1171 = vmatprep.subr.mxu0 %v125
  %1172 = vmatpush1.msra.mxu0 %v124
  %1173 = vmatprep.subr.mxu0 %v133
  %1174 = vmatpush1.msra.mxu0 %v132
  %1175 = vmatprep.subr.mxu0 %v141
  %1176 = vmatpush1.msra.mxu0 %v140
  %1177 = vmatprep.subr.mxu0 %v149
  %1178 = vmatpush1.msra.mxu0 %v148
  %1179 = vmatprep.subr.mxu0 %v157
  %1180 = vmatpush1.msra.mxu0 %v156
  %1181 = vmatprep.subr.mxu0 %v165
  %1182 = vmatpush1.msra.mxu0 %v164
  %1183 = vmatprep.subr.mxu0 %v173
  %1184 = vmatpush1.msra.mxu0 %v172
  %1185 = vmatprep.subr.mxu0 %v181
  %1186 = vmatpush1.msra.mxu0 %v180
  %1187 = vmatprep.subr.mxu0 %v189
  %1188 = vmatpush1.msra.mxu0 %v188
  %1189 = vmatprep.subr.mxu0 %v197
  %1190 = vmatpush1.msra.mxu0 %v196
  %1191 = vmatprep.subr.mxu0 %v205
  %1192 = vmatpush1.msra.mxu0 %v204
  %1193 = vmatprep.subr.mxu0 %v213
  %1194 = vmatpush1.msra.mxu0 %v212
  %1195 = vmatprep.subr.mxu0 %v221
  %1196 = vmatpush1.msra.mxu0 %v220
  %1197 = vmatprep.subr.mxu0 %v229
  %1198 = vmatpush1.msra.mxu0 %v228
  %1199 = vmatprep.subr.mxu0 %v237
  %1200 = vmatpush1.msra.mxu0 %v236
  %1201 = vmatprep.subr.mxu0 %v245
  %1202 = vmatpush1.msra.mxu0 %v244
  %1203 = vmatprep.subr.mxu0 %v253
  %1204 = vmatpush1.msra.mxu0 %v252
  %1205 = vmatprep.subr.mxu0 %v261
  %1206 = vmatpush1.msra.mxu0 %v260
  %1207 = vmatprep.subr.mxu0 %v269
  %1208 = vmatpush1.msra.mxu0 %v268
  %1209 = vmatprep.subr.mxu0 %v277
  %1210 = vmatpush1.msra.mxu0 %v276
  %1211 = vmatprep.subr.mxu0 %v285
  %1212 = vmatpush1.msra.mxu0 %v284
  %1213 = vmatprep.mubr.f32.mxu0 %v995
  %1214 = vmatmul.mubr.f32.gmra.mrb[0].mxu0 %v994
  %v1215 = vpop.f32.mrb[0].mxu0
  %v1216 = vadd.f32 0.0, %v1215
  %v1217 = vpop.f32.mrb[0].mxu0
  %v1218 = vadd.f32 0.0, %v1217
  %1219 = vdwg.mxu0
  %1220 = vmatprep.subr.mxu0 %v39
  %1221 = vmatpush1.msra.mxu0 %v38
  %1222 = vmatprep.subr.mxu0 %v47
  %1223 = vmatpush1.msra.mxu0 %v46
  %1224 = vmatprep.subr.mxu0 %v55
  %1225 = vmatpush1.msra.mxu0 %v54
  %1226 = vmatprep.subr.mxu0 %v63
  %1227 = vmatpush1.msra.mxu0 %v62
  %1228 = vmatprep.subr.mxu0 %v71
  %1229 = vmatpush1.msra.mxu0 %v70
  %1230 = vmatprep.subr.mxu0 %v79
  %1231 = vmatpush1.msra.mxu0 %v78
  %1232 = vmatprep.subr.mxu0 %v87
  %1233 = vmatpush1.msra.mxu0 %v86
  %1234 = vmatprep.subr.mxu0 %v95
  %1235 = vmatpush1.msra.mxu0 %v94
  %1236 = vmatprep.subr.mxu0 %v103
  %1237 = vmatpush1.msra.mxu0 %v102
  %1238 = vmatprep.subr.mxu0 %v111
  %1239 = vmatpush1.msra.mxu0 %v110
  %1240 = vmatprep.subr.mxu0 %v119
  %1241 = vmatpush1.msra.mxu0 %v118
  %1242 = vmatprep.subr.mxu0 %v127
  %1243 = vmatpush1.msra.mxu0 %v126
  %1244 = vmatprep.subr.mxu0 %v135
  %1245 = vmatpush1.msra.mxu0 %v134
  %1246 = vmatprep.subr.mxu0 %v143
  %1247 = vmatpush1.msra.mxu0 %v142
  %1248 = vmatprep.subr.mxu0 %v151
  %1249 = vmatpush1.msra.mxu0 %v150
  %1250 = vmatprep.subr.mxu0 %v159
  %1251 = vmatpush1.msra.mxu0 %v158
  %1252 = vmatprep.subr.mxu0 %v167
  %1253 = vmatpush1.msra.mxu0 %v166
  %1254 = vmatprep.subr.mxu0 %v175
  %1255 = vmatpush1.msra.mxu0 %v174
  %1256 = vmatprep.subr.mxu0 %v183
  %1257 = vmatpush1.msra.mxu0 %v182
  %1258 = vmatprep.subr.mxu0 %v191
  %1259 = vmatpush1.msra.mxu0 %v190
  %1260 = vmatprep.subr.mxu0 %v199
  %1261 = vmatpush1.msra.mxu0 %v198
  %1262 = vmatprep.subr.mxu0 %v207
  %1263 = vmatpush1.msra.mxu0 %v206
  %1264 = vmatprep.subr.mxu0 %v215
  %1265 = vmatpush1.msra.mxu0 %v214
  %1266 = vmatprep.subr.mxu0 %v223
  %1267 = vmatpush1.msra.mxu0 %v222
  %1268 = vmatprep.subr.mxu0 %v231
  %1269 = vmatpush1.msra.mxu0 %v230
  %1270 = vmatprep.subr.mxu0 %v239
  %1271 = vmatpush1.msra.mxu0 %v238
  %1272 = vmatprep.subr.mxu0 %v247
  %1273 = vmatpush1.msra.mxu0 %v246
  %1274 = vmatprep.subr.mxu0 %v255
  %1275 = vmatpush1.msra.mxu0 %v254
  %1276 = vmatprep.subr.mxu0 %v263
  %1277 = vmatpush1.msra.mxu0 %v262
  %1278 = vmatprep.subr.mxu0 %v271
  %1279 = vmatpush1.msra.mxu0 %v270
  %1280 = vmatprep.subr.mxu0 %v279
  %1281 = vmatpush1.msra.mxu0 %v278
  %1282 = vmatprep.subr.mxu0 %v287
  %1283 = vmatpush1.msra.mxu0 %v286
  %1284 = vmatprep.mubr.f32.mxu0 %v995
  %1285 = vmatmul.mubr.f32.gmra.mrb[0].mxu0 %v994
  %v1286 = vpop.f32.mrb[0].mxu0
  %v1287 = vadd.f32 0.0, %v1286
  %v1288 = vpop.f32.mrb[0].mxu0
  %v1289 = vadd.f32 0.0, %v1288
  %1290 = vdwg.mxu0
  %v1291 = vadd.f32 %v999, %v1074
  %v1292 = vadd.f32 %v1000, %v1076
  %v1293 = vadd.f32 %v1001, %v1145
  %v1294 = vadd.f32 %v1002, %v1147
  %v1295 = vadd.f32 %v1003, %v1216
  %v1296 = vadd.f32 %v1004, %v1218
  %v1297 = vadd.f32 %v1005, %v1287
  %v1298 = vadd.f32 %v1006, %v1289
  %v1299 = vxor.u32 %v1291, 2147483648
  %v1300 = vxor.u32 %v1292, 2147483648
  %v1301 = vxor.u32 %v1293, 2147483648
  %v1302 = vxor.u32 %v1294, 2147483648
  %v1303 = vxor.u32 %v1295, 2147483648
  %v1304 = vxor.u32 %v1296, 2147483648
  %v1305 = vmul.f32 %v1299, 1.442695
  %v1306 = vpow.pop %v1305
  %v1307 = vmul.f32 %v1300, 1.442695
  %v1308 = vpow.pop %v1307
  %v1309 = vmul.f32 %v1301, 1.442695
  %v1310 = vpow.pop %v1309
  %v1311 = vmul.f32 %v1302, 1.442695
  %v1312 = vpow.pop %v1311
  %v1313 = vmul.f32 %v1303, 1.442695
  %v1314 = vpow.pop %v1313
  %v1315 = vmul.f32 %v1304, 1.442695
  %v1316 = vpow.pop %v1315
  %v1317 = vadd.f32 %v1306, 1.0
  %v1318 = vadd.f32 %v1308, 1.0
  %v1319 = vadd.f32 %v1310, 1.0
  %v1320 = vadd.f32 %v1312, 1.0
  %v1321 = vadd.f32 %v1314, 1.0
  %v1322 = vadd.f32 %v1316, 1.0
  %v1323 = vrcp.pop %v1317
  %v1324 = vmul.f32 1.0, %v1323
  %v1325 = vrcp.pop %v1318
  %v1326 = vmul.f32 1.0, %v1325
  %v1327 = vrcp.pop %v1319
  %v1328 = vmul.f32 1.0, %v1327
  %v1329 = vrcp.pop %v1320
  %v1330 = vmul.f32 1.0, %v1329
  %v1331 = vrcp.pop %v1321
  %v1332 = vmul.f32 1.0, %v1331
  %v1333 = vrcp.pop %v1322
  %v1334 = vmul.f32 1.0, %v1333
  %v1335 = vtanh.pop %v1297
  %v1336 = vtanh.pop %v1298
  %v1337 = vmul.f32 %v1328, %v996
  %v1338 = vmul.f32 %v1330, %v997
  %v1339 = vmul.f32 %v1324, %v1335
  %v1340 = vmul.f32 %v1326, %v1336
  %v1341 = vadd.f32 %v1337, %v1339
  %v1342 = vadd.f32 %v1338, %v1340
  %v1343 = vtanh.pop %v1341
  %v1344 = vtanh.pop %v1342
  %v1345 = vmul.f32 %v1332, %v1343
  %v1346 = vmul.f32 %v1334, %v1344
  %v1347 = vsel %vm628, 2, 5
  %v1348 = vsel %vm629, 2, 5
  %vm1349 = vcmp.lt.s32.totalorder %v1347, %v634
  %vm1350 = vcmp.lt.s32.totalorder %v1348, %v634
  %v1351 = vsel %vm1349, %v1345, %v994
  %v1352 = vsel %vm1350, %v1346, %v995
  %v1353 = vsel %vm1349, %v1341, %v996
  %v1354 = vsel %vm1350, %v1342, %v997
  %s1355 = scalar_lea.vmem %s0, 192
  %v1356 = vld [vmem:[%s1355] sm:$0xff]
  %v1357 = vld [vmem:[%s1355 + $0x8] sm:$0xff]
  %v1358 = vld [vmem:[%s1355 + $0x10] sm:$0xff]
  %v1359 = vld [vmem:[%s1355 + $0x18] sm:$0xff]
  %v1360 = vld [vmem:[%s1355 + $0x20] sm:$0xff]
  %v1361 = vld [vmem:[%s1355 + $0x28] sm:$0xff]
  %v1362 = vld [vmem:[%s1355 + $0x30] sm:$0xff]
  %v1363 = vld [vmem:[%s1355 + $0x38] sm:$0xff]
  %1364 = vmatprep.subr.mxu0 %v33
  %1365 = vmatpush1.msra.mxu0 %v32
  %1366 = vmatprep.subr.mxu0 %v41
  %1367 = vmatpush1.msra.mxu0 %v40
  %1368 = vmatprep.subr.mxu0 %v49
  %1369 = vmatpush1.msra.mxu0 %v48
  %1370 = vmatprep.subr.mxu0 %v57
  %1371 = vmatpush1.msra.mxu0 %v56
  %1372 = vmatprep.subr.mxu0 %v65
  %1373 = vmatpush1.msra.mxu0 %v64
  %1374 = vmatprep.subr.mxu0 %v73
  %1375 = vmatpush1.msra.mxu0 %v72
  %1376 = vmatprep.subr.mxu0 %v81
  %1377 = vmatpush1.msra.mxu0 %v80
  %1378 = vmatprep.subr.mxu0 %v89
  %1379 = vmatpush1.msra.mxu0 %v88
  %1380 = vmatprep.subr.mxu0 %v97
  %1381 = vmatpush1.msra.mxu0 %v96
  %1382 = vmatprep.subr.mxu0 %v105
  %1383 = vmatpush1.msra.mxu0 %v104
  %1384 = vmatprep.subr.mxu0 %v113
  %1385 = vmatpush1.msra.mxu0 %v112
  %1386 = vmatprep.subr.mxu0 %v121
  %1387 = vmatpush1.msra.mxu0 %v120
  %1388 = vmatprep.subr.mxu0 %v129
  %1389 = vmatpush1.msra.mxu0 %v128
  %1390 = vmatprep.subr.mxu0 %v137
  %1391 = vmatpush1.msra.mxu0 %v136
  %1392 = vmatprep.subr.mxu0 %v145
  %1393 = vmatpush1.msra.mxu0 %v144
  %1394 = vmatprep.subr.mxu0 %v153
  %1395 = vmatpush1.msra.mxu0 %v152
  %1396 = vmatprep.subr.mxu0 %v161
  %1397 = vmatpush1.msra.mxu0 %v160
  %1398 = vmatprep.subr.mxu0 %v169
  %1399 = vmatpush1.msra.mxu0 %v168
  %1400 = vmatprep.subr.mxu0 %v177
  %1401 = vmatpush1.msra.mxu0 %v176
  %1402 = vmatprep.subr.mxu0 %v185
  %1403 = vmatpush1.msra.mxu0 %v184
  %1404 = vmatprep.subr.mxu0 %v193
  %1405 = vmatpush1.msra.mxu0 %v192
  %1406 = vmatprep.subr.mxu0 %v201
  %1407 = vmatpush1.msra.mxu0 %v200
  %1408 = vmatprep.subr.mxu0 %v209
  %1409 = vmatpush1.msra.mxu0 %v208
  %1410 = vmatprep.subr.mxu0 %v217
  %1411 = vmatpush1.msra.mxu0 %v216
  %1412 = vmatprep.subr.mxu0 %v225
  %1413 = vmatpush1.msra.mxu0 %v224
  %1414 = vmatprep.subr.mxu0 %v233
  %1415 = vmatpush1.msra.mxu0 %v232
  %1416 = vmatprep.subr.mxu0 %v241
  %1417 = vmatpush1.msra.mxu0 %v240
  %1418 = vmatprep.subr.mxu0 %v249
  %1419 = vmatpush1.msra.mxu0 %v248
  %1420 = vmatprep.subr.mxu0 %v257
  %1421 = vmatpush1.msra.mxu0 %v256
  %1422 = vmatprep.subr.mxu0 %v265
  %1423 = vmatpush1.msra.mxu0 %v264
  %1424 = vmatprep.subr.mxu0 %v273
  %1425 = vmatpush1.msra.mxu0 %v272
  %1426 = vmatprep.subr.mxu0 %v281
  %1427 = vmatpush1.msra.mxu0 %v280
  %1428 = vmatprep.mubr.f32.mxu0 %v1352
  %1429 = vmatmul.mubr.f32.gmra.mrb[0].mxu0 %v1351
  %v1430 = vpop.f32.mrb[0].mxu0
  %v1431 = vadd.f32 0.0, %v1430
  %v1432 = vpop.f32.mrb[0].mxu0
  %v1433 = vadd.f32 0.0, %v1432
  %1434 = vdwg.mxu0
  %1435 = vmatprep.subr.mxu0 %v35
  %1436 = vmatpush1.msra.mxu0 %v34
  %1437 = vmatprep.subr.mxu0 %v43
  %1438 = vmatpush1.msra.mxu0 %v42
  %1439 = vmatprep.subr.mxu0 %v51
  %1440 = vmatpush1.msra.mxu0 %v50
  %1441 = vmatprep.subr.mxu0 %v59
  %1442 = vmatpush1.msra.mxu0 %v58
  %1443 = vmatprep.subr.mxu0 %v67
  %1444 = vmatpush1.msra.mxu0 %v66
  %1445 = vmatprep.subr.mxu0 %v75
  %1446 = vmatpush1.msra.mxu0 %v74
  %1447 = vmatprep.subr.mxu0 %v83
  %1448 = vmatpush1.msra.mxu0 %v82
  %1449 = vmatprep.subr.mxu0 %v91
  %1450 = vmatpush1.msra.mxu0 %v90
  %1451 = vmatprep.subr.mxu0 %v99
  %1452 = vmatpush1.msra.mxu0 %v98
  %1453 = vmatprep.subr.mxu0 %v107
  %1454 = vmatpush1.msra.mxu0 %v106
  %1455 = vmatprep.subr.mxu0 %v115
  %1456 = vmatpush1.msra.mxu0 %v114
  %1457 = vmatprep.subr.mxu0 %v123
  %1458 = vmatpush1.msra.mxu0 %v122
  %1459 = vmatprep.subr.mxu0 %v131
  %1460 = vmatpush1.msra.mxu0 %v130
  %1461 = vmatprep.subr.mxu0 %v139
  %1462 = vmatpush1.msra.mxu0 %v138
  %1463 = vmatprep.subr.mxu0 %v147
  %1464 = vmatpush1.msra.mxu0 %v146
  %1465 = vmatprep.subr.mxu0 %v155
  %1466 = vmatpush1.msra.mxu0 %v154
  %1467 = vmatprep.subr.mxu0 %v163
  %1468 = vmatpush1.msra.mxu0 %v162
  %1469 = vmatprep.subr.mxu0 %v171
  %1470 = vmatpush1.msra.mxu0 %v170
  %1471 = vmatprep.subr.mxu0 %v179
  %1472 = vmatpush1.msra.mxu0 %v178
  %1473 = vmatprep.subr.mxu0 %v187
  %1474 = vmatpush1.msra.mxu0 %v186
  %1475 = vmatprep.subr.mxu0 %v195
  %1476 = vmatpush1.msra.mxu0 %v194
  %1477 = vmatprep.subr.mxu0 %v203
  %1478 = vmatpush1.msra.mxu0 %v202
  %1479 = vmatprep.subr.mxu0 %v211
  %1480 = vmatpush1.msra.mxu0 %v210
  %1481 = vmatprep.subr.mxu0 %v219
  %1482 = vmatpush1.msra.mxu0 %v218
  %1483 = vmatprep.subr.mxu0 %v227
  %1484 = vmatpush1.msra.mxu0 %v226
  %1485 = vmatprep.subr.mxu0 %v235
  %1486 = vmatpush1.msra.mxu0 %v234
  %1487 = vmatprep.subr.mxu0 %v243
  %1488 = vmatpush1.msra.mxu0 %v242
  %1489 = vmatprep.subr.mxu0 %v251
  %1490 = vmatpush1.msra.mxu0 %v250
  %1491 = vmatprep.subr.mxu0 %v259
  %1492 = vmatpush1.msra.mxu0 %v258
  %1493 = vmatprep.subr.mxu0 %v267
  %1494 = vmatpush1.msra.mxu0 %v266
  %1495 = vmatprep.subr.mxu0 %v275
  %1496 = vmatpush1.msra.mxu0 %v274
  %1497 = vmatprep.subr.mxu0 %v283
  %1498 = vmatpush1.msra.mxu0 %v282
  %1499 = vmatprep.mubr.f32.mxu0 %v1352
  %1500 = vmatmul.mubr.f32.gmra.mrb[0].mxu0 %v1351
  %v1501 = vpop.f32.mrb[0].mxu0
  %v1502 = vadd.f32 0.0, %v1501
  %v1503 = vpop.f32.mrb[0].mxu0
  %v1504 = vadd.f32 0.0, %v1503
  %1505 = vdwg.mxu0
  %1506 = vmatprep.subr.mxu0 %v37
  %1507 = vmatpush1.msra.mxu0 %v36
  %1508 = vmatprep.subr.mxu0 %v45
  %1509 = vmatpush1.msra.mxu0 %v44
  %1510 = vmatprep.subr.mxu0 %v53
  %1511 = vmatpush1.msra.mxu0 %v52
  %1512 = vmatprep.subr.mxu0 %v61
  %1513 = vmatpush1.msra.mxu0 %v60
  %1514 = vmatprep.subr.mxu0 %v69
  %1515 = vmatpush1.msra.mxu0 %v68
  %1516 = vmatprep.subr.mxu0 %v77
  %1517 = vmatpush1.msra.mxu0 %v76
  %1518 = vmatprep.subr.mxu0 %v85
  %1519 = vmatpush1.msra.mxu0 %v84
  %1520 = vmatprep.subr.mxu0 %v93
  %1521 = vmatpush1.msra.mxu0 %v92
  %1522 = vmatprep.subr.mxu0 %v101
  %1523 = vmatpush1.msra.mxu0 %v100
  %1524 = vmatprep.subr.mxu0 %v109
  %1525 = vmatpush1.msra.mxu0 %v108
  %1526 = vmatprep.subr.mxu0 %v117
  %1527 = vmatpush1.msra.mxu0 %v116
  %1528 = vmatprep.subr.mxu0 %v125
  %1529 = vmatpush1.msra.mxu0 %v124
  %1530 = vmatprep.subr.mxu0 %v133
  %1531 = vmatpush1.msra.mxu0 %v132
  %1532 = vmatprep.subr.mxu0 %v141
  %1533 = vmatpush1.msra.mxu0 %v140
  %1534 = vmatprep.subr.mxu0 %v149
  %1535 = vmatpush1.msra.mxu0 %v148
  %1536 = vmatprep.subr.mxu0 %v157
  %1537 = vmatpush1.msra.mxu0 %v156
  %1538 = vmatprep.subr.mxu0 %v165
  %1539 = vmatpush1.msra.mxu0 %v164
  %1540 = vmatprep.subr.mxu0 %v173
  %1541 = vmatpush1.msra.mxu0 %v172
  %1542 = vmatprep.subr.mxu0 %v181
  %1543 = vmatpush1.msra.mxu0 %v180
  %1544 = vmatprep.subr.mxu0 %v189
  %1545 = vmatpush1.msra.mxu0 %v188
  %1546 = vmatprep.subr.mxu0 %v197
  %1547 = vmatpush1.msra.mxu0 %v196
  %1548 = vmatprep.subr.mxu0 %v205
  %1549 = vmatpush1.msra.mxu0 %v204
  %1550 = vmatprep.subr.mxu0 %v213
  %1551 = vmatpush1.msra.mxu0 %v212
  %1552 = vmatprep.subr.mxu0 %v221
  %1553 = vmatpush1.msra.mxu0 %v220
  %1554 = vmatprep.subr.mxu0 %v229
  %1555 = vmatpush1.msra.mxu0 %v228
  %1556 = vmatprep.subr.mxu0 %v237
  %1557 = vmatpush1.msra.mxu0 %v236
  %1558 = vmatprep.subr.mxu0 %v245
  %1559 = vmatpush1.msra.mxu0 %v244
  %1560 = vmatprep.subr.mxu0 %v253
  %1561 = vmatpush1.msra.mxu0 %v252
  %1562 = vmatprep.subr.mxu0 %v261
  %1563 = vmatpush1.msra.mxu0 %v260
  %1564 = vmatprep.subr.mxu0 %v269
  %1565 = vmatpush1.msra.mxu0 %v268
  %1566 = vmatprep.subr.mxu0 %v277
  %1567 = vmatpush1.msra.mxu0 %v276
  %1568 = vmatprep.subr.mxu0 %v285
  %1569 = vmatpush1.msra.mxu0 %v284
  %1570 = vmatprep.mubr.f32.mxu0 %v1352
  %1571 = vmatmul.mubr.f32.gmra.mrb[0].mxu0 %v1351
  %v1572 = vpop.f32.mrb[0].mxu0
  %v1573 = vadd.f32 0.0, %v1572
  %v1574 = vpop.f32.mrb[0].mxu0
  %v1575 = vadd.f32 0.0, %v1574
  %1576 = vdwg.mxu0
  %1577 = vmatprep.subr.mxu0 %v39
  %1578 = vmatpush1.msra.mxu0 %v38
  %1579 = vmatprep.subr.mxu0 %v47
  %1580 = vmatpush1.msra.mxu0 %v46
  %1581 = vmatprep.subr.mxu0 %v55
  %1582 = vmatpush1.msra.mxu0 %v54
  %1583 = vmatprep.subr.mxu0 %v63
  %1584 = vmatpush1.msra.mxu0 %v62
  %1585 = vmatprep.subr.mxu0 %v71
  %1586 = vmatpush1.msra.mxu0 %v70
  %1587 = vmatprep.subr.mxu0 %v79
  %1588 = vmatpush1.msra.mxu0 %v78
  %1589 = vmatprep.subr.mxu0 %v87
  %1590 = vmatpush1.msra.mxu0 %v86
  %1591 = vmatprep.subr.mxu0 %v95
  %1592 = vmatpush1.msra.mxu0 %v94
  %1593 = vmatprep.subr.mxu0 %v103
  %1594 = vmatpush1.msra.mxu0 %v102
  %1595 = vmatprep.subr.mxu0 %v111
  %1596 = vmatpush1.msra.mxu0 %v110
  %1597 = vmatprep.subr.mxu0 %v119
  %1598 = vmatpush1.msra.mxu0 %v118
  %1599 = vmatprep.subr.mxu0 %v127
  %1600 = vmatpush1.msra.mxu0 %v126
  %1601 = vmatprep.subr.mxu0 %v135
  %1602 = vmatpush1.msra.mxu0 %v134
  %1603 = vmatprep.subr.mxu0 %v143
  %1604 = vmatpush1.msra.mxu0 %v142
  %1605 = vmatprep.subr.mxu0 %v151
  %1606 = vmatpush1.msra.mxu0 %v150
  %1607 = vmatprep.subr.mxu0 %v159
  %1608 = vmatpush1.msra.mxu0 %v158
  %1609 = vmatprep.subr.mxu0 %v167
  %1610 = vmatpush1.msra.mxu0 %v166
  %1611 = vmatprep.subr.mxu0 %v175
  %1612 = vmatpush1.msra.mxu0 %v174
  %1613 = vmatprep.subr.mxu0 %v183
  %1614 = vmatpush1.msra.mxu0 %v182
  %1615 = vmatprep.subr.mxu0 %v191
  %1616 = vmatpush1.msra.mxu0 %v190
  %1617 = vmatprep.subr.mxu0 %v199
  %1618 = vmatpush1.msra.mxu0 %v198
  %1619 = vmatprep.subr.mxu0 %v207
  %1620 = vmatpush1.msra.mxu0 %v206
  %1621 = vmatprep.subr.mxu0 %v215
  %1622 = vmatpush1.msra.mxu0 %v214
  %1623 = vmatprep.subr.mxu0 %v223
  %1624 = vmatpush1.msra.mxu0 %v222
  %1625 = vmatprep.subr.mxu0 %v231
  %1626 = vmatpush1.msra.mxu0 %v230
  %1627 = vmatprep.subr.mxu0 %v239
  %1628 = vmatpush1.msra.mxu0 %v238
  %1629 = vmatprep.subr.mxu0 %v247
  %1630 = vmatpush1.msra.mxu0 %v246
  %1631 = vmatprep.subr.mxu0 %v255
  %1632 = vmatpush1.msra.mxu0 %v254
  %1633 = vmatprep.subr.mxu0 %v263
  %1634 = vmatpush1.msra.mxu0 %v262
  %1635 = vmatprep.subr.mxu0 %v271
  %1636 = vmatpush1.msra.mxu0 %v270
  %1637 = vmatprep.subr.mxu0 %v279
  %1638 = vmatpush1.msra.mxu0 %v278
  %1639 = vmatprep.subr.mxu0 %v287
  %1640 = vmatpush1.msra.mxu0 %v286
  %1641 = vmatprep.mubr.f32.mxu0 %v1352
  %1642 = vmatmul.mubr.f32.gmra.mrb[0].mxu0 %v1351
  %v1643 = vpop.f32.mrb[0].mxu0
  %v1644 = vadd.f32 0.0, %v1643
  %v1645 = vpop.f32.mrb[0].mxu0
  %v1646 = vadd.f32 0.0, %v1645
  %1647 = vdwg.mxu0
  %v1648 = vadd.f32 %v1356, %v1431
  %v1649 = vadd.f32 %v1357, %v1433
  %v1650 = vadd.f32 %v1358, %v1502
  %v1651 = vadd.f32 %v1359, %v1504
  %v1652 = vadd.f32 %v1360, %v1573
  %v1653 = vadd.f32 %v1361, %v1575
  %v1654 = vadd.f32 %v1362, %v1644
  %v1655 = vadd.f32 %v1363, %v1646
  %v1656 = vxor.u32 %v1648, 2147483648
  %v1657 = vxor.u32 %v1649, 2147483648
  %v1658 = vxor.u32 %v1650, 2147483648
  %v1659 = vxor.u32 %v1651, 2147483648
  %v1660 = vxor.u32 %v1652, 2147483648
  %v1661 = vxor.u32 %v1653, 2147483648
  %v1662 = vmul.f32 %v1656, 1.442695
  %v1663 = vpow.pop %v1662
  %v1664 = vmul.f32 %v1657, 1.442695
  %v1665 = vpow.pop %v1664
  %v1666 = vmul.f32 %v1658, 1.442695
  %v1667 = vpow.pop %v1666
  %v1668 = vmul.f32 %v1659, 1.442695
  %v1669 = vpow.pop %v1668
  %v1670 = vmul.f32 %v1660, 1.442695
  %v1671 = vpow.pop %v1670
  %v1672 = vmul.f32 %v1661, 1.442695
  %v1673 = vpow.pop %v1672
  %v1674 = vadd.f32 %v1663, 1.0
  %v1675 = vadd.f32 %v1665, 1.0
  %v1676 = vadd.f32 %v1667, 1.0
  %v1677 = vadd.f32 %v1669, 1.0
  %v1678 = vadd.f32 %v1671, 1.0
  %v1679 = vadd.f32 %v1673, 1.0
  %v1680 = vrcp.pop %v1674
  %v1681 = vmul.f32 1.0, %v1680
  %v1682 = vrcp.pop %v1675
  %v1683 = vmul.f32 1.0, %v1682
  %v1684 = vrcp.pop %v1676
  %v1685 = vmul.f32 1.0, %v1684
  %v1686 = vrcp.pop %v1677
  %v1687 = vmul.f32 1.0, %v1686
  %v1688 = vrcp.pop %v1678
  %v1689 = vmul.f32 1.0, %v1688
  %v1690 = vrcp.pop %v1679
  %v1691 = vmul.f32 1.0, %v1690
  %v1692 = vtanh.pop %v1654
  %v1693 = vtanh.pop %v1655
  %v1694 = vmul.f32 %v1685, %v1353
  %v1695 = vmul.f32 %v1687, %v1354
  %v1696 = vmul.f32 %v1681, %v1692
  %v1697 = vmul.f32 %v1683, %v1693
  %v1698 = vadd.f32 %v1694, %v1696
  %v1699 = vadd.f32 %v1695, %v1697
  %v1700 = vtanh.pop %v1698
  %v1701 = vtanh.pop %v1699
  %v1702 = vmul.f32 %v1689, %v1700
  %v1703 = vmul.f32 %v1691, %v1701
  %v1704 = vsel %vm628, 3, 4
  %v1705 = vsel %vm629, 3, 4
  %vm1706 = vcmp.lt.s32.totalorder %v1704, %v634
  %vm1707 = vcmp.lt.s32.totalorder %v1705, %v634
  %v1708 = vsel %vm1706, %v1702, %v1351
  %v1709 = vsel %vm1707, %v1703, %v1352
  %v1710 = vsel %vm1706, %v1698, %v1353
  %v1711 = vsel %vm1707, %v1699, %v1354
  %s1712 = scalar_lea.vmem %s0, 256
  %v1713 = vld [vmem:[%s1712] sm:$0xff]
  %v1714 = vld [vmem:[%s1712 + $0x8] sm:$0xff]
  %v1715 = vld [vmem:[%s1712 + $0x10] sm:$0xff]
  %v1716 = vld [vmem:[%s1712 + $0x18] sm:$0xff]
  %v1717 = vld [vmem:[%s1712 + $0x20] sm:$0xff]
  %v1718 = vld [vmem:[%s1712 + $0x28] sm:$0xff]
  %v1719 = vld [vmem:[%s1712 + $0x30] sm:$0xff]
  %v1720 = vld [vmem:[%s1712 + $0x38] sm:$0xff]
  %1721 = vmatprep.subr.mxu0 %v33
  %1722 = vmatpush1.msra.mxu0 %v32
  %1723 = vmatprep.subr.mxu0 %v41
  %1724 = vmatpush1.msra.mxu0 %v40
  %1725 = vmatprep.subr.mxu0 %v49
  %1726 = vmatpush1.msra.mxu0 %v48
  %1727 = vmatprep.subr.mxu0 %v57
  %1728 = vmatpush1.msra.mxu0 %v56
  %1729 = vmatprep.subr.mxu0 %v65
  %1730 = vmatpush1.msra.mxu0 %v64
  %1731 = vmatprep.subr.mxu0 %v73
  %1732 = vmatpush1.msra.mxu0 %v72
  %1733 = vmatprep.subr.mxu0 %v81
  %1734 = vmatpush1.msra.mxu0 %v80
  %1735 = vmatprep.subr.mxu0 %v89
  %1736 = vmatpush1.msra.mxu0 %v88
  %1737 = vmatprep.subr.mxu0 %v97
  %1738 = vmatpush1.msra.mxu0 %v96
  %1739 = vmatprep.subr.mxu0 %v105
  %1740 = vmatpush1.msra.mxu0 %v104
  %1741 = vmatprep.subr.mxu0 %v113
  %1742 = vmatpush1.msra.mxu0 %v112
  %1743 = vmatprep.subr.mxu0 %v121
  %1744 = vmatpush1.msra.mxu0 %v120
  %1745 = vmatprep.subr.mxu0 %v129
  %1746 = vmatpush1.msra.mxu0 %v128
  %1747 = vmatprep.subr.mxu0 %v137
  %1748 = vmatpush1.msra.mxu0 %v136
  %1749 = vmatprep.subr.mxu0 %v145
  %1750 = vmatpush1.msra.mxu0 %v144
  %1751 = vmatprep.subr.mxu0 %v153
  %1752 = vmatpush1.msra.mxu0 %v152
  %1753 = vmatprep.subr.mxu0 %v161
  %1754 = vmatpush1.msra.mxu0 %v160
  %1755 = vmatprep.subr.mxu0 %v169
  %1756 = vmatpush1.msra.mxu0 %v168
  %1757 = vmatprep.subr.mxu0 %v177
  %1758 = vmatpush1.msra.mxu0 %v176
  %1759 = vmatprep.subr.mxu0 %v185
  %1760 = vmatpush1.msra.mxu0 %v184
  %1761 = vmatprep.subr.mxu0 %v193
  %1762 = vmatpush1.msra.mxu0 %v192
  %1763 = vmatprep.subr.mxu0 %v201
  %1764 = vmatpush1.msra.mxu0 %v200
  %1765 = vmatprep.subr.mxu0 %v209
  %1766 = vmatpush1.msra.mxu0 %v208
  %1767 = vmatprep.subr.mxu0 %v217
  %1768 = vmatpush1.msra.mxu0 %v216
  %1769 = vmatprep.subr.mxu0 %v225
  %1770 = vmatpush1.msra.mxu0 %v224
  %1771 = vmatprep.subr.mxu0 %v233
  %1772 = vmatpush1.msra.mxu0 %v232
  %1773 = vmatprep.subr.mxu0 %v241
  %1774 = vmatpush1.msra.mxu0 %v240
  %1775 = vmatprep.subr.mxu0 %v249
  %1776 = vmatpush1.msra.mxu0 %v248
  %1777 = vmatprep.subr.mxu0 %v257
  %1778 = vmatpush1.msra.mxu0 %v256
  %1779 = vmatprep.subr.mxu0 %v265
  %1780 = vmatpush1.msra.mxu0 %v264
  %1781 = vmatprep.subr.mxu0 %v273
  %1782 = vmatpush1.msra.mxu0 %v272
  %1783 = vmatprep.subr.mxu0 %v281
  %1784 = vmatpush1.msra.mxu0 %v280
  %1785 = vmatprep.mubr.f32.mxu0 %v1709
  %1786 = vmatmul.mubr.f32.gmra.mrb[0].mxu0 %v1708
  %v1787 = vpop.f32.mrb[0].mxu0
  %v1788 = vadd.f32 0.0, %v1787
  %v1789 = vpop.f32.mrb[0].mxu0
  %v1790 = vadd.f32 0.0, %v1789
  %1791 = vdwg.mxu0
  %1792 = vmatprep.subr.mxu0 %v35
  %1793 = vmatpush1.msra.mxu0 %v34
  %1794 = vmatprep.subr.mxu0 %v43
  %1795 = vmatpush1.msra.mxu0 %v42
  %1796 = vmatprep.subr.mxu0 %v51
  %1797 = vmatpush1.msra.mxu0 %v50
  %1798 = vmatprep.subr.mxu0 %v59
  %1799 = vmatpush1.msra.mxu0 %v58
  %1800 = vmatprep.subr.mxu0 %v67
  %1801 = vmatpush1.msra.mxu0 %v66
  %1802 = vmatprep.subr.mxu0 %v75
  %1803 = vmatpush1.msra.mxu0 %v74
  %1804 = vmatprep.subr.mxu0 %v83
  %1805 = vmatpush1.msra.mxu0 %v82
  %1806 = vmatprep.subr.mxu0 %v91
  %1807 = vmatpush1.msra.mxu0 %v90
  %1808 = vmatprep.subr.mxu0 %v99
  %1809 = vmatpush1.msra.mxu0 %v98
  %1810 = vmatprep.subr.mxu0 %v107
  %1811 = vmatpush1.msra.mxu0 %v106
  %1812 = vmatprep.subr.mxu0 %v115
  %1813 = vmatpush1.msra.mxu0 %v114
  %1814 = vmatprep.subr.mxu0 %v123
  %1815 = vmatpush1.msra.mxu0 %v122
  %1816 = vmatprep.subr.mxu0 %v131
  %1817 = vmatpush1.msra.mxu0 %v130
  %1818 = vmatprep.subr.mxu0 %v139
  %1819 = vmatpush1.msra.mxu0 %v138
  %1820 = vmatprep.subr.mxu0 %v147
  %1821 = vmatpush1.msra.mxu0 %v146
  %1822 = vmatprep.subr.mxu0 %v155
  %1823 = vmatpush1.msra.mxu0 %v154
  %1824 = vmatprep.subr.mxu0 %v163
  %1825 = vmatpush1.msra.mxu0 %v162
  %1826 = vmatprep.subr.mxu0 %v171
  %1827 = vmatpush1.msra.mxu0 %v170
  %1828 = vmatprep.subr.mxu0 %v179
  %1829 = vmatpush1.msra.mxu0 %v178
  %1830 = vmatprep.subr.mxu0 %v187
  %1831 = vmatpush1.msra.mxu0 %v186
  %1832 = vmatprep.subr.mxu0 %v195
  %1833 = vmatpush1.msra.mxu0 %v194
  %1834 = vmatprep.subr.mxu0 %v203
  %1835 = vmatpush1.msra.mxu0 %v202
  %1836 = vmatprep.subr.mxu0 %v211
  %1837 = vmatpush1.msra.mxu0 %v210
  %1838 = vmatprep.subr.mxu0 %v219
  %1839 = vmatpush1.msra.mxu0 %v218
  %1840 = vmatprep.subr.mxu0 %v227
  %1841 = vmatpush1.msra.mxu0 %v226
  %1842 = vmatprep.subr.mxu0 %v235
  %1843 = vmatpush1.msra.mxu0 %v234
  %1844 = vmatprep.subr.mxu0 %v243
  %1845 = vmatpush1.msra.mxu0 %v242
  %1846 = vmatprep.subr.mxu0 %v251
  %1847 = vmatpush1.msra.mxu0 %v250
  %1848 = vmatprep.subr.mxu0 %v259
  %1849 = vmatpush1.msra.mxu0 %v258
  %1850 = vmatprep.subr.mxu0 %v267
  %1851 = vmatpush1.msra.mxu0 %v266
  %1852 = vmatprep.subr.mxu0 %v275
  %1853 = vmatpush1.msra.mxu0 %v274
  %1854 = vmatprep.subr.mxu0 %v283
  %1855 = vmatpush1.msra.mxu0 %v282
  %1856 = vmatprep.mubr.f32.mxu0 %v1709
  %1857 = vmatmul.mubr.f32.gmra.mrb[0].mxu0 %v1708
  %v1858 = vpop.f32.mrb[0].mxu0
  %v1859 = vadd.f32 0.0, %v1858
  %v1860 = vpop.f32.mrb[0].mxu0
  %v1861 = vadd.f32 0.0, %v1860
  %1862 = vdwg.mxu0
  %1863 = vmatprep.subr.mxu0 %v37
  %1864 = vmatpush1.msra.mxu0 %v36
  %1865 = vmatprep.subr.mxu0 %v45
  %1866 = vmatpush1.msra.mxu0 %v44
  %1867 = vmatprep.subr.mxu0 %v53
  %1868 = vmatpush1.msra.mxu0 %v52
  %1869 = vmatprep.subr.mxu0 %v61
  %1870 = vmatpush1.msra.mxu0 %v60
  %1871 = vmatprep.subr.mxu0 %v69
  %1872 = vmatpush1.msra.mxu0 %v68
  %1873 = vmatprep.subr.mxu0 %v77
  %1874 = vmatpush1.msra.mxu0 %v76
  %1875 = vmatprep.subr.mxu0 %v85
  %1876 = vmatpush1.msra.mxu0 %v84
  %1877 = vmatprep.subr.mxu0 %v93
  %1878 = vmatpush1.msra.mxu0 %v92
  %1879 = vmatprep.subr.mxu0 %v101
  %1880 = vmatpush1.msra.mxu0 %v100
  %1881 = vmatprep.subr.mxu0 %v109
  %1882 = vmatpush1.msra.mxu0 %v108
  %1883 = vmatprep.subr.mxu0 %v117
  %1884 = vmatpush1.msra.mxu0 %v116
  %1885 = vmatprep.subr.mxu0 %v125
  %1886 = vmatpush1.msra.mxu0 %v124
  %1887 = vmatprep.subr.mxu0 %v133
  %1888 = vmatpush1.msra.mxu0 %v132
  %1889 = vmatprep.subr.mxu0 %v141
  %1890 = vmatpush1.msra.mxu0 %v140
  %1891 = vmatprep.subr.mxu0 %v149
  %1892 = vmatpush1.msra.mxu0 %v148
  %1893 = vmatprep.subr.mxu0 %v157
  %1894 = vmatpush1.msra.mxu0 %v156
  %1895 = vmatprep.subr.mxu0 %v165
  %1896 = vmatpush1.msra.mxu0 %v164
  %1897 = vmatprep.subr.mxu0 %v173
  %1898 = vmatpush1.msra.mxu0 %v172
  %1899 = vmatprep.subr.mxu0 %v181
  %1900 = vmatpush1.msra.mxu0 %v180
  %1901 = vmatprep.subr.mxu0 %v189
  %1902 = vmatpush1.msra.mxu0 %v188
  %1903 = vmatprep.subr.mxu0 %v197
  %1904 = vmatpush1.msra.mxu0 %v196
  %1905 = vmatprep.subr.mxu0 %v205
  %1906 = vmatpush1.msra.mxu0 %v204
  %1907 = vmatprep.subr.mxu0 %v213
  %1908 = vmatpush1.msra.mxu0 %v212
  %1909 = vmatprep.subr.mxu0 %v221
  %1910 = vmatpush1.msra.mxu0 %v220
  %1911 = vmatprep.subr.mxu0 %v229
  %1912 = vmatpush1.msra.mxu0 %v228
  %1913 = vmatprep.subr.mxu0 %v237
  %1914 = vmatpush1.msra.mxu0 %v236
  %1915 = vmatprep.subr.mxu0 %v245
  %1916 = vmatpush1.msra.mxu0 %v244
  %1917 = vmatprep.subr.mxu0 %v253
  %1918 = vmatpush1.msra.mxu0 %v252
  %1919 = vmatprep.subr.mxu0 %v261
  %1920 = vmatpush1.msra.mxu0 %v260
  %1921 = vmatprep.subr.mxu0 %v269
  %1922 = vmatpush1.msra.mxu0 %v268
  %1923 = vmatprep.subr.mxu0 %v277
  %1924 = vmatpush1.msra.mxu0 %v276
  %1925 = vmatprep.subr.mxu0 %v285
  %1926 = vmatpush1.msra.mxu0 %v284
  %1927 = vmatprep.mubr.f32.mxu0 %v1709
  %1928 = vmatmul.mubr.f32.gmra.mrb[0].mxu0 %v1708
  %v1929 = vpop.f32.mrb[0].mxu0
  %v1930 = vadd.f32 0.0, %v1929
  %v1931 = vpop.f32.mrb[0].mxu0
  %v1932 = vadd.f32 0.0, %v1931
  %1933 = vdwg.mxu0
  %1934 = vmatprep.subr.mxu0 %v39
  %1935 = vmatpush1.msra.mxu0 %v38
  %1936 = vmatprep.subr.mxu0 %v47
  %1937 = vmatpush1.msra.mxu0 %v46
  %1938 = vmatprep.subr.mxu0 %v55
  %1939 = vmatpush1.msra.mxu0 %v54
  %1940 = vmatprep.subr.mxu0 %v63
  %1941 = vmatpush1.msra.mxu0 %v62
  %1942 = vmatprep.subr.mxu0 %v71
  %1943 = vmatpush1.msra.mxu0 %v70
  %1944 = vmatprep.subr.mxu0 %v79
  %1945 = vmatpush1.msra.mxu0 %v78
  %1946 = vmatprep.subr.mxu0 %v87
  %1947 = vmatpush1.msra.mxu0 %v86
  %1948 = vmatprep.subr.mxu0 %v95
  %1949 = vmatpush1.msra.mxu0 %v94
  %1950 = vmatprep.subr.mxu0 %v103
  %1951 = vmatpush1.msra.mxu0 %v102
  %1952 = vmatprep.subr.mxu0 %v111
  %1953 = vmatpush1.msra.mxu0 %v110
  %1954 = vmatprep.subr.mxu0 %v119
  %1955 = vmatpush1.msra.mxu0 %v118
  %1956 = vmatprep.subr.mxu0 %v127
  %1957 = vmatpush1.msra.mxu0 %v126
  %1958 = vmatprep.subr.mxu0 %v135
  %1959 = vmatpush1.msra.mxu0 %v134
  %1960 = vmatprep.subr.mxu0 %v143
  %1961 = vmatpush1.msra.mxu0 %v142
  %1962 = vmatprep.subr.mxu0 %v151
  %1963 = vmatpush1.msra.mxu0 %v150
  %1964 = vmatprep.subr.mxu0 %v159
  %1965 = vmatpush1.msra.mxu0 %v158
  %1966 = vmatprep.subr.mxu0 %v167
  %1967 = vmatpush1.msra.mxu0 %v166
  %1968 = vmatprep.subr.mxu0 %v175
  %1969 = vmatpush1.msra.mxu0 %v174
  %1970 = vmatprep.subr.mxu0 %v183
  %1971 = vmatpush1.msra.mxu0 %v182
  %1972 = vmatprep.subr.mxu0 %v191
  %1973 = vmatpush1.msra.mxu0 %v190
  %1974 = vmatprep.subr.mxu0 %v199
  %1975 = vmatpush1.msra.mxu0 %v198
  %1976 = vmatprep.subr.mxu0 %v207
  %1977 = vmatpush1.msra.mxu0 %v206
  %1978 = vmatprep.subr.mxu0 %v215
  %1979 = vmatpush1.msra.mxu0 %v214
  %1980 = vmatprep.subr.mxu0 %v223
  %1981 = vmatpush1.msra.mxu0 %v222
  %1982 = vmatprep.subr.mxu0 %v231
  %1983 = vmatpush1.msra.mxu0 %v230
  %1984 = vmatprep.subr.mxu0 %v239
  %1985 = vmatpush1.msra.mxu0 %v238
  %1986 = vmatprep.subr.mxu0 %v247
  %1987 = vmatpush1.msra.mxu0 %v246
  %1988 = vmatprep.subr.mxu0 %v255
  %1989 = vmatpush1.msra.mxu0 %v254
  %1990 = vmatprep.subr.mxu0 %v263
  %1991 = vmatpush1.msra.mxu0 %v262
  %1992 = vmatprep.subr.mxu0 %v271
  %1993 = vmatpush1.msra.mxu0 %v270
  %1994 = vmatprep.subr.mxu0 %v279
  %1995 = vmatpush1.msra.mxu0 %v278
  %1996 = vmatprep.subr.mxu0 %v287
  %1997 = vmatpush1.msra.mxu0 %v286
  %1998 = vmatprep.mubr.f32.mxu0 %v1709
  %1999 = vmatmul.mubr.f32.gmra.mrb[0].mxu0 %v1708
  %v2000 = vpop.f32.mrb[0].mxu0
  %v2001 = vadd.f32 0.0, %v2000
  %v2002 = vpop.f32.mrb[0].mxu0
  %v2003 = vadd.f32 0.0, %v2002
  %2004 = vdwg.mxu0
  %v2005 = vadd.f32 %v1713, %v1788
  %v2006 = vadd.f32 %v1714, %v1790
  %v2007 = vadd.f32 %v1715, %v1859
  %v2008 = vadd.f32 %v1716, %v1861
  %v2009 = vadd.f32 %v1717, %v1930
  %v2010 = vadd.f32 %v1718, %v1932
  %v2011 = vadd.f32 %v1719, %v2001
  %v2012 = vadd.f32 %v1720, %v2003
  %v2013 = vxor.u32 %v2005, 2147483648
  %v2014 = vxor.u32 %v2006, 2147483648
  %v2015 = vxor.u32 %v2007, 2147483648
  %v2016 = vxor.u32 %v2008, 2147483648
  %v2017 = vxor.u32 %v2009, 2147483648
  %v2018 = vxor.u32 %v2010, 2147483648
  %v2019 = vmul.f32 %v2013, 1.442695
  %v2020 = vpow.pop %v2019
  %v2021 = vmul.f32 %v2014, 1.442695
  %v2022 = vpow.pop %v2021
  %v2023 = vmul.f32 %v2015, 1.442695
  %v2024 = vpow.pop %v2023
  %v2025 = vmul.f32 %v2016, 1.442695
  %v2026 = vpow.pop %v2025
  %v2027 = vmul.f32 %v2017, 1.442695
  %v2028 = vpow.pop %v2027
  %v2029 = vmul.f32 %v2018, 1.442695
  %v2030 = vpow.pop %v2029
  %v2031 = vadd.f32 %v2020, 1.0
  %v2032 = vadd.f32 %v2022, 1.0
  %v2033 = vadd.f32 %v2024, 1.0
  %v2034 = vadd.f32 %v2026, 1.0
  %v2035 = vadd.f32 %v2028, 1.0
  %v2036 = vadd.f32 %v2030, 1.0
  %v2037 = vrcp.pop %v2031
  %v2038 = vmul.f32 1.0, %v2037
  %v2039 = vrcp.pop %v2032
  %v2040 = vmul.f32 1.0, %v2039
  %v2041 = vrcp.pop %v2033
  %v2042 = vmul.f32 1.0, %v2041
  %v2043 = vrcp.pop %v2034
  %v2044 = vmul.f32 1.0, %v2043
  %v2045 = vrcp.pop %v2035
  %v2046 = vmul.f32 1.0, %v2045
  %v2047 = vrcp.pop %v2036
  %v2048 = vmul.f32 1.0, %v2047
  %v2049 = vtanh.pop %v2011
  %v2050 = vtanh.pop %v2012
  %v2051 = vmul.f32 %v2042, %v1710
  %v2052 = vmul.f32 %v2044, %v1711
  %v2053 = vmul.f32 %v2038, %v2049
  %v2054 = vmul.f32 %v2040, %v2050
  %v2055 = vadd.f32 %v2051, %v2053
  %v2056 = vadd.f32 %v2052, %v2054
  %v2057 = vtanh.pop %v2055
  %v2058 = vtanh.pop %v2056
  %v2059 = vmul.f32 %v2046, %v2057
  %v2060 = vmul.f32 %v2048, %v2058
  %v2061 = vsel %vm628, 4, 3
  %v2062 = vsel %vm629, 4, 3
  %vm2063 = vcmp.lt.s32.totalorder %v2061, %v634
  %vm2064 = vcmp.lt.s32.totalorder %v2062, %v634
  %v2065 = vsel %vm2063, %v2059, %v1708
  %v2066 = vsel %vm2064, %v2060, %v1709
  %v2067 = vsel %vm2063, %v2055, %v1710
  %v2068 = vsel %vm2064, %v2056, %v1711
  %s2069 = scalar_lea.vmem %s0, 320
  %v2070 = vld [vmem:[%s2069] sm:$0xff]
  %v2071 = vld [vmem:[%s2069 + $0x8] sm:$0xff]
  %v2072 = vld [vmem:[%s2069 + $0x10] sm:$0xff]
  %v2073 = vld [vmem:[%s2069 + $0x18] sm:$0xff]
  %v2074 = vld [vmem:[%s2069 + $0x20] sm:$0xff]
  %v2075 = vld [vmem:[%s2069 + $0x28] sm:$0xff]
  %v2076 = vld [vmem:[%s2069 + $0x30] sm:$0xff]
  %v2077 = vld [vmem:[%s2069 + $0x38] sm:$0xff]
  %2078 = vmatprep.subr.mxu0 %v33
  %2079 = vmatpush1.msra.mxu0 %v32
  %2080 = vmatprep.subr.mxu0 %v41
  %2081 = vmatpush1.msra.mxu0 %v40
  %2082 = vmatprep.subr.mxu0 %v49
  %2083 = vmatpush1.msra.mxu0 %v48
  %2084 = vmatprep.subr.mxu0 %v57
  %2085 = vmatpush1.msra.mxu0 %v56
  %2086 = vmatprep.subr.mxu0 %v65
  %2087 = vmatpush1.msra.mxu0 %v64
  %2088 = vmatprep.subr.mxu0 %v73
  %2089 = vmatpush1.msra.mxu0 %v72
  %2090 = vmatprep.subr.mxu0 %v81
  %2091 = vmatpush1.msra.mxu0 %v80
  %2092 = vmatprep.subr.mxu0 %v89
  %2093 = vmatpush1.msra.mxu0 %v88
  %2094 = vmatprep.subr.mxu0 %v97
  %2095 = vmatpush1.msra.mxu0 %v96
  %2096 = vmatprep.subr.mxu0 %v105
  %2097 = vmatpush1.msra.mxu0 %v104
  %2098 = vmatprep.subr.mxu0 %v113
  %2099 = vmatpush1.msra.mxu0 %v112
  %2100 = vmatprep.subr.mxu0 %v121
  %2101 = vmatpush1.msra.mxu0 %v120
  %2102 = vmatprep.subr.mxu0 %v129
  %2103 = vmatpush1.msra.mxu0 %v128
  %2104 = vmatprep.subr.mxu0 %v137
  %2105 = vmatpush1.msra.mxu0 %v136
  %2106 = vmatprep.subr.mxu0 %v145
  %2107 = vmatpush1.msra.mxu0 %v144
  %2108 = vmatprep.subr.mxu0 %v153
  %2109 = vmatpush1.msra.mxu0 %v152
  %2110 = vmatprep.subr.mxu0 %v161
  %2111 = vmatpush1.msra.mxu0 %v160
  %2112 = vmatprep.subr.mxu0 %v169
  %2113 = vmatpush1.msra.mxu0 %v168
  %2114 = vmatprep.subr.mxu0 %v177
  %2115 = vmatpush1.msra.mxu0 %v176
  %2116 = vmatprep.subr.mxu0 %v185
  %2117 = vmatpush1.msra.mxu0 %v184
  %2118 = vmatprep.subr.mxu0 %v193
  %2119 = vmatpush1.msra.mxu0 %v192
  %2120 = vmatprep.subr.mxu0 %v201
  %2121 = vmatpush1.msra.mxu0 %v200
  %2122 = vmatprep.subr.mxu0 %v209
  %2123 = vmatpush1.msra.mxu0 %v208
  %2124 = vmatprep.subr.mxu0 %v217
  %2125 = vmatpush1.msra.mxu0 %v216
  %2126 = vmatprep.subr.mxu0 %v225
  %2127 = vmatpush1.msra.mxu0 %v224
  %2128 = vmatprep.subr.mxu0 %v233
  %2129 = vmatpush1.msra.mxu0 %v232
  %2130 = vmatprep.subr.mxu0 %v241
  %2131 = vmatpush1.msra.mxu0 %v240
  %2132 = vmatprep.subr.mxu0 %v249
  %2133 = vmatpush1.msra.mxu0 %v248
  %2134 = vmatprep.subr.mxu0 %v257
  %2135 = vmatpush1.msra.mxu0 %v256
  %2136 = vmatprep.subr.mxu0 %v265
  %2137 = vmatpush1.msra.mxu0 %v264
  %2138 = vmatprep.subr.mxu0 %v273
  %2139 = vmatpush1.msra.mxu0 %v272
  %2140 = vmatprep.subr.mxu0 %v281
  %2141 = vmatpush1.msra.mxu0 %v280
  %2142 = vmatprep.mubr.f32.mxu0 %v2066
  %2143 = vmatmul.mubr.f32.gmra.mrb[0].mxu0 %v2065
  %v2144 = vpop.f32.mrb[0].mxu0
  %v2145 = vadd.f32 0.0, %v2144
  %v2146 = vpop.f32.mrb[0].mxu0
  %v2147 = vadd.f32 0.0, %v2146
  %2148 = vdwg.mxu0
  %2149 = vmatprep.subr.mxu0 %v35
  %2150 = vmatpush1.msra.mxu0 %v34
  %2151 = vmatprep.subr.mxu0 %v43
  %2152 = vmatpush1.msra.mxu0 %v42
  %2153 = vmatprep.subr.mxu0 %v51
  %2154 = vmatpush1.msra.mxu0 %v50
  %2155 = vmatprep.subr.mxu0 %v59
  %2156 = vmatpush1.msra.mxu0 %v58
  %2157 = vmatprep.subr.mxu0 %v67
  %2158 = vmatpush1.msra.mxu0 %v66
  %2159 = vmatprep.subr.mxu0 %v75
  %2160 = vmatpush1.msra.mxu0 %v74
  %2161 = vmatprep.subr.mxu0 %v83
  %2162 = vmatpush1.msra.mxu0 %v82
  %2163 = vmatprep.subr.mxu0 %v91
  %2164 = vmatpush1.msra.mxu0 %v90
  %2165 = vmatprep.subr.mxu0 %v99
  %2166 = vmatpush1.msra.mxu0 %v98
  %2167 = vmatprep.subr.mxu0 %v107
  %2168 = vmatpush1.msra.mxu0 %v106
  %2169 = vmatprep.subr.mxu0 %v115
  %2170 = vmatpush1.msra.mxu0 %v114
  %2171 = vmatprep.subr.mxu0 %v123
  %2172 = vmatpush1.msra.mxu0 %v122
  %2173 = vmatprep.subr.mxu0 %v131
  %2174 = vmatpush1.msra.mxu0 %v130
  %2175 = vmatprep.subr.mxu0 %v139
  %2176 = vmatpush1.msra.mxu0 %v138
  %2177 = vmatprep.subr.mxu0 %v147
  %2178 = vmatpush1.msra.mxu0 %v146
  %2179 = vmatprep.subr.mxu0 %v155
  %2180 = vmatpush1.msra.mxu0 %v154
  %2181 = vmatprep.subr.mxu0 %v163
  %2182 = vmatpush1.msra.mxu0 %v162
  %2183 = vmatprep.subr.mxu0 %v171
  %2184 = vmatpush1.msra.mxu0 %v170
  %2185 = vmatprep.subr.mxu0 %v179
  %2186 = vmatpush1.msra.mxu0 %v178
  %2187 = vmatprep.subr.mxu0 %v187
  %2188 = vmatpush1.msra.mxu0 %v186
  %2189 = vmatprep.subr.mxu0 %v195
  %2190 = vmatpush1.msra.mxu0 %v194
  %2191 = vmatprep.subr.mxu0 %v203
  %2192 = vmatpush1.msra.mxu0 %v202
  %2193 = vmatprep.subr.mxu0 %v211
  %2194 = vmatpush1.msra.mxu0 %v210
  %2195 = vmatprep.subr.mxu0 %v219
  %2196 = vmatpush1.msra.mxu0 %v218
  %2197 = vmatprep.subr.mxu0 %v227
  %2198 = vmatpush1.msra.mxu0 %v226
  %2199 = vmatprep.subr.mxu0 %v235
  %2200 = vmatpush1.msra.mxu0 %v234
  %2201 = vmatprep.subr.mxu0 %v243
  %2202 = vmatpush1.msra.mxu0 %v242
  %2203 = vmatprep.subr.mxu0 %v251
  %2204 = vmatpush1.msra.mxu0 %v250
  %2205 = vmatprep.subr.mxu0 %v259
  %2206 = vmatpush1.msra.mxu0 %v258
  %2207 = vmatprep.subr.mxu0 %v267
  %2208 = vmatpush1.msra.mxu0 %v266
  %2209 = vmatprep.subr.mxu0 %v275
  %2210 = vmatpush1.msra.mxu0 %v274
  %2211 = vmatprep.subr.mxu0 %v283
  %2212 = vmatpush1.msra.mxu0 %v282
  %2213 = vmatprep.mubr.f32.mxu0 %v2066
  %2214 = vmatmul.mubr.f32.gmra.mrb[0].mxu0 %v2065
  %v2215 = vpop.f32.mrb[0].mxu0
  %v2216 = vadd.f32 0.0, %v2215
  %v2217 = vpop.f32.mrb[0].mxu0
  %v2218 = vadd.f32 0.0, %v2217
  %2219 = vdwg.mxu0
  %2220 = vmatprep.subr.mxu0 %v37
  %2221 = vmatpush1.msra.mxu0 %v36
  %2222 = vmatprep.subr.mxu0 %v45
  %2223 = vmatpush1.msra.mxu0 %v44
  %2224 = vmatprep.subr.mxu0 %v53
  %2225 = vmatpush1.msra.mxu0 %v52
  %2226 = vmatprep.subr.mxu0 %v61
  %2227 = vmatpush1.msra.mxu0 %v60
  %2228 = vmatprep.subr.mxu0 %v69
  %2229 = vmatpush1.msra.mxu0 %v68
  %2230 = vmatprep.subr.mxu0 %v77
  %2231 = vmatpush1.msra.mxu0 %v76
  %2232 = vmatprep.subr.mxu0 %v85
  %2233 = vmatpush1.msra.mxu0 %v84
  %2234 = vmatprep.subr.mxu0 %v93
  %2235 = vmatpush1.msra.mxu0 %v92
  %2236 = vmatprep.subr.mxu0 %v101
  %2237 = vmatpush1.msra.mxu0 %v100
  %2238 = vmatprep.subr.mxu0 %v109
  %2239 = vmatpush1.msra.mxu0 %v108
  %2240 = vmatprep.subr.mxu0 %v117
  %2241 = vmatpush1.msra.mxu0 %v116
  %2242 = vmatprep.subr.mxu0 %v125
  %2243 = vmatpush1.msra.mxu0 %v124
  %2244 = vmatprep.subr.mxu0 %v133
  %2245 = vmatpush1.msra.mxu0 %v132
  %2246 = vmatprep.subr.mxu0 %v141
  %2247 = vmatpush1.msra.mxu0 %v140
  %2248 = vmatprep.subr.mxu0 %v149
  %2249 = vmatpush1.msra.mxu0 %v148
  %2250 = vmatprep.subr.mxu0 %v157
  %2251 = vmatpush1.msra.mxu0 %v156
  %2252 = vmatprep.subr.mxu0 %v165
  %2253 = vmatpush1.msra.mxu0 %v164
  %2254 = vmatprep.subr.mxu0 %v173
  %2255 = vmatpush1.msra.mxu0 %v172
  %2256 = vmatprep.subr.mxu0 %v181
  %2257 = vmatpush1.msra.mxu0 %v180
  %2258 = vmatprep.subr.mxu0 %v189
  %2259 = vmatpush1.msra.mxu0 %v188
  %2260 = vmatprep.subr.mxu0 %v197
  %2261 = vmatpush1.msra.mxu0 %v196
  %2262 = vmatprep.subr.mxu0 %v205
  %2263 = vmatpush1.msra.mxu0 %v204
  %2264 = vmatprep.subr.mxu0 %v213
  %2265 = vmatpush1.msra.mxu0 %v212
  %2266 = vmatprep.subr.mxu0 %v221
  %2267 = vmatpush1.msra.mxu0 %v220
  %2268 = vmatprep.subr.mxu0 %v229
  %2269 = vmatpush1.msra.mxu0 %v228
  %2270 = vmatprep.subr.mxu0 %v237
  %2271 = vmatpush1.msra.mxu0 %v236
  %2272 = vmatprep.subr.mxu0 %v245
  %2273 = vmatpush1.msra.mxu0 %v244
  %2274 = vmatprep.subr.mxu0 %v253
  %2275 = vmatpush1.msra.mxu0 %v252
  %2276 = vmatprep.subr.mxu0 %v261
  %2277 = vmatpush1.msra.mxu0 %v260
  %2278 = vmatprep.subr.mxu0 %v269
  %2279 = vmatpush1.msra.mxu0 %v268
  %2280 = vmatprep.subr.mxu0 %v277
  %2281 = vmatpush1.msra.mxu0 %v276
  %2282 = vmatprep.subr.mxu0 %v285
  %2283 = vmatpush1.msra.mxu0 %v284
  %2284 = vmatprep.mubr.f32.mxu0 %v2066
  %2285 = vmatmul.mubr.f32.gmra.mrb[0].mxu0 %v2065
  %v2286 = vpop.f32.mrb[0].mxu0
  %v2287 = vadd.f32 0.0, %v2286
  %v2288 = vpop.f32.mrb[0].mxu0
  %v2289 = vadd.f32 0.0, %v2288
  %2290 = vdwg.mxu0
  %2291 = vmatprep.subr.mxu0 %v39
  %2292 = vmatpush1.msra.mxu0 %v38
  %2293 = vmatprep.subr.mxu0 %v47
  %2294 = vmatpush1.msra.mxu0 %v46
  %2295 = vmatprep.subr.mxu0 %v55
  %2296 = vmatpush1.msra.mxu0 %v54
  %2297 = vmatprep.subr.mxu0 %v63
  %2298 = vmatpush1.msra.mxu0 %v62
  %2299 = vmatprep.subr.mxu0 %v71
  %2300 = vmatpush1.msra.mxu0 %v70
  %2301 = vmatprep.subr.mxu0 %v79
  %2302 = vmatpush1.msra.mxu0 %v78
  %2303 = vmatprep.subr.mxu0 %v87
  %2304 = vmatpush1.msra.mxu0 %v86
  %2305 = vmatprep.subr.mxu0 %v95
  %2306 = vmatpush1.msra.mxu0 %v94
  %2307 = vmatprep.subr.mxu0 %v103
  %2308 = vmatpush1.msra.mxu0 %v102
  %2309 = vmatprep.subr.mxu0 %v111
  %2310 = vmatpush1.msra.mxu0 %v110
  %2311 = vmatprep.subr.mxu0 %v119
  %2312 = vmatpush1.msra.mxu0 %v118
  %2313 = vmatprep.subr.mxu0 %v127
  %2314 = vmatpush1.msra.mxu0 %v126
  %2315 = vmatprep.subr.mxu0 %v135
  %2316 = vmatpush1.msra.mxu0 %v134
  %2317 = vmatprep.subr.mxu0 %v143
  %2318 = vmatpush1.msra.mxu0 %v142
  %2319 = vmatprep.subr.mxu0 %v151
  %2320 = vmatpush1.msra.mxu0 %v150
  %2321 = vmatprep.subr.mxu0 %v159
  %2322 = vmatpush1.msra.mxu0 %v158
  %2323 = vmatprep.subr.mxu0 %v167
  %2324 = vmatpush1.msra.mxu0 %v166
  %2325 = vmatprep.subr.mxu0 %v175
  %2326 = vmatpush1.msra.mxu0 %v174
  %2327 = vmatprep.subr.mxu0 %v183
  %2328 = vmatpush1.msra.mxu0 %v182
  %2329 = vmatprep.subr.mxu0 %v191
  %2330 = vmatpush1.msra.mxu0 %v190
  %2331 = vmatprep.subr.mxu0 %v199
  %2332 = vmatpush1.msra.mxu0 %v198
  %2333 = vmatprep.subr.mxu0 %v207
  %2334 = vmatpush1.msra.mxu0 %v206
  %2335 = vmatprep.subr.mxu0 %v215
  %2336 = vmatpush1.msra.mxu0 %v214
  %2337 = vmatprep.subr.mxu0 %v223
  %2338 = vmatpush1.msra.mxu0 %v222
  %2339 = vmatprep.subr.mxu0 %v231
  %2340 = vmatpush1.msra.mxu0 %v230
  %2341 = vmatprep.subr.mxu0 %v239
  %2342 = vmatpush1.msra.mxu0 %v238
  %2343 = vmatprep.subr.mxu0 %v247
  %2344 = vmatpush1.msra.mxu0 %v246
  %2345 = vmatprep.subr.mxu0 %v255
  %2346 = vmatpush1.msra.mxu0 %v254
  %2347 = vmatprep.subr.mxu0 %v263
  %2348 = vmatpush1.msra.mxu0 %v262
  %2349 = vmatprep.subr.mxu0 %v271
  %2350 = vmatpush1.msra.mxu0 %v270
  %2351 = vmatprep.subr.mxu0 %v279
  %2352 = vmatpush1.msra.mxu0 %v278
  %2353 = vmatprep.subr.mxu0 %v287
  %2354 = vmatpush1.msra.mxu0 %v286
  %2355 = vmatprep.mubr.f32.mxu0 %v2066
  %2356 = vmatmul.mubr.f32.gmra.mrb[0].mxu0 %v2065
  %v2357 = vpop.f32.mrb[0].mxu0
  %v2358 = vadd.f32 0.0, %v2357
  %v2359 = vpop.f32.mrb[0].mxu0
  %v2360 = vadd.f32 0.0, %v2359
  %2361 = vdwg.mxu0
  %v2362 = vadd.f32 %v2070, %v2145
  %v2363 = vadd.f32 %v2071, %v2147
  %v2364 = vadd.f32 %v2072, %v2216
  %v2365 = vadd.f32 %v2073, %v2218
  %v2366 = vadd.f32 %v2074, %v2287
  %v2367 = vadd.f32 %v2075, %v2289
  %v2368 = vadd.f32 %v2076, %v2358
  %v2369 = vadd.f32 %v2077, %v2360
  %v2370 = vxor.u32 %v2362, 2147483648
  %v2371 = vxor.u32 %v2363, 2147483648
  %v2372 = vxor.u32 %v2364, 2147483648
  %v2373 = vxor.u32 %v2365, 2147483648
  %v2374 = vxor.u32 %v2366, 2147483648
  %v2375 = vxor.u32 %v2367, 2147483648
  %v2376 = vmul.f32 %v2370, 1.442695
  %v2377 = vpow.pop %v2376
  %v2378 = vmul.f32 %v2371, 1.442695
  %v2379 = vpow.pop %v2378
  %v2380 = vmul.f32 %v2372, 1.442695
  %v2381 = vpow.pop %v2380
  %v2382 = vmul.f32 %v2373, 1.442695
  %v2383 = vpow.pop %v2382
  %v2384 = vmul.f32 %v2374, 1.442695
  %v2385 = vpow.pop %v2384
  %v2386 = vmul.f32 %v2375, 1.442695
  %v2387 = vpow.pop %v2386
  %v2388 = vadd.f32 %v2377, 1.0
  %v2389 = vadd.f32 %v2379, 1.0
  %v2390 = vadd.f32 %v2381, 1.0
  %v2391 = vadd.f32 %v2383, 1.0
  %v2392 = vadd.f32 %v2385, 1.0
  %v2393 = vadd.f32 %v2387, 1.0
  %v2394 = vrcp.pop %v2388
  %v2395 = vmul.f32 1.0, %v2394
  %v2396 = vrcp.pop %v2389
  %v2397 = vmul.f32 1.0, %v2396
  %v2398 = vrcp.pop %v2390
  %v2399 = vmul.f32 1.0, %v2398
  %v2400 = vrcp.pop %v2391
  %v2401 = vmul.f32 1.0, %v2400
  %v2402 = vrcp.pop %v2392
  %v2403 = vmul.f32 1.0, %v2402
  %v2404 = vrcp.pop %v2393
  %v2405 = vmul.f32 1.0, %v2404
  %v2406 = vtanh.pop %v2368
  %v2407 = vtanh.pop %v2369
  %v2408 = vmul.f32 %v2399, %v2067
  %v2409 = vmul.f32 %v2401, %v2068
  %v2410 = vmul.f32 %v2395, %v2406
  %v2411 = vmul.f32 %v2397, %v2407
  %v2412 = vadd.f32 %v2408, %v2410
  %v2413 = vadd.f32 %v2409, %v2411
  %v2414 = vtanh.pop %v2412
  %v2415 = vtanh.pop %v2413
  %v2416 = vmul.f32 %v2403, %v2414
  %v2417 = vmul.f32 %v2405, %v2415
  %v2418 = vsel %vm628, 5, 2
  %v2419 = vsel %vm629, 5, 2
  %vm2420 = vcmp.lt.s32.totalorder %v2418, %v634
  %vm2421 = vcmp.lt.s32.totalorder %v2419, %v634
  %v2422 = vsel %vm2420, %v2416, %v2065
  %v2423 = vsel %vm2421, %v2417, %v2066
  %v2424 = vsel %vm2420, %v2412, %v2067
  %v2425 = vsel %vm2421, %v2413, %v2068
  %s2426 = scalar_lea.vmem %s0, 384
  %v2427 = vld [vmem:[%s2426] sm:$0xff]
  %v2428 = vld [vmem:[%s2426 + $0x8] sm:$0xff]
  %v2429 = vld [vmem:[%s2426 + $0x10] sm:$0xff]
  %v2430 = vld [vmem:[%s2426 + $0x18] sm:$0xff]
  %v2431 = vld [vmem:[%s2426 + $0x20] sm:$0xff]
  %v2432 = vld [vmem:[%s2426 + $0x28] sm:$0xff]
  %v2433 = vld [vmem:[%s2426 + $0x30] sm:$0xff]
  %v2434 = vld [vmem:[%s2426 + $0x38] sm:$0xff]
  %2435 = vmatprep.subr.mxu0 %v33
  %2436 = vmatpush1.msra.mxu0 %v32
  %2437 = vmatprep.subr.mxu0 %v41
  %2438 = vmatpush1.msra.mxu0 %v40
  %2439 = vmatprep.subr.mxu0 %v49
  %2440 = vmatpush1.msra.mxu0 %v48
  %2441 = vmatprep.subr.mxu0 %v57
  %2442 = vmatpush1.msra.mxu0 %v56
  %2443 = vmatprep.subr.mxu0 %v65
  %2444 = vmatpush1.msra.mxu0 %v64
  %2445 = vmatprep.subr.mxu0 %v73
  %2446 = vmatpush1.msra.mxu0 %v72
  %2447 = vmatprep.subr.mxu0 %v81
  %2448 = vmatpush1.msra.mxu0 %v80
  %2449 = vmatprep.subr.mxu0 %v89
  %2450 = vmatpush1.msra.mxu0 %v88
  %2451 = vmatprep.subr.mxu0 %v97
  %2452 = vmatpush1.msra.mxu0 %v96
  %2453 = vmatprep.subr.mxu0 %v105
  %2454 = vmatpush1.msra.mxu0 %v104
  %2455 = vmatprep.subr.mxu0 %v113
  %2456 = vmatpush1.msra.mxu0 %v112
  %2457 = vmatprep.subr.mxu0 %v121
  %2458 = vmatpush1.msra.mxu0 %v120
  %2459 = vmatprep.subr.mxu0 %v129
  %2460 = vmatpush1.msra.mxu0 %v128
  %2461 = vmatprep.subr.mxu0 %v137
  %2462 = vmatpush1.msra.mxu0 %v136
  %2463 = vmatprep.subr.mxu0 %v145
  %2464 = vmatpush1.msra.mxu0 %v144
  %2465 = vmatprep.subr.mxu0 %v153
  %2466 = vmatpush1.msra.mxu0 %v152
  %2467 = vmatprep.subr.mxu0 %v161
  %2468 = vmatpush1.msra.mxu0 %v160
  %2469 = vmatprep.subr.mxu0 %v169
  %2470 = vmatpush1.msra.mxu0 %v168
  %2471 = vmatprep.subr.mxu0 %v177
  %2472 = vmatpush1.msra.mxu0 %v176
  %2473 = vmatprep.subr.mxu0 %v185
  %2474 = vmatpush1.msra.mxu0 %v184
  %2475 = vmatprep.subr.mxu0 %v193
  %2476 = vmatpush1.msra.mxu0 %v192
  %2477 = vmatprep.subr.mxu0 %v201
  %2478 = vmatpush1.msra.mxu0 %v200
  %2479 = vmatprep.subr.mxu0 %v209
  %2480 = vmatpush1.msra.mxu0 %v208
  %2481 = vmatprep.subr.mxu0 %v217
  %2482 = vmatpush1.msra.mxu0 %v216
  %2483 = vmatprep.subr.mxu0 %v225
  %2484 = vmatpush1.msra.mxu0 %v224
  %2485 = vmatprep.subr.mxu0 %v233
  %2486 = vmatpush1.msra.mxu0 %v232
  %2487 = vmatprep.subr.mxu0 %v241
  %2488 = vmatpush1.msra.mxu0 %v240
  %2489 = vmatprep.subr.mxu0 %v249
  %2490 = vmatpush1.msra.mxu0 %v248
  %2491 = vmatprep.subr.mxu0 %v257
  %2492 = vmatpush1.msra.mxu0 %v256
  %2493 = vmatprep.subr.mxu0 %v265
  %2494 = vmatpush1.msra.mxu0 %v264
  %2495 = vmatprep.subr.mxu0 %v273
  %2496 = vmatpush1.msra.mxu0 %v272
  %2497 = vmatprep.subr.mxu0 %v281
  %2498 = vmatpush1.msra.mxu0 %v280
  %2499 = vmatprep.mubr.f32.mxu0 %v2423
  %2500 = vmatmul.mubr.f32.gmra.mrb[0].mxu0 %v2422
  %v2501 = vpop.f32.mrb[0].mxu0
  %v2502 = vadd.f32 0.0, %v2501
  %v2503 = vpop.f32.mrb[0].mxu0
  %v2504 = vadd.f32 0.0, %v2503
  %2505 = vdwg.mxu0
  %2506 = vmatprep.subr.mxu0 %v35
  %2507 = vmatpush1.msra.mxu0 %v34
  %2508 = vmatprep.subr.mxu0 %v43
  %2509 = vmatpush1.msra.mxu0 %v42
  %2510 = vmatprep.subr.mxu0 %v51
  %2511 = vmatpush1.msra.mxu0 %v50
  %2512 = vmatprep.subr.mxu0 %v59
  %2513 = vmatpush1.msra.mxu0 %v58
  %2514 = vmatprep.subr.mxu0 %v67
  %2515 = vmatpush1.msra.mxu0 %v66
  %2516 = vmatprep.subr.mxu0 %v75
  %2517 = vmatpush1.msra.mxu0 %v74
  %2518 = vmatprep.subr.mxu0 %v83
  %2519 = vmatpush1.msra.mxu0 %v82
  %2520 = vmatprep.subr.mxu0 %v91
  %2521 = vmatpush1.msra.mxu0 %v90
  %2522 = vmatprep.subr.mxu0 %v99
  %2523 = vmatpush1.msra.mxu0 %v98
  %2524 = vmatprep.subr.mxu0 %v107
  %2525 = vmatpush1.msra.mxu0 %v106
  %2526 = vmatprep.subr.mxu0 %v115
  %2527 = vmatpush1.msra.mxu0 %v114
  %2528 = vmatprep.subr.mxu0 %v123
  %2529 = vmatpush1.msra.mxu0 %v122
  %2530 = vmatprep.subr.mxu0 %v131
  %2531 = vmatpush1.msra.mxu0 %v130
  %2532 = vmatprep.subr.mxu0 %v139
  %2533 = vmatpush1.msra.mxu0 %v138
  %2534 = vmatprep.subr.mxu0 %v147
  %2535 = vmatpush1.msra.mxu0 %v146
  %2536 = vmatprep.subr.mxu0 %v155
  %2537 = vmatpush1.msra.mxu0 %v154
  %2538 = vmatprep.subr.mxu0 %v163
  %2539 = vmatpush1.msra.mxu0 %v162
  %2540 = vmatprep.subr.mxu0 %v171
  %2541 = vmatpush1.msra.mxu0 %v170
  %2542 = vmatprep.subr.mxu0 %v179
  %2543 = vmatpush1.msra.mxu0 %v178
  %2544 = vmatprep.subr.mxu0 %v187
  %2545 = vmatpush1.msra.mxu0 %v186
  %2546 = vmatprep.subr.mxu0 %v195
  %2547 = vmatpush1.msra.mxu0 %v194
  %2548 = vmatprep.subr.mxu0 %v203
  %2549 = vmatpush1.msra.mxu0 %v202
  %2550 = vmatprep.subr.mxu0 %v211
  %2551 = vmatpush1.msra.mxu0 %v210
  %2552 = vmatprep.subr.mxu0 %v219
  %2553 = vmatpush1.msra.mxu0 %v218
  %2554 = vmatprep.subr.mxu0 %v227
  %2555 = vmatpush1.msra.mxu0 %v226
  %2556 = vmatprep.subr.mxu0 %v235
  %2557 = vmatpush1.msra.mxu0 %v234
  %2558 = vmatprep.subr.mxu0 %v243
  %2559 = vmatpush1.msra.mxu0 %v242
  %2560 = vmatprep.subr.mxu0 %v251
  %2561 = vmatpush1.msra.mxu0 %v250
  %2562 = vmatprep.subr.mxu0 %v259
  %2563 = vmatpush1.msra.mxu0 %v258
  %2564 = vmatprep.subr.mxu0 %v267
  %2565 = vmatpush1.msra.mxu0 %v266
  %2566 = vmatprep.subr.mxu0 %v275
  %2567 = vmatpush1.msra.mxu0 %v274
  %2568 = vmatprep.subr.mxu0 %v283
  %2569 = vmatpush1.msra.mxu0 %v282
  %2570 = vmatprep.mubr.f32.mxu0 %v2423
  %2571 = vmatmul.mubr.f32.gmra.mrb[0].mxu0 %v2422
  %v2572 = vpop.f32.mrb[0].mxu0
  %v2573 = vadd.f32 0.0, %v2572
  %v2574 = vpop.f32.mrb[0].mxu0
  %v2575 = vadd.f32 0.0, %v2574
  %2576 = vdwg.mxu0
  %2577 = vmatprep.subr.mxu0 %v37
  %2578 = vmatpush1.msra.mxu0 %v36
  %2579 = vmatprep.subr.mxu0 %v45
  %2580 = vmatpush1.msra.mxu0 %v44
  %2581 = vmatprep.subr.mxu0 %v53
  %2582 = vmatpush1.msra.mxu0 %v52
  %2583 = vmatprep.subr.mxu0 %v61
  %2584 = vmatpush1.msra.mxu0 %v60
  %2585 = vmatprep.subr.mxu0 %v69
  %2586 = vmatpush1.msra.mxu0 %v68
  %2587 = vmatprep.subr.mxu0 %v77
  %2588 = vmatpush1.msra.mxu0 %v76
  %2589 = vmatprep.subr.mxu0 %v85
  %2590 = vmatpush1.msra.mxu0 %v84
  %2591 = vmatprep.subr.mxu0 %v93
  %2592 = vmatpush1.msra.mxu0 %v92
  %2593 = vmatprep.subr.mxu0 %v101
  %2594 = vmatpush1.msra.mxu0 %v100
  %2595 = vmatprep.subr.mxu0 %v109
  %2596 = vmatpush1.msra.mxu0 %v108
  %2597 = vmatprep.subr.mxu0 %v117
  %2598 = vmatpush1.msra.mxu0 %v116
  %2599 = vmatprep.subr.mxu0 %v125
  %2600 = vmatpush1.msra.mxu0 %v124
  %2601 = vmatprep.subr.mxu0 %v133
  %2602 = vmatpush1.msra.mxu0 %v132
  %2603 = vmatprep.subr.mxu0 %v141
  %2604 = vmatpush1.msra.mxu0 %v140
  %2605 = vmatprep.subr.mxu0 %v149
  %2606 = vmatpush1.msra.mxu0 %v148
  %2607 = vmatprep.subr.mxu0 %v157
  %2608 = vmatpush1.msra.mxu0 %v156
  %2609 = vmatprep.subr.mxu0 %v165
  %2610 = vmatpush1.msra.mxu0 %v164
  %2611 = vmatprep.subr.mxu0 %v173
  %2612 = vmatpush1.msra.mxu0 %v172
  %2613 = vmatprep.subr.mxu0 %v181
  %2614 = vmatpush1.msra.mxu0 %v180
  %2615 = vmatprep.subr.mxu0 %v189
  %2616 = vmatpush1.msra.mxu0 %v188
  %2617 = vmatprep.subr.mxu0 %v197
  %2618 = vmatpush1.msra.mxu0 %v196
  %2619 = vmatprep.subr.mxu0 %v205
  %2620 = vmatpush1.msra.mxu0 %v204
  %2621 = vmatprep.subr.mxu0 %v213
  %2622 = vmatpush1.msra.mxu0 %v212
  %2623 = vmatprep.subr.mxu0 %v221
  %2624 = vmatpush1.msra.mxu0 %v220
  %2625 = vmatprep.subr.mxu0 %v229
  %2626 = vmatpush1.msra.mxu0 %v228
  %2627 = vmatprep.subr.mxu0 %v237
  %2628 = vmatpush1.msra.mxu0 %v236
  %2629 = vmatprep.subr.mxu0 %v245
  %2630 = vmatpush1.msra.mxu0 %v244
  %2631 = vmatprep.subr.mxu0 %v253
  %2632 = vmatpush1.msra.mxu0 %v252
  %2633 = vmatprep.subr.mxu0 %v261
  %2634 = vmatpush1.msra.mxu0 %v260
  %2635 = vmatprep.subr.mxu0 %v269
  %2636 = vmatpush1.msra.mxu0 %v268
  %2637 = vmatprep.subr.mxu0 %v277
  %2638 = vmatpush1.msra.mxu0 %v276
  %2639 = vmatprep.subr.mxu0 %v285
  %2640 = vmatpush1.msra.mxu0 %v284
  %2641 = vmatprep.mubr.f32.mxu0 %v2423
  %2642 = vmatmul.mubr.f32.gmra.mrb[0].mxu0 %v2422
  %v2643 = vpop.f32.mrb[0].mxu0
  %v2644 = vadd.f32 0.0, %v2643
  %v2645 = vpop.f32.mrb[0].mxu0
  %v2646 = vadd.f32 0.0, %v2645
  %2647 = vdwg.mxu0
  %2648 = vmatprep.subr.mxu0 %v39
  %2649 = vmatpush1.msra.mxu0 %v38
  %2650 = vmatprep.subr.mxu0 %v47
  %2651 = vmatpush1.msra.mxu0 %v46
  %2652 = vmatprep.subr.mxu0 %v55
  %2653 = vmatpush1.msra.mxu0 %v54
  %2654 = vmatprep.subr.mxu0 %v63
  %2655 = vmatpush1.msra.mxu0 %v62
  %2656 = vmatprep.subr.mxu0 %v71
  %2657 = vmatpush1.msra.mxu0 %v70
  %2658 = vmatprep.subr.mxu0 %v79
  %2659 = vmatpush1.msra.mxu0 %v78
  %2660 = vmatprep.subr.mxu0 %v87
  %2661 = vmatpush1.msra.mxu0 %v86
  %2662 = vmatprep.subr.mxu0 %v95
  %2663 = vmatpush1.msra.mxu0 %v94
  %2664 = vmatprep.subr.mxu0 %v103
  %2665 = vmatpush1.msra.mxu0 %v102
  %2666 = vmatprep.subr.mxu0 %v111
  %2667 = vmatpush1.msra.mxu0 %v110
  %2668 = vmatprep.subr.mxu0 %v119
  %2669 = vmatpush1.msra.mxu0 %v118
  %2670 = vmatprep.subr.mxu0 %v127
  %2671 = vmatpush1.msra.mxu0 %v126
  %2672 = vmatprep.subr.mxu0 %v135
  %2673 = vmatpush1.msra.mxu0 %v134
  %2674 = vmatprep.subr.mxu0 %v143
  %2675 = vmatpush1.msra.mxu0 %v142
  %2676 = vmatprep.subr.mxu0 %v151
  %2677 = vmatpush1.msra.mxu0 %v150
  %2678 = vmatprep.subr.mxu0 %v159
  %2679 = vmatpush1.msra.mxu0 %v158
  %2680 = vmatprep.subr.mxu0 %v167
  %2681 = vmatpush1.msra.mxu0 %v166
  %2682 = vmatprep.subr.mxu0 %v175
  %2683 = vmatpush1.msra.mxu0 %v174
  %2684 = vmatprep.subr.mxu0 %v183
  %2685 = vmatpush1.msra.mxu0 %v182
  %2686 = vmatprep.subr.mxu0 %v191
  %2687 = vmatpush1.msra.mxu0 %v190
  %2688 = vmatprep.subr.mxu0 %v199
  %2689 = vmatpush1.msra.mxu0 %v198
  %2690 = vmatprep.subr.mxu0 %v207
  %2691 = vmatpush1.msra.mxu0 %v206
  %2692 = vmatprep.subr.mxu0 %v215
  %2693 = vmatpush1.msra.mxu0 %v214
  %2694 = vmatprep.subr.mxu0 %v223
  %2695 = vmatpush1.msra.mxu0 %v222
  %2696 = vmatprep.subr.mxu0 %v231
  %2697 = vmatpush1.msra.mxu0 %v230
  %2698 = vmatprep.subr.mxu0 %v239
  %2699 = vmatpush1.msra.mxu0 %v238
  %2700 = vmatprep.subr.mxu0 %v247
  %2701 = vmatpush1.msra.mxu0 %v246
  %2702 = vmatprep.subr.mxu0 %v255
  %2703 = vmatpush1.msra.mxu0 %v254
  %2704 = vmatprep.subr.mxu0 %v263
  %2705 = vmatpush1.msra.mxu0 %v262
  %2706 = vmatprep.subr.mxu0 %v271
  %2707 = vmatpush1.msra.mxu0 %v270
  %2708 = vmatprep.subr.mxu0 %v279
  %2709 = vmatpush1.msra.mxu0 %v278
  %2710 = vmatprep.subr.mxu0 %v287
  %2711 = vmatpush1.msra.mxu0 %v286
  %2712 = vmatprep.mubr.f32.mxu0 %v2423
  %2713 = vmatmul.mubr.f32.gmra.mrb[0].mxu0 %v2422
  %v2714 = vpop.f32.mrb[0].mxu0
  %v2715 = vadd.f32 0.0, %v2714
  %v2716 = vpop.f32.mrb[0].mxu0
  %v2717 = vadd.f32 0.0, %v2716
  %2718 = vdwg.mxu0
  %v2719 = vadd.f32 %v2427, %v2502
  %v2720 = vadd.f32 %v2428, %v2504
  %v2721 = vadd.f32 %v2429, %v2573
  %v2722 = vadd.f32 %v2430, %v2575
  %v2723 = vadd.f32 %v2431, %v2644
  %v2724 = vadd.f32 %v2432, %v2646
  %v2725 = vadd.f32 %v2433, %v2715
  %v2726 = vadd.f32 %v2434, %v2717
  %v2727 = vxor.u32 %v2719, 2147483648
  %v2728 = vxor.u32 %v2720, 2147483648
  %v2729 = vxor.u32 %v2721, 2147483648
  %v2730 = vxor.u32 %v2722, 2147483648
  %v2731 = vxor.u32 %v2723, 2147483648
  %v2732 = vxor.u32 %v2724, 2147483648
  %v2733 = vmul.f32 %v2727, 1.442695
  %v2734 = vpow.pop %v2733
  %v2735 = vmul.f32 %v2728, 1.442695
  %v2736 = vpow.pop %v2735
  %v2737 = vmul.f32 %v2729, 1.442695
  %v2738 = vpow.pop %v2737
  %v2739 = vmul.f32 %v2730, 1.442695
  %v2740 = vpow.pop %v2739
  %v2741 = vmul.f32 %v2731, 1.442695
  %v2742 = vpow.pop %v2741
  %v2743 = vmul.f32 %v2732, 1.442695
  %v2744 = vpow.pop %v2743
  %v2745 = vadd.f32 %v2734, 1.0
  %v2746 = vadd.f32 %v2736, 1.0
  %v2747 = vadd.f32 %v2738, 1.0
  %v2748 = vadd.f32 %v2740, 1.0
  %v2749 = vadd.f32 %v2742, 1.0
  %v2750 = vadd.f32 %v2744, 1.0
  %v2751 = vrcp.pop %v2745
  %v2752 = vmul.f32 1.0, %v2751
  %v2753 = vrcp.pop %v2746
  %v2754 = vmul.f32 1.0, %v2753
  %v2755 = vrcp.pop %v2747
  %v2756 = vmul.f32 1.0, %v2755
  %v2757 = vrcp.pop %v2748
  %v2758 = vmul.f32 1.0, %v2757
  %v2759 = vrcp.pop %v2749
  %v2760 = vmul.f32 1.0, %v2759
  %v2761 = vrcp.pop %v2750
  %v2762 = vmul.f32 1.0, %v2761
  %v2763 = vtanh.pop %v2725
  %v2764 = vtanh.pop %v2726
  %v2765 = vmul.f32 %v2756, %v2424
  %v2766 = vmul.f32 %v2758, %v2425
  %v2767 = vmul.f32 %v2752, %v2763
  %v2768 = vmul.f32 %v2754, %v2764
  %v2769 = vadd.f32 %v2765, %v2767
  %v2770 = vadd.f32 %v2766, %v2768
  %v2771 = vtanh.pop %v2769
  %v2772 = vtanh.pop %v2770
  %v2773 = vmul.f32 %v2760, %v2771
  %v2774 = vmul.f32 %v2762, %v2772
  %v2775 = vsel %vm628, 6, 1
  %v2776 = vsel %vm629, 6, 1
  %vm2777 = vcmp.lt.s32.totalorder %v2775, %v634
  %vm2778 = vcmp.lt.s32.totalorder %v2776, %v634
  %v2779 = vsel %vm2777, %v2773, %v2422
  %v2780 = vsel %vm2778, %v2774, %v2423
  %v2781 = vsel %vm2777, %v2769, %v2424
  %v2782 = vsel %vm2778, %v2770, %v2425
  %s2783 = scalar_lea.vmem %s0, 448
  %v2784 = vld [vmem:[%s2783] sm:$0xff]
  %v2785 = vld [vmem:[%s2783 + $0x8] sm:$0xff]
  %v2786 = vld [vmem:[%s2783 + $0x10] sm:$0xff]
  %v2787 = vld [vmem:[%s2783 + $0x18] sm:$0xff]
  %v2788 = vld [vmem:[%s2783 + $0x20] sm:$0xff]
  %v2789 = vld [vmem:[%s2783 + $0x28] sm:$0xff]
  %v2790 = vld [vmem:[%s2783 + $0x30] sm:$0xff]
  %v2791 = vld [vmem:[%s2783 + $0x38] sm:$0xff]
  %2792 = vmatprep.subr.mxu0 %v33
  %2793 = vmatpush1.msra.mxu0 %v32
  %2794 = vmatprep.subr.mxu0 %v41
  %2795 = vmatpush1.msra.mxu0 %v40
  %2796 = vmatprep.subr.mxu0 %v49
  %2797 = vmatpush1.msra.mxu0 %v48
  %2798 = vmatprep.subr.mxu0 %v57
  %2799 = vmatpush1.msra.mxu0 %v56
  %2800 = vmatprep.subr.mxu0 %v65
  %2801 = vmatpush1.msra.mxu0 %v64
  %2802 = vmatprep.subr.mxu0 %v73
  %2803 = vmatpush1.msra.mxu0 %v72
  %2804 = vmatprep.subr.mxu0 %v81
  %2805 = vmatpush1.msra.mxu0 %v80
  %2806 = vmatprep.subr.mxu0 %v89
  %2807 = vmatpush1.msra.mxu0 %v88
  %2808 = vmatprep.subr.mxu0 %v97
  %2809 = vmatpush1.msra.mxu0 %v96
  %2810 = vmatprep.subr.mxu0 %v105
  %2811 = vmatpush1.msra.mxu0 %v104
  %2812 = vmatprep.subr.mxu0 %v113
  %2813 = vmatpush1.msra.mxu0 %v112
  %2814 = vmatprep.subr.mxu0 %v121
  %2815 = vmatpush1.msra.mxu0 %v120
  %2816 = vmatprep.subr.mxu0 %v129
  %2817 = vmatpush1.msra.mxu0 %v128
  %2818 = vmatprep.subr.mxu0 %v137
  %2819 = vmatpush1.msra.mxu0 %v136
  %2820 = vmatprep.subr.mxu0 %v145
  %2821 = vmatpush1.msra.mxu0 %v144
  %2822 = vmatprep.subr.mxu0 %v153
  %2823 = vmatpush1.msra.mxu0 %v152
  %2824 = vmatprep.subr.mxu0 %v161
  %2825 = vmatpush1.msra.mxu0 %v160
  %2826 = vmatprep.subr.mxu0 %v169
  %2827 = vmatpush1.msra.mxu0 %v168
  %2828 = vmatprep.subr.mxu0 %v177
  %2829 = vmatpush1.msra.mxu0 %v176
  %2830 = vmatprep.subr.mxu0 %v185
  %2831 = vmatpush1.msra.mxu0 %v184
  %2832 = vmatprep.subr.mxu0 %v193
  %2833 = vmatpush1.msra.mxu0 %v192
  %2834 = vmatprep.subr.mxu0 %v201
  %2835 = vmatpush1.msra.mxu0 %v200
  %2836 = vmatprep.subr.mxu0 %v209
  %2837 = vmatpush1.msra.mxu0 %v208
  %2838 = vmatprep.subr.mxu0 %v217
  %2839 = vmatpush1.msra.mxu0 %v216
  %2840 = vmatprep.subr.mxu0 %v225
  %2841 = vmatpush1.msra.mxu0 %v224
  %2842 = vmatprep.subr.mxu0 %v233
  %2843 = vmatpush1.msra.mxu0 %v232
  %2844 = vmatprep.subr.mxu0 %v241
  %2845 = vmatpush1.msra.mxu0 %v240
  %2846 = vmatprep.subr.mxu0 %v249
  %2847 = vmatpush1.msra.mxu0 %v248
  %2848 = vmatprep.subr.mxu0 %v257
  %2849 = vmatpush1.msra.mxu0 %v256
  %2850 = vmatprep.subr.mxu0 %v265
  %2851 = vmatpush1.msra.mxu0 %v264
  %2852 = vmatprep.subr.mxu0 %v273
  %2853 = vmatpush1.msra.mxu0 %v272
  %2854 = vmatprep.subr.mxu0 %v281
  %2855 = vmatpush1.msra.mxu0 %v280
  %2856 = vmatprep.mubr.f32.mxu0 %v2780
  %2857 = vmatmul.mubr.f32.gmra.mrb[0].mxu0 %v2779
  %v2858 = vpop.f32.mrb[0].mxu0
  %v2859 = vadd.f32 0.0, %v2858
  %v2860 = vpop.f32.mrb[0].mxu0
  %v2861 = vadd.f32 0.0, %v2860
  %2862 = vdwg.mxu0
  %2863 = vmatprep.subr.mxu0 %v35
  %2864 = vmatpush1.msra.mxu0 %v34
  %2865 = vmatprep.subr.mxu0 %v43
  %2866 = vmatpush1.msra.mxu0 %v42
  %2867 = vmatprep.subr.mxu0 %v51
  %2868 = vmatpush1.msra.mxu0 %v50
  %2869 = vmatprep.subr.mxu0 %v59
  %2870 = vmatpush1.msra.mxu0 %v58
  %2871 = vmatprep.subr.mxu0 %v67
  %2872 = vmatpush1.msra.mxu0 %v66
  %2873 = vmatprep.subr.mxu0 %v75
  %2874 = vmatpush1.msra.mxu0 %v74
  %2875 = vmatprep.subr.mxu0 %v83
  %2876 = vmatpush1.msra.mxu0 %v82
  %2877 = vmatprep.subr.mxu0 %v91
  %2878 = vmatpush1.msra.mxu0 %v90
  %2879 = vmatprep.subr.mxu0 %v99
  %2880 = vmatpush1.msra.mxu0 %v98
  %2881 = vmatprep.subr.mxu0 %v107
  %2882 = vmatpush1.msra.mxu0 %v106
  %2883 = vmatprep.subr.mxu0 %v115
  %2884 = vmatpush1.msra.mxu0 %v114
  %2885 = vmatprep.subr.mxu0 %v123
  %2886 = vmatpush1.msra.mxu0 %v122
  %2887 = vmatprep.subr.mxu0 %v131
  %2888 = vmatpush1.msra.mxu0 %v130
  %2889 = vmatprep.subr.mxu0 %v139
  %2890 = vmatpush1.msra.mxu0 %v138
  %2891 = vmatprep.subr.mxu0 %v147
  %2892 = vmatpush1.msra.mxu0 %v146
  %2893 = vmatprep.subr.mxu0 %v155
  %2894 = vmatpush1.msra.mxu0 %v154
  %2895 = vmatprep.subr.mxu0 %v163
  %2896 = vmatpush1.msra.mxu0 %v162
  %2897 = vmatprep.subr.mxu0 %v171
  %2898 = vmatpush1.msra.mxu0 %v170
  %2899 = vmatprep.subr.mxu0 %v179
  %2900 = vmatpush1.msra.mxu0 %v178
  %2901 = vmatprep.subr.mxu0 %v187
  %2902 = vmatpush1.msra.mxu0 %v186
  %2903 = vmatprep.subr.mxu0 %v195
  %2904 = vmatpush1.msra.mxu0 %v194
  %2905 = vmatprep.subr.mxu0 %v203
  %2906 = vmatpush1.msra.mxu0 %v202
  %2907 = vmatprep.subr.mxu0 %v211
  %2908 = vmatpush1.msra.mxu0 %v210
  %2909 = vmatprep.subr.mxu0 %v219
  %2910 = vmatpush1.msra.mxu0 %v218
  %2911 = vmatprep.subr.mxu0 %v227
  %2912 = vmatpush1.msra.mxu0 %v226
  %2913 = vmatprep.subr.mxu0 %v235
  %2914 = vmatpush1.msra.mxu0 %v234
  %2915 = vmatprep.subr.mxu0 %v243
  %2916 = vmatpush1.msra.mxu0 %v242
  %2917 = vmatprep.subr.mxu0 %v251
  %2918 = vmatpush1.msra.mxu0 %v250
  %2919 = vmatprep.subr.mxu0 %v259
  %2920 = vmatpush1.msra.mxu0 %v258
  %2921 = vmatprep.subr.mxu0 %v267
  %2922 = vmatpush1.msra.mxu0 %v266
  %2923 = vmatprep.subr.mxu0 %v275
  %2924 = vmatpush1.msra.mxu0 %v274
  %2925 = vmatprep.subr.mxu0 %v283
  %2926 = vmatpush1.msra.mxu0 %v282
  %2927 = vmatprep.mubr.f32.mxu0 %v2780
  %2928 = vmatmul.mubr.f32.gmra.mrb[0].mxu0 %v2779
  %v2929 = vpop.f32.mrb[0].mxu0
  %v2930 = vadd.f32 0.0, %v2929
  %v2931 = vpop.f32.mrb[0].mxu0
  %v2932 = vadd.f32 0.0, %v2931
  %2933 = vdwg.mxu0
  %2934 = vmatprep.subr.mxu0 %v37
  %2935 = vmatpush1.msra.mxu0 %v36
  %2936 = vmatprep.subr.mxu0 %v45
  %2937 = vmatpush1.msra.mxu0 %v44
  %2938 = vmatprep.subr.mxu0 %v53
  %2939 = vmatpush1.msra.mxu0 %v52
  %2940 = vmatprep.subr.mxu0 %v61
  %2941 = vmatpush1.msra.mxu0 %v60
  %2942 = vmatprep.subr.mxu0 %v69
  %2943 = vmatpush1.msra.mxu0 %v68
  %2944 = vmatprep.subr.mxu0 %v77
  %2945 = vmatpush1.msra.mxu0 %v76
  %2946 = vmatprep.subr.mxu0 %v85
  %2947 = vmatpush1.msra.mxu0 %v84
  %2948 = vmatprep.subr.mxu0 %v93
  %2949 = vmatpush1.msra.mxu0 %v92
  %2950 = vmatprep.subr.mxu0 %v101
  %2951 = vmatpush1.msra.mxu0 %v100
  %2952 = vmatprep.subr.mxu0 %v109
  %2953 = vmatpush1.msra.mxu0 %v108
  %2954 = vmatprep.subr.mxu0 %v117
  %2955 = vmatpush1.msra.mxu0 %v116
  %2956 = vmatprep.subr.mxu0 %v125
  %2957 = vmatpush1.msra.mxu0 %v124
  %2958 = vmatprep.subr.mxu0 %v133
  %2959 = vmatpush1.msra.mxu0 %v132
  %2960 = vmatprep.subr.mxu0 %v141
  %2961 = vmatpush1.msra.mxu0 %v140
  %2962 = vmatprep.subr.mxu0 %v149
  %2963 = vmatpush1.msra.mxu0 %v148
  %2964 = vmatprep.subr.mxu0 %v157
  %2965 = vmatpush1.msra.mxu0 %v156
  %2966 = vmatprep.subr.mxu0 %v165
  %2967 = vmatpush1.msra.mxu0 %v164
  %2968 = vmatprep.subr.mxu0 %v173
  %2969 = vmatpush1.msra.mxu0 %v172
  %2970 = vmatprep.subr.mxu0 %v181
  %2971 = vmatpush1.msra.mxu0 %v180
  %2972 = vmatprep.subr.mxu0 %v189
  %2973 = vmatpush1.msra.mxu0 %v188
  %2974 = vmatprep.subr.mxu0 %v197
  %2975 = vmatpush1.msra.mxu0 %v196
  %2976 = vmatprep.subr.mxu0 %v205
  %2977 = vmatpush1.msra.mxu0 %v204
  %2978 = vmatprep.subr.mxu0 %v213
  %2979 = vmatpush1.msra.mxu0 %v212
  %2980 = vmatprep.subr.mxu0 %v221
  %2981 = vmatpush1.msra.mxu0 %v220
  %2982 = vmatprep.subr.mxu0 %v229
  %2983 = vmatpush1.msra.mxu0 %v228
  %2984 = vmatprep.subr.mxu0 %v237
  %2985 = vmatpush1.msra.mxu0 %v236
  %2986 = vmatprep.subr.mxu0 %v245
  %2987 = vmatpush1.msra.mxu0 %v244
  %2988 = vmatprep.subr.mxu0 %v253
  %2989 = vmatpush1.msra.mxu0 %v252
  %2990 = vmatprep.subr.mxu0 %v261
  %2991 = vmatpush1.msra.mxu0 %v260
  %2992 = vmatprep.subr.mxu0 %v269
  %2993 = vmatpush1.msra.mxu0 %v268
  %2994 = vmatprep.subr.mxu0 %v277
  %2995 = vmatpush1.msra.mxu0 %v276
  %2996 = vmatprep.subr.mxu0 %v285
  %2997 = vmatpush1.msra.mxu0 %v284
  %2998 = vmatprep.mubr.f32.mxu0 %v2780
  %2999 = vmatmul.mubr.f32.gmra.mrb[0].mxu0 %v2779
  %v3000 = vpop.f32.mrb[0].mxu0
  %v3001 = vadd.f32 0.0, %v3000
  %v3002 = vpop.f32.mrb[0].mxu0
  %v3003 = vadd.f32 0.0, %v3002
  %3004 = vdwg.mxu0
  %3005 = vmatprep.subr.mxu0 %v39
  %3006 = vmatpush1.msra.mxu0 %v38
  %3007 = vmatprep.subr.mxu0 %v47
  %3008 = vmatpush1.msra.mxu0 %v46
  %3009 = vmatprep.subr.mxu0 %v55
  %3010 = vmatpush1.msra.mxu0 %v54
  %3011 = vmatprep.subr.mxu0 %v63
  %3012 = vmatpush1.msra.mxu0 %v62
  %3013 = vmatprep.subr.mxu0 %v71
  %3014 = vmatpush1.msra.mxu0 %v70
  %3015 = vmatprep.subr.mxu0 %v79
  %3016 = vmatpush1.msra.mxu0 %v78
  %3017 = vmatprep.subr.mxu0 %v87
  %3018 = vmatpush1.msra.mxu0 %v86
  %3019 = vmatprep.subr.mxu0 %v95
  %3020 = vmatpush1.msra.mxu0 %v94
  %3021 = vmatprep.subr.mxu0 %v103
  %3022 = vmatpush1.msra.mxu0 %v102
  %3023 = vmatprep.subr.mxu0 %v111
  %3024 = vmatpush1.msra.mxu0 %v110
  %3025 = vmatprep.subr.mxu0 %v119
  %3026 = vmatpush1.msra.mxu0 %v118
  %3027 = vmatprep.subr.mxu0 %v127
  %3028 = vmatpush1.msra.mxu0 %v126
  %3029 = vmatprep.subr.mxu0 %v135
  %3030 = vmatpush1.msra.mxu0 %v134
  %3031 = vmatprep.subr.mxu0 %v143
  %3032 = vmatpush1.msra.mxu0 %v142
  %3033 = vmatprep.subr.mxu0 %v151
  %3034 = vmatpush1.msra.mxu0 %v150
  %3035 = vmatprep.subr.mxu0 %v159
  %3036 = vmatpush1.msra.mxu0 %v158
  %3037 = vmatprep.subr.mxu0 %v167
  %3038 = vmatpush1.msra.mxu0 %v166
  %3039 = vmatprep.subr.mxu0 %v175
  %3040 = vmatpush1.msra.mxu0 %v174
  %3041 = vmatprep.subr.mxu0 %v183
  %3042 = vmatpush1.msra.mxu0 %v182
  %3043 = vmatprep.subr.mxu0 %v191
  %3044 = vmatpush1.msra.mxu0 %v190
  %3045 = vmatprep.subr.mxu0 %v199
  %3046 = vmatpush1.msra.mxu0 %v198
  %3047 = vmatprep.subr.mxu0 %v207
  %3048 = vmatpush1.msra.mxu0 %v206
  %3049 = vmatprep.subr.mxu0 %v215
  %3050 = vmatpush1.msra.mxu0 %v214
  %3051 = vmatprep.subr.mxu0 %v223
  %3052 = vmatpush1.msra.mxu0 %v222
  %3053 = vmatprep.subr.mxu0 %v231
  %3054 = vmatpush1.msra.mxu0 %v230
  %3055 = vmatprep.subr.mxu0 %v239
  %3056 = vmatpush1.msra.mxu0 %v238
  %3057 = vmatprep.subr.mxu0 %v247
  %3058 = vmatpush1.msra.mxu0 %v246
  %3059 = vmatprep.subr.mxu0 %v255
  %3060 = vmatpush1.msra.mxu0 %v254
  %3061 = vmatprep.subr.mxu0 %v263
  %3062 = vmatpush1.msra.mxu0 %v262
  %3063 = vmatprep.subr.mxu0 %v271
  %3064 = vmatpush1.msra.mxu0 %v270
  %3065 = vmatprep.subr.mxu0 %v279
  %3066 = vmatpush1.msra.mxu0 %v278
  %3067 = vmatprep.subr.mxu0 %v287
  %3068 = vmatpush1.msra.mxu0 %v286
  %3069 = vmatprep.mubr.f32.mxu0 %v2780
  %3070 = vmatmul.mubr.f32.gmra.mrb[0].mxu0 %v2779
  %v3071 = vpop.f32.mrb[0].mxu0
  %v3072 = vadd.f32 0.0, %v3071
  %v3073 = vpop.f32.mrb[0].mxu0
  %v3074 = vadd.f32 0.0, %v3073
  %3075 = vdwg.mxu0
  %v3076 = vadd.f32 %v2784, %v2859
  %v3077 = vadd.f32 %v2785, %v2861
  %v3078 = vadd.f32 %v2786, %v2930
  %v3079 = vadd.f32 %v2787, %v2932
  %v3080 = vadd.f32 %v2788, %v3001
  %v3081 = vadd.f32 %v2789, %v3003
  %v3082 = vadd.f32 %v2790, %v3072
  %v3083 = vadd.f32 %v2791, %v3074
  %v3084 = vxor.u32 %v3076, 2147483648
  %v3085 = vxor.u32 %v3077, 2147483648
  %v3086 = vxor.u32 %v3078, 2147483648
  %v3087 = vxor.u32 %v3079, 2147483648
  %v3088 = vxor.u32 %v3080, 2147483648
  %v3089 = vxor.u32 %v3081, 2147483648
  %v3090 = vmul.f32 %v3084, 1.442695
  %v3091 = vpow.pop %v3090
  %v3092 = vmul.f32 %v3085, 1.442695
  %v3093 = vpow.pop %v3092
  %v3094 = vmul.f32 %v3086, 1.442695
  %v3095 = vpow.pop %v3094
  %v3096 = vmul.f32 %v3087, 1.442695
  %v3097 = vpow.pop %v3096
  %v3098 = vmul.f32 %v3088, 1.442695
  %v3099 = vpow.pop %v3098
  %v3100 = vmul.f32 %v3089, 1.442695
  %v3101 = vpow.pop %v3100
  %v3102 = vadd.f32 %v3091, 1.0
  %v3103 = vadd.f32 %v3093, 1.0
  %v3104 = vadd.f32 %v3095, 1.0
  %v3105 = vadd.f32 %v3097, 1.0
  %v3106 = vadd.f32 %v3099, 1.0
  %v3107 = vadd.f32 %v3101, 1.0
  %v3108 = vrcp.pop %v3102
  %v3109 = vmul.f32 1.0, %v3108
  %v3110 = vrcp.pop %v3103
  %v3111 = vmul.f32 1.0, %v3110
  %v3112 = vrcp.pop %v3104
  %v3113 = vmul.f32 1.0, %v3112
  %v3114 = vrcp.pop %v3105
  %v3115 = vmul.f32 1.0, %v3114
  %v3116 = vrcp.pop %v3106
  %v3117 = vmul.f32 1.0, %v3116
  %v3118 = vrcp.pop %v3107
  %v3119 = vmul.f32 1.0, %v3118
  %v3120 = vtanh.pop %v3082
  %v3121 = vtanh.pop %v3083
  %v3122 = vmul.f32 %v3113, %v2781
  %v3123 = vmul.f32 %v3115, %v2782
  %v3124 = vmul.f32 %v3109, %v3120
  %v3125 = vmul.f32 %v3111, %v3121
  %v3126 = vadd.f32 %v3122, %v3124
  %v3127 = vadd.f32 %v3123, %v3125
  %v3128 = vtanh.pop %v3126
  %v3129 = vtanh.pop %v3127
  %v3130 = vmul.f32 %v3117, %v3128
  %v3131 = vmul.f32 %v3119, %v3129
  %v3132 = vsel %vm628, 7, 0
  %v3133 = vsel %vm629, 7, 0
  %vm3134 = vcmp.lt.s32.totalorder %v3132, %v634
  %vm3135 = vcmp.lt.s32.totalorder %v3133, %v634
  %v3136 = vsel %vm3134, %v3130, %v2779
  %v3137 = vsel %vm3135, %v3131, %v2780
  %v3138 = vld [vmem:[%s3] sm:$0xff]
  %v3139 = vld [vmem:[%s3 + $0x8] sm:$0xff]
  %v3140 = vld [vmem:[%s3 + $0x10] sm:$0xff]
  %v3141 = vld [vmem:[%s3 + $0x18] sm:$0xff]
  %v3142 = vld [vmem:[%s3 + $0x20] sm:$0xff]
  %v3143 = vld [vmem:[%s3 + $0x28] sm:$0xff]
  %v3144 = vld [vmem:[%s3 + $0x30] sm:$0xff]
  %v3145 = vld [vmem:[%s3 + $0x38] sm:$0xff]
  %v3146 = vld [vmem:[%s3 + $0x40] sm:$0xff]
  %v3147 = vld [vmem:[%s3 + $0x48] sm:$0xff]
  %v3148 = vld [vmem:[%s3 + $0x50] sm:$0xff]
  %v3149 = vld [vmem:[%s3 + $0x58] sm:$0xff]
  %v3150 = vld [vmem:[%s3 + $0x60] sm:$0xff]
  %v3151 = vld [vmem:[%s3 + $0x68] sm:$0xff]
  %v3152 = vld [vmem:[%s3 + $0x70] sm:$0xff]
  %v3153 = vld [vmem:[%s3 + $0x78] sm:$0xff]
  %v3154 = vld [vmem:[%s3 + $0x80] sm:$0xff]
  %v3155 = vld [vmem:[%s3 + $0x88] sm:$0xff]
  %v3156 = vld [vmem:[%s3 + $0x90] sm:$0xff]
  %v3157 = vld [vmem:[%s3 + $0x98] sm:$0xff]
  %v3158 = vld [vmem:[%s3 + $0xa0] sm:$0xff]
  %v3159 = vld [vmem:[%s3 + $0xa8] sm:$0xff]
  %v3160 = vld [vmem:[%s3 + $0xb0] sm:$0xff]
  %v3161 = vld [vmem:[%s3 + $0xb8] sm:$0xff]
  %v3162 = vld [vmem:[%s3 + $0xc0] sm:$0xff]
  %v3163 = vld [vmem:[%s3 + $0xc8] sm:$0xff]
  %v3164 = vld [vmem:[%s3 + $0xd0] sm:$0xff]
  %v3165 = vld [vmem:[%s3 + $0xd8] sm:$0xff]
  %v3166 = vld [vmem:[%s3 + $0xe0] sm:$0xff]
  %v3167 = vld [vmem:[%s3 + $0xe8] sm:$0xff]
  %v3168 = vld [vmem:[%s3 + $0xf0] sm:$0xff]
  %v3169 = vld [vmem:[%s3 + $0xf8] sm:$0xff]
  %v3170 = vld [vmem:[%s4] sm:$0x1]
  %v3172 = vlaneseq
  %v3173 = vshrl.u32 %v3172, 7
  %v3174 = vsub.s32 0, %v3173
  %v3175 = vrot.slane %v3170, %v3174
  %3177 = vmatprep.subr.mxu0 0.0
  %3178 = vmatpush1.msra.mxu0 %v3138
  %3179 = vmatprep.subr.mxu0 0.0
  %3180 = vmatpush1.msra.mxu0 %v3139
  %3181 = vmatprep.subr.mxu0 0.0
  %3182 = vmatpush1.msra.mxu0 %v3140
  %3183 = vmatprep.subr.mxu0 0.0
  %3184 = vmatpush1.msra.mxu0 %v3141
  %3185 = vmatprep.subr.mxu0 0.0
  %3186 = vmatpush1.msra.mxu0 %v3142
  %3187 = vmatprep.subr.mxu0 0.0
  %3188 = vmatpush1.msra.mxu0 %v3143
  %3189 = vmatprep.subr.mxu0 0.0
  %3190 = vmatpush1.msra.mxu0 %v3144
  %3191 = vmatprep.subr.mxu0 0.0
  %3192 = vmatpush1.msra.mxu0 %v3145
  %3193 = vmatprep.subr.mxu0 0.0
  %3194 = vmatpush1.msra.mxu0 %v3146
  %3195 = vmatprep.subr.mxu0 0.0
  %3196 = vmatpush1.msra.mxu0 %v3147
  %3197 = vmatprep.subr.mxu0 0.0
  %3198 = vmatpush1.msra.mxu0 %v3148
  %3199 = vmatprep.subr.mxu0 0.0
  %3200 = vmatpush1.msra.mxu0 %v3149
  %3201 = vmatprep.subr.mxu0 0.0
  %3202 = vmatpush1.msra.mxu0 %v3150
  %3203 = vmatprep.subr.mxu0 0.0
  %3204 = vmatpush1.msra.mxu0 %v3151
  %3205 = vmatprep.subr.mxu0 0.0
  %3206 = vmatpush1.msra.mxu0 %v3152
  %3207 = vmatprep.subr.mxu0 0.0
  %3208 = vmatpush1.msra.mxu0 %v3153
  %3209 = vmatprep.subr.mxu0 0.0
  %3210 = vmatpush1.msra.mxu0 %v3154
  %3211 = vmatprep.subr.mxu0 0.0
  %3212 = vmatpush1.msra.mxu0 %v3155
  %3213 = vmatprep.subr.mxu0 0.0
  %3214 = vmatpush1.msra.mxu0 %v3156
  %3215 = vmatprep.subr.mxu0 0.0
  %3216 = vmatpush1.msra.mxu0 %v3157
  %3217 = vmatprep.subr.mxu0 0.0
  %3218 = vmatpush1.msra.mxu0 %v3158
  %3219 = vmatprep.subr.mxu0 0.0
  %3220 = vmatpush1.msra.mxu0 %v3159
  %3221 = vmatprep.subr.mxu0 0.0
  %3222 = vmatpush1.msra.mxu0 %v3160
  %3223 = vmatprep.subr.mxu0 0.0
  %3224 = vmatpush1.msra.mxu0 %v3161
  %3225 = vmatprep.subr.mxu0 0.0
  %3226 = vmatpush1.msra.mxu0 %v3162
  %3227 = vmatprep.subr.mxu0 0.0
  %3228 = vmatpush1.msra.mxu0 %v3163
  %3229 = vmatprep.subr.mxu0 0.0
  %3230 = vmatpush1.msra.mxu0 %v3164
  %3231 = vmatprep.subr.mxu0 0.0
  %3232 = vmatpush1.msra.mxu0 %v3165
  %3233 = vmatprep.subr.mxu0 0.0
  %3234 = vmatpush1.msra.mxu0 %v3166
  %3235 = vmatprep.subr.mxu0 0.0
  %3236 = vmatpush1.msra.mxu0 %v3167
  %3237 = vmatprep.subr.mxu0 0.0
  %3238 = vmatpush1.msra.mxu0 %v3168
  %3239 = vmatprep.subr.mxu0 0.0
  %3240 = vmatpush1.msra.mxu0 %v3169
  %3241 = vmatprep.mubr.f32.mxu0 %v3137
  %3242 = vmatmul.mubr.f32.gmra.mrb[0].mxu0 %v3136
  %v3243 = vpop.f32.mrb[0].mxu0
  %v3244 = vadd.f32 %v3175, %v3243
  %v3245 = vpop.f32.mrb[0].mxu0
  %3246 = vdwg.mxu0
  %3247 = vst [vmem:[%s5] sm:$0xff] %v3244
  // Predicated region
  $region22: #{lstm_classifier_forward.1} parent=0 // pred_check
    _
  $region23: #{lstm_classifier_forward.1} parent=0 // pred_check_branch
    %3249 = sbr.rel (0) target = $region25
  $region24: #{lstm_classifier_forward.1} parent=0 // pred_region
    _
  $region25: #{lstm_classifier_forward.1} parent=0 // pred_fallthru
    _
  // Predicated region
  $region26: #{lstm_classifier_forward.1} parent=0 // pred_check
    _
  $region27: #{lstm_classifier_forward.1} parent=0 // pred_check_branch
    %3251 = sbr.rel (0) target = $region29
  $region28: #{lstm_classifier_forward.1} parent=0 // pred_region
    _
  $region29: #{lstm_classifier_forward.1} parent=0 // pred_fallthru
    _

</llo_original>
